<compile_context>
chip_gen: v7x
topology: tpu7x:2x2x1
jax: 0.10.0
libtpu: 0.0.40
codegen_flags: <defaults>
</compile_context>

<pallas_src>
import functools

import jax
import jax.numpy as jnp
from jax.experimental import pallas as pl
from jax.experimental.pallas import tpu as pltpu


# ---------------------------------------------------------------------------
# Fused kernel: (embedding + layer-0 input proj) + 2-layer LSTM + fc head
# ---------------------------------------------------------------------------
def _mnist_lstm_kernel(tok_ref, embw_ref, whh0_ref, w1_ref, b1_ref,
                       wfc1_ref, bfc1_ref, wfc2_ref, bfc2_ref,
                       out_ref,
                       gin_ref,
                       *, Bt, T, H):
    f32 = jnp.float32
    TB = T * Bt
    Vp = embw_ref.shape[0]          # one-hot width, padded to a multiple of 128

    def sigmoid(v):                  # EUP logistic, off the VPU critical path
        return jax.nn.sigmoid(v)

    def lstm_cell(gates, c):
        # PyTorch gate order: i, f, g, o
        i = sigmoid(gates[:, 0 * H:1 * H])
        f = sigmoid(gates[:, 1 * H:2 * H])
        g = jnp.tanh(gates[:, 2 * H:3 * H])
        o = sigmoid(gates[:, 3 * H:4 * H])
        c_new = f * c + i * g
        h_new = o * jnp.tanh(c_new)
        return h_new, c_new

    # ---- embedding + layer-0 input projection (bias pre-folded), all timesteps at once
    tok = tok_ref[...]                                                   # [T*Bt, 1] int32
    ids = jax.lax.broadcasted_iota(jnp.int32, (TB, Vp), 1)
    onehot = (ids == tok).astype(f32)                                    # [T*Bt, Vp]
    gin_ref[...] = jnp.dot(onehot, embw_ref[...],
                           preferred_element_type=f32)                   # [T*Bt, 4H]

    # ---- loop invariants hoisted out of the unrolled recurrence ----
    b1 = jnp.broadcast_to(b1_ref[...], (Bt, 4 * H))                      # [Bt, 4H]

    # ---- recurrence: h/c carried in vregs, weights streamed from VMEM ----
    zeros = jnp.zeros((Bt, H), f32)
    h1, c1, h2, c2 = zeros, zeros, zeros, zeros
    for t in range(T):  # T is small & static -> fully unrolled, no HBM traffic
        g1 = (gin_ref[t * Bt:(t + 1) * Bt, :]
              + jnp.dot(h1, whh0_ref[...], preferred_element_type=f32))
        h1, c1 = lstm_cell(g1, c1)
        # fused layer-1 input+recurrent projection: K = 2H = 256
        g2 = jnp.dot(jnp.concatenate([h1, h2], axis=-1), w1_ref[...],
                     preferred_element_type=f32) + b1
        h2, c2 = lstm_cell(g2, c2)

    # ---- fc head on the last step's top-layer hidden state (lane-dense, unmasked) ----
    y = jnp.maximum(jnp.dot(h2, wfc1_ref[...], preferred_element_type=f32)
                    + bfc1_ref[...], 0.0)                                # [Bt, 128]
    out_ref[...] = (jnp.dot(y, wfc2_ref[...], preferred_element_type=f32)
                    + bfc2_ref[...])                                     # [Bt, Cp]


# ---------------------------------------------------------------------------
# Wrapper (jitted: token layout prep + pallas_call compile to one executable)
# ---------------------------------------------------------------------------
@functools.partial(jax.jit, static_argnames=("codebook_size",))
def mnist_lstm_forward(tokens, kp, *, codebook_size):
    """tokens: int32 [B, T]; kp: kernel-layout params from pack_kernel_params."""
    B, T = tokens.shape
    H = kp["whh0"].shape[0]
    Cp = kp["wfc2"].shape[1]

    # Batch tile: sublane-aligned, capped at 256 rows per grid step (fills the MXU
    # on v6e/v7x for real batches); the grid axis shards tiles across TensorCores.
    Bt = min(256, ((B + 7) // 8) * 8)
    n_tiles = -(-B // Bt)
    Bpad = n_tiles * Bt

    # time-major, batch-padded token ids per tile: row = t * Bt + b
    tok = jnp.pad(tokens.astype(jnp.int32), ((0, Bpad - B), (0, 0)))     # [Bpad, T]
    tok = tok.reshape(n_tiles, Bt, T).transpose(0, 2, 1)                 # [n_tiles, T, Bt]
    tok = tok.reshape(n_tiles * T * Bt, 1)

    vmem_full = pl.BlockSpec(memory_space=pltpu.MemorySpace.VMEM)        # whole array, VMEM-resident
    kernel = functools.partial(_mnist_lstm_kernel, Bt=Bt, T=T, H=H)

    out = pl.pallas_call(
        kernel,
        out_shape=jax.ShapeDtypeStruct((n_tiles * Bt, Cp), jnp.float32),
        grid=(n_tiles,),
        in_specs=[pl.BlockSpec((T * Bt, 1), lambda i: (i, 0))] + [vmem_full] * 8,
        out_specs=pl.BlockSpec((Bt, Cp), lambda i: (i, 0)),
        scratch_shapes=[pltpu.VMEM((T * Bt, 4 * H), jnp.float32)],
        compiler_params=pltpu.CompilerParams(
            dimension_semantics=("parallel",)),
    )(tok, kp["embw"], kp["whh0"], kp["w1cat"], kp["b1"],
      kp["wfc1"], kp["bfc1"], kp["wfc2"], kp["bfc2"])

    return out[:B, :codebook_size]  # drop batch padding and lane padding


# ---------------------------------------------------------------------------
# Parameters (torch layouts) + one-time packing into kernel layout
# ---------------------------------------------------------------------------
def init_params(key, input_size, hidden_size, codebook_size):
    H = hidden_size
    V2 = codebook_size + 2
    ks = jax.random.split(key, 13)

    def nrm(k, shape, s=0.1):
        return (s * jax.random.normal(k, shape)).astype(jnp.float32)

    return dict(
        emb=nrm(ks[0], (V2, input_size)),
        # torch nn.LSTM weight layouts: weight_ih_l* [4H, in], weight_hh_l* [4H, H]
        w_ih0=nrm(ks[1], (4 * H, input_size)),
        w_hh0=nrm(ks[2], (4 * H, H)),
        b_ih0=nrm(ks[3], (4 * H,)),
        b_hh0=nrm(ks[4], (4 * H,)),
        w_ih1=nrm(ks[5], (4 * H, H)),
        w_hh1=nrm(ks[6], (4 * H, H)),
        b_ih1=nrm(ks[7], (4 * H,)),
        b_hh1=nrm(ks[8], (4 * H,)),
        # fc head: Linear(H, H//4) -> ReLU -> Linear(H//4, codebook_size)
        w_fc1=nrm(ks[9], (H // 4, H)),
        b_fc1=nrm(ks[10], (H // 4,)),
        w_fc2=nrm(ks[11], (codebook_size, H // 4)),
        b_fc2=nrm(ks[12], (codebook_size,)),
    )


def pack_kernel_params(p):
    """One-time host-side prep (x@W layouts, fold biases, precompute emb@Wih0, pad lanes)."""
    H = p["w_hh0"].shape[1]
    V2 = p["emb"].shape[0]
    Vp = ((V2 + 127) // 128) * 128                      # one-hot K dim padded to 128
    Hq = p["w_fc1"].shape[0]                            # H // 4
    Hqp = ((Hq + 127) // 128) * 128
    C = p["w_fc2"].shape[0]
    Cp = ((C + 127) // 128) * 128

    # embedding folded into layer-0 input projection; layer-0 LSTM bias folded in
    # (valid for in-range token ids: exactly one one-hot row is selected per position)
    embw = (jnp.dot(p["emb"], p["w_ih0"].T, precision=jax.lax.Precision.HIGHEST)
            + (p["b_ih0"] + p["b_hh0"])[None, :])       # [V2, 4H]
    embw = jnp.pad(embw, ((0, Vp - V2), (0, 0)))        # [Vp, 4H]

    # fused layer-1 weight: concat([h1, h2]) @ w1cat == h1 @ Wih1^T + h2 @ Whh1^T
    w1cat = jnp.concatenate([p["w_ih1"].T, p["w_hh1"].T], axis=0)        # [2H, 4H]

    # lane-dense fc head (pad to 128 lanes with zeros; padded lanes stay exactly zero)
    wfc1 = jnp.pad(p["w_fc1"].T, ((0, 0), (0, Hqp - Hq)))                # [H, Hqp]
    bfc1 = jnp.pad(p["b_fc1"], (0, Hqp - Hq)).reshape(1, Hqp)
    wfc2 = jnp.pad(p["w_fc2"].T, ((0, Hqp - Hq), (0, Cp - C)))           # [Hqp, Cp]
    bfc2 = jnp.pad(p["b_fc2"], (0, Cp - C)).reshape(1, Cp)

    return dict(
        embw=embw.astype(jnp.float32),
        whh0=p["w_hh0"].T,                                               # [H, 4H]
        w1cat=w1cat.astype(jnp.float32),                                 # [2H, 4H]
        b1=(p["b_ih1"] + p["b_hh1"]).reshape(1, 4 * H),
        wfc1=wfc1, bfc1=bfc1, wfc2=wfc2, bfc2=bfc2,
    )


# ---------------------------------------------------------------------------
# Pure-JAX reference (mirrors torch nn.LSTM math exactly) for self-check
# ---------------------------------------------------------------------------
def reference_forward(tokens, p):
    H = p["w_hh0"].shape[1]
    x = p["emb"][tokens]                                 # [B, T, E]
    B, T, _ = x.shape

    def sigmoid(v):
        return 1.0 / (1.0 + jnp.exp(-v))

    def cell(xt, h, c, w_ih, w_hh, b_ih, b_hh):
        g = xt @ w_ih.T + h @ w_hh.T + b_ih + b_hh
        i = sigmoid(g[:, 0 * H:1 * H])
        f = sigmoid(g[:, 1 * H:2 * H])
        gg = jnp.tanh(g[:, 2 * H:3 * H])
        o = sigmoid(g[:, 3 * H:4 * H])
        c = f * c + i * gg
        h = o * jnp.tanh(c)
        return h, c

    h1 = c1 = h2 = c2 = jnp.zeros((B, H), jnp.float32)
    for t in range(T):
        h1, c1 = cell(x[:, t, :], h1, c1, p["w_ih0"], p["w_hh0"], p["b_ih0"], p["b_hh0"])
        h2, c2 = cell(h1, h2, c2, p["w_ih1"], p["w_hh1"], p["b_ih1"], p["b_hh1"])
    y = jnp.maximum(h2 @ p["w_fc1"].T + p["b_fc1"], 0.0)
    return y @ p["w_fc2"].T + p["b_fc2"]


# ---------------------------------------------------------------------------
if __name__ == "__main__":
    # The module's nn.LSTM hardwires input_size=2, hidden_size=128; fc uses hidden_size.
    B, T = 2, 8
    INPUT_SIZE, HIDDEN, CODEBOOK = 2, 128, 16

    key = jax.random.PRNGKey(0)
    k_tok, k_p = jax.random.split(key)
    tokens = jax.random.randint(k_tok, (B, T), 0, CODEBOOK + 2, dtype=jnp.int32)
    params = init_params(k_p, INPUT_SIZE, HIDDEN, CODEBOOK)
    kparams = pack_kernel_params(params)

    out = jax.block_until_ready(
        mnist_lstm_forward(tokens, kparams, codebook_size=CODEBOOK))
    assert out.shape == (B, CODEBOOK), out.shape
    assert bool(jnp.all(jnp.isfinite(out)))

    ref = jax.block_until_ready(reference_forward(tokens, params))
    err = float(jnp.max(jnp.abs(out - ref)))
    assert err < 2e-3, f"mismatch vs reference: {err}"

    print("KERNEL_OK")
</pallas_src>

<mosaic_0001>
module attributes {stable_mosaic.version = 11 : i64} {
  func.func @_mnist_lstm_kernel(%arg0: i32, %arg1: memref<64x1xi32, #tpu.memory_space<vmem>>, %arg2: memref<128x512xf32, #tpu.memory_space<vmem>>, %arg3: memref<128x512xf32, #tpu.memory_space<vmem>>, %arg4: memref<256x512xf32, #tpu.memory_space<vmem>>, %arg5: memref<1x512xf32, #tpu.memory_space<vmem>>, %arg6: memref<128x128xf32, #tpu.memory_space<vmem>>, %arg7: memref<1x128xf32, #tpu.memory_space<vmem>>, %arg8: memref<128x128xf32, #tpu.memory_space<vmem>>, %arg9: memref<1x128xf32, #tpu.memory_space<vmem>>, %arg10: memref<8x128xf32, #tpu.memory_space<vmem>>, %arg11: memref<64x512xf32, #tpu.memory_space<vmem>>) attributes {dimension_semantics = [#tpu.dimension_semantics<parallel>], iteration_bounds = array<i64: 1>, scalar_prefetch = 0 : i64, scratch_operands = 1 : i64, tpu.core_type = #tpu.core_type<tc>, window_params = [{transform_indices = @transform_0, window_bounds = array<i64: 64, 1>}, {pipeline_mode = #tpu.pipeline_mode<synchronous>, transform_indices = @transform_1, window_bounds = array<i64: 128, 512>}, {pipeline_mode = #tpu.pipeline_mode<synchronous>, transform_indices = @transform_2, window_bounds = array<i64: 128, 512>}, {pipeline_mode = #tpu.pipeline_mode<synchronous>, transform_indices = @transform_3, window_bounds = array<i64: 256, 512>}, {pipeline_mode = #tpu.pipeline_mode<synchronous>, transform_indices = @transform_4, window_bounds = array<i64: 1, 512>}, {pipeline_mode = #tpu.pipeline_mode<synchronous>, transform_indices = @transform_5, window_bounds = array<i64: 128, 128>}, {pipeline_mode = #tpu.pipeline_mode<synchronous>, transform_indices = @transform_6, window_bounds = array<i64: 1, 128>}, {pipeline_mode = #tpu.pipeline_mode<synchronous>, transform_indices = @transform_7, window_bounds = array<i64: 128, 128>}, {pipeline_mode = #tpu.pipeline_mode<synchronous>, transform_indices = @transform_8, window_bounds = array<i64: 1, 128>}, {transform_indices = @transform_9, window_bounds = array<i64: 8, 128>}]} {
    %c0 = arith.constant 0 : index
    %c0_0 = arith.constant 0 : index
    %0 = vector.load %arg1[%c0, %c0_0] : memref<64x1xi32, #tpu.memory_space<vmem>>, vector<64x1xi32>
    %1 = tpu.iota {dimensions = array<i32: 1>} : vector<64x128xi32>
    %2 = vector.broadcast %0 : vector<64x1xi32> to vector<64x128xi32>
    %3 = arith.cmpi eq, %1, %2 : vector<64x128xi32>
    %4 = arith.extui %3 : vector<64x128xi1> to vector<64x128xi32>
    %5 = arith.sitofp %4 : vector<64x128xi32> to vector<64x128xf32>
    %c0_1 = arith.constant 0 : index
    %c0_2 = arith.constant 0 : index
    %6 = vector.load %arg2[%c0_1, %c0_2] : memref<128x512xf32, #tpu.memory_space<vmem>>, vector<128x512xf32>
    %cst = arith.constant dense<0.000000e+00> : vector<64x512xf32>
    %7 = tpu.matmul %5, %6, %cst {dimension_numbers = #tpu.dot_dimension_numbers<[1], [0], [0], [1], [0, 0, 1, 1], [], []>} : vector<64x128xf32>, vector<128x512xf32>, vector<64x512xf32> -> vector<64x512xf32>
    %c0_3 = arith.constant 0 : index
    %c0_4 = arith.constant 0 : index
    %8 = vector.load %arg11[%c0_3, %c0_4] : memref<64x512xf32, #tpu.memory_space<vmem>>, vector<64x512xf32>
    tpu.vector_store %arg11[%c0_3, %c0_4], %7 {strides = array<i32>} : memref<64x512xf32, #tpu.memory_space<vmem>>, vector<64x512xf32>,
    %c0_5 = arith.constant 0 : index
    %c0_6 = arith.constant 0 : index
    %9 = vector.load %arg5[%c0_5, %c0_6] : memref<1x512xf32, #tpu.memory_space<vmem>>, vector<1x512xf32>
    %10 = vector.shape_cast %9 : vector<1x512xf32> to vector<1x512xf32>
    %11 = vector.broadcast %10 : vector<1x512xf32> to vector<8x512xf32>
    %cst_7 = arith.constant 0.000000e+00 : f32
    %12 = vector.broadcast %cst_7 : f32 to vector<8x128xf32>
    %c0_8 = arith.constant 0 : index
    %c0_9 = arith.constant 0 : index
    %13 = vector.load %arg11[%c0_8, %c0_9] : memref<64x512xf32, #tpu.memory_space<vmem>>, vector<8x512xf32>
    %c0_10 = arith.constant 0 : index
    %c0_11 = arith.constant 0 : index
    %14 = vector.load %arg3[%c0_10, %c0_11] : memref<128x512xf32, #tpu.memory_space<vmem>>, vector<128x512xf32>
    %cst_12 = arith.constant dense<0.000000e+00> : vector<8x512xf32>
    %15 = tpu.matmul %12, %14, %cst_12 {dimension_numbers = #tpu.dot_dimension_numbers<[1], [0], [0], [1], [0, 0, 1, 1], [], []>} : vector<8x128xf32>, vector<128x512xf32>, vector<8x512xf32> -> vector<8x512xf32>
    %16 = arith.addf %13, %15 : vector<8x512xf32>
    %17 = vector.extract_strided_slice %16 {offsets = [0, 0], sizes = [8, 128], strides = [1, 1]} : vector<8x512xf32> to vector<8x128xf32>
    %18 = arith.negf %17 : vector<8x128xf32>
    %19 = math.exp %18 : vector<8x128xf32>
    %cst_13 = arith.constant 1.000000e+00 : f32
    %20 = vector.broadcast %cst_13 : f32 to vector<8x128xf32>
    %21 = arith.addf %20, %19 : vector<8x128xf32>
    %22 = arith.divf %20, %21 : vector<8x128xf32>
    %23 = vector.extract_strided_slice %16 {offsets = [0, 128], sizes = [8, 128], strides = [1, 1]} : vector<8x512xf32> to vector<8x128xf32>
    %24 = arith.negf %23 : vector<8x128xf32>
    %25 = math.exp %24 : vector<8x128xf32>
    %cst_14 = arith.constant 1.000000e+00 : f32
    %26 = vector.broadcast %cst_14 : f32 to vector<8x128xf32>
    %27 = arith.addf %26, %25 : vector<8x128xf32>
    %28 = arith.divf %26, %27 : vector<8x128xf32>
    %29 = vector.extract_strided_slice %16 {offsets = [0, 256], sizes = [8, 128], strides = [1, 1]} : vector<8x512xf32> to vector<8x128xf32>
    %30 = math.tanh %29 : vector<8x128xf32>
    %31 = vector.extract_strided_slice %16 {offsets = [0, 384], sizes = [8, 128], strides = [1, 1]} : vector<8x512xf32> to vector<8x128xf32>
    %32 = arith.negf %31 : vector<8x128xf32>
    %33 = math.exp %32 : vector<8x128xf32>
    %cst_15 = arith.constant 1.000000e+00 : f32
    %34 = vector.broadcast %cst_15 : f32 to vector<8x128xf32>
    %35 = arith.addf %34, %33 : vector<8x128xf32>
    %36 = arith.divf %34, %35 : vector<8x128xf32>
    %37 = arith.mulf %28, %12 : vector<8x128xf32>
    %38 = arith.mulf %22, %30 : vector<8x128xf32>
    %39 = arith.addf %37, %38 : vector<8x128xf32>
    %40 = math.tanh %39 : vector<8x128xf32>
    %41 = arith.mulf %36, %40 : vector<8x128xf32>
    %42 = tpu.concatenate %41, %12 in 1 : vector<8x128xf32>, vector<8x128xf32> -> vector<8x256xf32>
    %c0_16 = arith.constant 0 : index
    %c0_17 = arith.constant 0 : index
    %43 = vector.load %arg4[%c0_16, %c0_17] : memref<256x512xf32, #tpu.memory_space<vmem>>, vector<256x512xf32>
    %cst_18 = arith.constant dense<0.000000e+00> : vector<8x512xf32>
    %44 = tpu.matmul %42, %43, %cst_18 {dimension_numbers = #tpu.dot_dimension_numbers<[1], [0], [0], [1], [0, 0, 1, 1], [], []>} : vector<8x256xf32>, vector<256x512xf32>, vector<8x512xf32> -> vector<8x512xf32>
    %45 = arith.addf %44, %11 : vector<8x512xf32>
    %46 = vector.extract_strided_slice %45 {offsets = [0, 0], sizes = [8, 128], strides = [1, 1]} : vector<8x512xf32> to vector<8x128xf32>
    %47 = arith.negf %46 : vector<8x128xf32>
    %48 = math.exp %47 : vector<8x128xf32>
    %cst_19 = arith.constant 1.000000e+00 : f32
    %49 = vector.broadcast %cst_19 : f32 to vector<8x128xf32>
    %50 = arith.addf %49, %48 : vector<8x128xf32>
    %51 = arith.divf %49, %50 : vector<8x128xf32>
    %52 = vector.extract_strided_slice %45 {offsets = [0, 128], sizes = [8, 128], strides = [1, 1]} : vector<8x512xf32> to vector<8x128xf32>
    %53 = arith.negf %52 : vector<8x128xf32>
    %54 = math.exp %53 : vector<8x128xf32>
    %cst_20 = arith.constant 1.000000e+00 : f32
    %55 = vector.broadcast %cst_20 : f32 to vector<8x128xf32>
    %56 = arith.addf %55, %54 : vector<8x128xf32>
    %57 = arith.divf %55, %56 : vector<8x128xf32>
    %58 = vector.extract_strided_slice %45 {offsets = [0, 256], sizes = [8, 128], strides = [1, 1]} : vector<8x512xf32> to vector<8x128xf32>
    %59 = math.tanh %58 : vector<8x128xf32>
    %60 = vector.extract_strided_slice %45 {offsets = [0, 384], sizes = [8, 128], strides = [1, 1]} : vector<8x512xf32> to vector<8x128xf32>
    %61 = arith.negf %60 : vector<8x128xf32>
    %62 = math.exp %61 : vector<8x128xf32>
    %cst_21 = arith.constant 1.000000e+00 : f32
    %63 = vector.broadcast %cst_21 : f32 to vector<8x128xf32>
    %64 = arith.addf %63, %62 : vector<8x128xf32>
    %65 = arith.divf %63, %64 : vector<8x128xf32>
    %66 = arith.mulf %57, %12 : vector<8x128xf32>
    %67 = arith.mulf %51, %59 : vector<8x128xf32>
    %68 = arith.addf %66, %67 : vector<8x128xf32>
    %69 = math.tanh %68 : vector<8x128xf32>
    %70 = arith.mulf %65, %69 : vector<8x128xf32>
    %c8 = arith.constant 8 : index
    %c0_22 = arith.constant 0 : index
    %71 = vector.load %arg11[%c8, %c0_22] : memref<64x512xf32, #tpu.memory_space<vmem>>, vector<8x512xf32>
    %c0_23 = arith.constant 0 : index
    %c0_24 = arith.constant 0 : index
    %72 = vector.load %arg3[%c0_23, %c0_24] : memref<128x512xf32, #tpu.memory_space<vmem>>, vector<128x512xf32>
    %cst_25 = arith.constant dense<0.000000e+00> : vector<8x512xf32>
    %73 = tpu.matmul %41, %72, %cst_25 {dimension_numbers = #tpu.dot_dimension_numbers<[1], [0], [0], [1], [0, 0, 1, 1], [], []>} : vector<8x128xf32>, vector<128x512xf32>, vector<8x512xf32> -> vector<8x512xf32>
    %74 = arith.addf %71, %73 : vector<8x512xf32>
    %75 = vector.extract_strided_slice %74 {offsets = [0, 0], sizes = [8, 128], strides = [1, 1]} : vector<8x512xf32> to vector<8x128xf32>
    %76 = arith.negf %75 : vector<8x128xf32>
    %77 = math.exp %76 : vector<8x128xf32>
    %cst_26 = arith.constant 1.000000e+00 : f32
    %78 = vector.broadcast %cst_26 : f32 to vector<8x128xf32>
    %79 = arith.addf %78, %77 : vector<8x128xf32>
    %80 = arith.divf %78, %79 : vector<8x128xf32>
    %81 = vector.extract_strided_slice %74 {offsets = [0, 128], sizes = [8, 128], strides = [1, 1]} : vector<8x512xf32> to vector<8x128xf32>
    %82 = arith.negf %81 : vector<8x128xf32>
    %83 = math.exp %82 : vector<8x128xf32>
    %cst_27 = arith.constant 1.000000e+00 : f32
    %84 = vector.broadcast %cst_27 : f32 to vector<8x128xf32>
    %85 = arith.addf %84, %83 : vector<8x128xf32>
    %86 = arith.divf %84, %85 : vector<8x128xf32>
    %87 = vector.extract_strided_slice %74 {offsets = [0, 256], sizes = [8, 128], strides = [1, 1]} : vector<8x512xf32> to vector<8x128xf32>
    %88 = math.tanh %87 : vector<8x128xf32>
    %89 = vector.extract_strided_slice %74 {offsets = [0, 384], sizes = [8, 128], strides = [1, 1]} : vector<8x512xf32> to vector<8x128xf32>
    %90 = arith.negf %89 : vector<8x128xf32>
    %91 = math.exp %90 : vector<8x128xf32>
    %cst_28 = arith.constant 1.000000e+00 : f32
    %92 = vector.broadcast %cst_28 : f32 to vector<8x128xf32>
    %93 = arith.addf %92, %91 : vector<8x128xf32>
    %94 = arith.divf %92, %93 : vector<8x128xf32>
    %95 = arith.mulf %86, %39 : vector<8x128xf32>
    %96 = arith.mulf %80, %88 : vector<8x128xf32>
    %97 = arith.addf %95, %96 : vector<8x128xf32>
    %98 = math.tanh %97 : vector<8x128xf32>
    %99 = arith.mulf %94, %98 : vector<8x128xf32>
    %100 = tpu.concatenate %99, %70 in 1 : vector<8x128xf32>, vector<8x128xf32> -> vector<8x256xf32>
    %c0_29 = arith.constant 0 : index
    %c0_30 = arith.constant 0 : index
    %101 = vector.load %arg4[%c0_29, %c0_30] : memref<256x512xf32, #tpu.memory_space<vmem>>, vector<256x512xf32>
    %cst_31 = arith.constant dense<0.000000e+00> : vector<8x512xf32>
    %102 = tpu.matmul %100, %101, %cst_31 {dimension_numbers = #tpu.dot_dimension_numbers<[1], [0], [0], [1], [0, 0, 1, 1], [], []>} : vector<8x256xf32>, vector<256x512xf32>, vector<8x512xf32> -> vector<8x512xf32>
    %103 = arith.addf %102, %11 : vector<8x512xf32>
    %104 = vector.extract_strided_slice %103 {offsets = [0, 0], sizes = [8, 128], strides = [1, 1]} : vector<8x512xf32> to vector<8x128xf32>
    %105 = arith.negf %104 : vector<8x128xf32>
    %106 = math.exp %105 : vector<8x128xf32>
    %cst_32 = arith.constant 1.000000e+00 : f32
    %107 = vector.broadcast %cst_32 : f32 to vector<8x128xf32>
    %108 = arith.addf %107, %106 : vector<8x128xf32>
    %109 = arith.divf %107, %108 : vector<8x128xf32>
    %110 = vector.extract_strided_slice %103 {offsets = [0, 128], sizes = [8, 128], strides = [1, 1]} : vector<8x512xf32> to vector<8x128xf32>
    %111 = arith.negf %110 : vector<8x128xf32>
    %112 = math.exp %111 : vector<8x128xf32>
    %cst_33 = arith.constant 1.000000e+00 : f32
    %113 = vector.broadcast %cst_33 : f32 to vector<8x128xf32>
    %114 = arith.addf %113, %112 : vector<8x128xf32>
    %115 = arith.divf %113, %114 : vector<8x128xf32>
    %116 = vector.extract_strided_slice %103 {offsets = [0, 256], sizes = [8, 128], strides = [1, 1]} : vector<8x512xf32> to vector<8x128xf32>
    %117 = math.tanh %116 : vector<8x128xf32>
    %118 = vector.extract_strided_slice %103 {offsets = [0, 384], sizes = [8, 128], strides = [1, 1]} : vector<8x512xf32> to vector<8x128xf32>
    %119 = arith.negf %118 : vector<8x128xf32>
    %120 = math.exp %119 : vector<8x128xf32>
    %cst_34 = arith.constant 1.000000e+00 : f32
    %121 = vector.broadcast %cst_34 : f32 to vector<8x128xf32>
    %122 = arith.addf %121, %120 : vector<8x128xf32>
    %123 = arith.divf %121, %122 : vector<8x128xf32>
    %124 = arith.mulf %115, %68 : vector<8x128xf32>
    %125 = arith.mulf %109, %117 : vector<8x128xf32>
    %126 = arith.addf %124, %125 : vector<8x128xf32>
    %127 = math.tanh %126 : vector<8x128xf32>
    %128 = arith.mulf %123, %127 : vector<8x128xf32>
    %c16 = arith.constant 16 : index
    %c0_35 = arith.constant 0 : index
    %129 = vector.load %arg11[%c16, %c0_35] : memref<64x512xf32, #tpu.memory_space<vmem>>, vector<8x512xf32>
    %c0_36 = arith.constant 0 : index
    %c0_37 = arith.constant 0 : index
    %130 = vector.load %arg3[%c0_36, %c0_37] : memref<128x512xf32, #tpu.memory_space<vmem>>, vector<128x512xf32>
    %cst_38 = arith.constant dense<0.000000e+00> : vector<8x512xf32>
    %131 = tpu.matmul %99, %130, %cst_38 {dimension_numbers = #tpu.dot_dimension_numbers<[1], [0], [0], [1], [0, 0, 1, 1], [], []>} : vector<8x128xf32>, vector<128x512xf32>, vector<8x512xf32> -> vector<8x512xf32>
    %132 = arith.addf %129, %131 : vector<8x512xf32>
    %133 = vector.extract_strided_slice %132 {offsets = [0, 0], sizes = [8, 128], strides = [1, 1]} : vector<8x512xf32> to vector<8x128xf32>
    %134 = arith.negf %133 : vector<8x128xf32>
    %135 = math.exp %134 : vector<8x128xf32>
    %cst_39 = arith.constant 1.000000e+00 : f32
    %136 = vector.broadcast %cst_39 : f32 to vector<8x128xf32>
    %137 = arith.addf %136, %135 : vector<8x128xf32>
    %138 = arith.divf %136, %137 : vector<8x128xf32>
    %139 = vector.extract_strided_slice %132 {offsets = [0, 128], sizes = [8, 128], strides = [1, 1]} : vector<8x512xf32> to vector<8x128xf32>
    %140 = arith.negf %139 : vector<8x128xf32>
    %141 = math.exp %140 : vector<8x128xf32>
    %cst_40 = arith.constant 1.000000e+00 : f32
    %142 = vector.broadcast %cst_40 : f32 to vector<8x128xf32>
    %143 = arith.addf %142, %141 : vector<8x128xf32>
    %144 = arith.divf %142, %143 : vector<8x128xf32>
    %145 = vector.extract_strided_slice %132 {offsets = [0, 256], sizes = [8, 128], strides = [1, 1]} : vector<8x512xf32> to vector<8x128xf32>
    %146 = math.tanh %145 : vector<8x128xf32>
    %147 = vector.extract_strided_slice %132 {offsets = [0, 384], sizes = [8, 128], strides = [1, 1]} : vector<8x512xf32> to vector<8x128xf32>
    %148 = arith.negf %147 : vector<8x128xf32>
    %149 = math.exp %148 : vector<8x128xf32>
    %cst_41 = arith.constant 1.000000e+00 : f32
    %150 = vector.broadcast %cst_41 : f32 to vector<8x128xf32>
    %151 = arith.addf %150, %149 : vector<8x128xf32>
    %152 = arith.divf %150, %151 : vector<8x128xf32>
    %153 = arith.mulf %144, %97 : vector<8x128xf32>
    %154 = arith.mulf %138, %146 : vector<8x128xf32>
    %155 = arith.addf %153, %154 : vector<8x128xf32>
    %156 = math.tanh %155 : vector<8x128xf32>
    %157 = arith.mulf %152, %156 : vector<8x128xf32>
    %158 = tpu.concatenate %157, %128 in 1 : vector<8x128xf32>, vector<8x128xf32> -> vector<8x256xf32>
    %c0_42 = arith.constant 0 : index
    %c0_43 = arith.constant 0 : index
    %159 = vector.load %arg4[%c0_42, %c0_43] : memref<256x512xf32, #tpu.memory_space<vmem>>, vector<256x512xf32>
    %cst_44 = arith.constant dense<0.000000e+00> : vector<8x512xf32>
    %160 = tpu.matmul %158, %159, %cst_44 {dimension_numbers = #tpu.dot_dimension_numbers<[1], [0], [0], [1], [0, 0, 1, 1], [], []>} : vector<8x256xf32>, vector<256x512xf32>, vector<8x512xf32> -> vector<8x512xf32>
    %161 = arith.addf %160, %11 : vector<8x512xf32>
    %162 = vector.extract_strided_slice %161 {offsets = [0, 0], sizes = [8, 128], strides = [1, 1]} : vector<8x512xf32> to vector<8x128xf32>
    %163 = arith.negf %162 : vector<8x128xf32>
    %164 = math.exp %163 : vector<8x128xf32>
    %cst_45 = arith.constant 1.000000e+00 : f32
    %165 = vector.broadcast %cst_45 : f32 to vector<8x128xf32>
    %166 = arith.addf %165, %164 : vector<8x128xf32>
    %167 = arith.divf %165, %166 : vector<8x128xf32>
    %168 = vector.extract_strided_slice %161 {offsets = [0, 128], sizes = [8, 128], strides = [1, 1]} : vector<8x512xf32> to vector<8x128xf32>
    %169 = arith.negf %168 : vector<8x128xf32>
    %170 = math.exp %169 : vector<8x128xf32>
    %cst_46 = arith.constant 1.000000e+00 : f32
    %171 = vector.broadcast %cst_46 : f32 to vector<8x128xf32>
    %172 = arith.addf %171, %170 : vector<8x128xf32>
    %173 = arith.divf %171, %172 : vector<8x128xf32>
    %174 = vector.extract_strided_slice %161 {offsets = [0, 256], sizes = [8, 128], strides = [1, 1]} : vector<8x512xf32> to vector<8x128xf32>
    %175 = math.tanh %174 : vector<8x128xf32>
    %176 = vector.extract_strided_slice %161 {offsets = [0, 384], sizes = [8, 128], strides = [1, 1]} : vector<8x512xf32> to vector<8x128xf32>
    %177 = arith.negf %176 : vector<8x128xf32>
    %178 = math.exp %177 : vector<8x128xf32>
    %cst_47 = arith.constant 1.000000e+00 : f32
    %179 = vector.broadcast %cst_47 : f32 to vector<8x128xf32>
    %180 = arith.addf %179, %178 : vector<8x128xf32>
    %181 = arith.divf %179, %180 : vector<8x128xf32>
    %182 = arith.mulf %173, %126 : vector<8x128xf32>
    %183 = arith.mulf %167, %175 : vector<8x128xf32>
    %184 = arith.addf %182, %183 : vector<8x128xf32>
    %185 = math.tanh %184 : vector<8x128xf32>
    %186 = arith.mulf %181, %185 : vector<8x128xf32>
    %c24 = arith.constant 24 : index
    %c0_48 = arith.constant 0 : index
    %187 = vector.load %arg11[%c24, %c0_48] : memref<64x512xf32, #tpu.memory_space<vmem>>, vector<8x512xf32>
    %c0_49 = arith.constant 0 : index
    %c0_50 = arith.constant 0 : index
    %188 = vector.load %arg3[%c0_49, %c0_50] : memref<128x512xf32, #tpu.memory_space<vmem>>, vector<128x512xf32>
    %cst_51 = arith.constant dense<0.000000e+00> : vector<8x512xf32>
    %189 = tpu.matmul %157, %188, %cst_51 {dimension_numbers = #tpu.dot_dimension_numbers<[1], [0], [0], [1], [0, 0, 1, 1], [], []>} : vector<8x128xf32>, vector<128x512xf32>, vector<8x512xf32> -> vector<8x512xf32>
    %190 = arith.addf %187, %189 : vector<8x512xf32>
    %191 = vector.extract_strided_slice %190 {offsets = [0, 0], sizes = [8, 128], strides = [1, 1]} : vector<8x512xf32> to vector<8x128xf32>
    %192 = arith.negf %191 : vector<8x128xf32>
    %193 = math.exp %192 : vector<8x128xf32>
    %cst_52 = arith.constant 1.000000e+00 : f32
    %194 = vector.broadcast %cst_52 : f32 to vector<8x128xf32>
    %195 = arith.addf %194, %193 : vector<8x128xf32>
    %196 = arith.divf %194, %195 : vector<8x128xf32>
    %197 = vector.extract_strided_slice %190 {offsets = [0, 128], sizes = [8, 128], strides = [1, 1]} : vector<8x512xf32> to vector<8x128xf32>
    %198 = arith.negf %197 : vector<8x128xf32>
    %199 = math.exp %198 : vector<8x128xf32>
    %cst_53 = arith.constant 1.000000e+00 : f32
    %200 = vector.broadcast %cst_53 : f32 to vector<8x128xf32>
    %201 = arith.addf %200, %199 : vector<8x128xf32>
    %202 = arith.divf %200, %201 : vector<8x128xf32>
    %203 = vector.extract_strided_slice %190 {offsets = [0, 256], sizes = [8, 128], strides = [1, 1]} : vector<8x512xf32> to vector<8x128xf32>
    %204 = math.tanh %203 : vector<8x128xf32>
    %205 = vector.extract_strided_slice %190 {offsets = [0, 384], sizes = [8, 128], strides = [1, 1]} : vector<8x512xf32> to vector<8x128xf32>
    %206 = arith.negf %205 : vector<8x128xf32>
    %207 = math.exp %206 : vector<8x128xf32>
    %cst_54 = arith.constant 1.000000e+00 : f32
    %208 = vector.broadcast %cst_54 : f32 to vector<8x128xf32>
    %209 = arith.addf %208, %207 : vector<8x128xf32>
    %210 = arith.divf %208, %209 : vector<8x128xf32>
    %211 = arith.mulf %202, %155 : vector<8x128xf32>
    %212 = arith.mulf %196, %204 : vector<8x128xf32>
    %213 = arith.addf %211, %212 : vector<8x128xf32>
    %214 = math.tanh %213 : vector<8x128xf32>
    %215 = arith.mulf %210, %214 : vector<8x128xf32>
    %216 = tpu.concatenate %215, %186 in 1 : vector<8x128xf32>, vector<8x128xf32> -> vector<8x256xf32>
    %c0_55 = arith.constant 0 : index
    %c0_56 = arith.constant 0 : index
    %217 = vector.load %arg4[%c0_55, %c0_56] : memref<256x512xf32, #tpu.memory_space<vmem>>, vector<256x512xf32>
    %cst_57 = arith.constant dense<0.000000e+00> : vector<8x512xf32>
    %218 = tpu.matmul %216, %217, %cst_57 {dimension_numbers = #tpu.dot_dimension_numbers<[1], [0], [0], [1], [0, 0, 1, 1], [], []>} : vector<8x256xf32>, vector<256x512xf32>, vector<8x512xf32> -> vector<8x512xf32>
    %219 = arith.addf %218, %11 : vector<8x512xf32>
    %220 = vector.extract_strided_slice %219 {offsets = [0, 0], sizes = [8, 128], strides = [1, 1]} : vector<8x512xf32> to vector<8x128xf32>
    %221 = arith.negf %220 : vector<8x128xf32>
    %222 = math.exp %221 : vector<8x128xf32>
    %cst_58 = arith.constant 1.000000e+00 : f32
    %223 = vector.broadcast %cst_58 : f32 to vector<8x128xf32>
    %224 = arith.addf %223, %222 : vector<8x128xf32>
    %225 = arith.divf %223, %224 : vector<8x128xf32>
    %226 = vector.extract_strided_slice %219 {offsets = [0, 128], sizes = [8, 128], strides = [1, 1]} : vector<8x512xf32> to vector<8x128xf32>
    %227 = arith.negf %226 : vector<8x128xf32>
    %228 = math.exp %227 : vector<8x128xf32>
    %cst_59 = arith.constant 1.000000e+00 : f32
    %229 = vector.broadcast %cst_59 : f32 to vector<8x128xf32>
    %230 = arith.addf %229, %228 : vector<8x128xf32>
    %231 = arith.divf %229, %230 : vector<8x128xf32>
    %232 = vector.extract_strided_slice %219 {offsets = [0, 256], sizes = [8, 128], strides = [1, 1]} : vector<8x512xf32> to vector<8x128xf32>
    %233 = math.tanh %232 : vector<8x128xf32>
    %234 = vector.extract_strided_slice %219 {offsets = [0, 384], sizes = [8, 128], strides = [1, 1]} : vector<8x512xf32> to vector<8x128xf32>
    %235 = arith.negf %234 : vector<8x128xf32>
    %236 = math.exp %235 : vector<8x128xf32>
    %cst_60 = arith.constant 1.000000e+00 : f32
    %237 = vector.broadcast %cst_60 : f32 to vector<8x128xf32>
    %238 = arith.addf %237, %236 : vector<8x128xf32>
    %239 = arith.divf %237, %238 : vector<8x128xf32>
    %240 = arith.mulf %231, %184 : vector<8x128xf32>
    %241 = arith.mulf %225, %233 : vector<8x128xf32>
    %242 = arith.addf %240, %241 : vector<8x128xf32>
    %243 = math.tanh %242 : vector<8x128xf32>
    %244 = arith.mulf %239, %243 : vector<8x128xf32>
    %c32 = arith.constant 32 : index
    %c0_61 = arith.constant 0 : index
    %245 = vector.load %arg11[%c32, %c0_61] : memref<64x512xf32, #tpu.memory_space<vmem>>, vector<8x512xf32>
    %c0_62 = arith.constant 0 : index
    %c0_63 = arith.constant 0 : index
    %246 = vector.load %arg3[%c0_62, %c0_63] : memref<128x512xf32, #tpu.memory_space<vmem>>, vector<128x512xf32>
    %cst_64 = arith.constant dense<0.000000e+00> : vector<8x512xf32>
    %247 = tpu.matmul %215, %246, %cst_64 {dimension_numbers = #tpu.dot_dimension_numbers<[1], [0], [0], [1], [0, 0, 1, 1], [], []>} : vector<8x128xf32>, vector<128x512xf32>, vector<8x512xf32> -> vector<8x512xf32>
    %248 = arith.addf %245, %247 : vector<8x512xf32>
    %249 = vector.extract_strided_slice %248 {offsets = [0, 0], sizes = [8, 128], strides = [1, 1]} : vector<8x512xf32> to vector<8x128xf32>
    %250 = arith.negf %249 : vector<8x128xf32>
    %251 = math.exp %250 : vector<8x128xf32>
    %cst_65 = arith.constant 1.000000e+00 : f32
    %252 = vector.broadcast %cst_65 : f32 to vector<8x128xf32>
    %253 = arith.addf %252, %251 : vector<8x128xf32>
    %254 = arith.divf %252, %253 : vector<8x128xf32>
    %255 = vector.extract_strided_slice %248 {offsets = [0, 128], sizes = [8, 128], strides = [1, 1]} : vector<8x512xf32> to vector<8x128xf32>
    %256 = arith.negf %255 : vector<8x128xf32>
    %257 = math.exp %256 : vector<8x128xf32>
    %cst_66 = arith.constant 1.000000e+00 : f32
    %258 = vector.broadcast %cst_66 : f32 to vector<8x128xf32>
    %259 = arith.addf %258, %257 : vector<8x128xf32>
    %260 = arith.divf %258, %259 : vector<8x128xf32>
    %261 = vector.extract_strided_slice %248 {offsets = [0, 256], sizes = [8, 128], strides = [1, 1]} : vector<8x512xf32> to vector<8x128xf32>
    %262 = math.tanh %261 : vector<8x128xf32>
    %263 = vector.extract_strided_slice %248 {offsets = [0, 384], sizes = [8, 128], strides = [1, 1]} : vector<8x512xf32> to vector<8x128xf32>
    %264 = arith.negf %263 : vector<8x128xf32>
    %265 = math.exp %264 : vector<8x128xf32>
    %cst_67 = arith.constant 1.000000e+00 : f32
    %266 = vector.broadcast %cst_67 : f32 to vector<8x128xf32>
    %267 = arith.addf %266, %265 : vector<8x128xf32>
    %268 = arith.divf %266, %267 : vector<8x128xf32>
    %269 = arith.mulf %260, %213 : vector<8x128xf32>
    %270 = arith.mulf %254, %262 : vector<8x128xf32>
    %271 = arith.addf %269, %270 : vector<8x128xf32>
    %272 = math.tanh %271 : vector<8x128xf32>
    %273 = arith.mulf %268, %272 : vector<8x128xf32>
    %274 = tpu.concatenate %273, %244 in 1 : vector<8x128xf32>, vector<8x128xf32> -> vector<8x256xf32>
    %c0_68 = arith.constant 0 : index
    %c0_69 = arith.constant 0 : index
    %275 = vector.load %arg4[%c0_68, %c0_69] : memref<256x512xf32, #tpu.memory_space<vmem>>, vector<256x512xf32>
    %cst_70 = arith.constant dense<0.000000e+00> : vector<8x512xf32>
    %276 = tpu.matmul %274, %275, %cst_70 {dimension_numbers = #tpu.dot_dimension_numbers<[1], [0], [0], [1], [0, 0, 1, 1], [], []>} : vector<8x256xf32>, vector<256x512xf32>, vector<8x512xf32> -> vector<8x512xf32>
    %277 = arith.addf %276, %11 : vector<8x512xf32>
    %278 = vector.extract_strided_slice %277 {offsets = [0, 0], sizes = [8, 128], strides = [1, 1]} : vector<8x512xf32> to vector<8x128xf32>
    %279 = arith.negf %278 : vector<8x128xf32>
    %280 = math.exp %279 : vector<8x128xf32>
    %cst_71 = arith.constant 1.000000e+00 : f32
    %281 = vector.broadcast %cst_71 : f32 to vector<8x128xf32>
    %282 = arith.addf %281, %280 : vector<8x128xf32>
    %283 = arith.divf %281, %282 : vector<8x128xf32>
    %284 = vector.extract_strided_slice %277 {offsets = [0, 128], sizes = [8, 128], strides = [1, 1]} : vector<8x512xf32> to vector<8x128xf32>
    %285 = arith.negf %284 : vector<8x128xf32>
    %286 = math.exp %285 : vector<8x128xf32>
    %cst_72 = arith.constant 1.000000e+00 : f32
    %287 = vector.broadcast %cst_72 : f32 to vector<8x128xf32>
    %288 = arith.addf %287, %286 : vector<8x128xf32>
    %289 = arith.divf %287, %288 : vector<8x128xf32>
    %290 = vector.extract_strided_slice %277 {offsets = [0, 256], sizes = [8, 128], strides = [1, 1]} : vector<8x512xf32> to vector<8x128xf32>
    %291 = math.tanh %290 : vector<8x128xf32>
    %292 = vector.extract_strided_slice %277 {offsets = [0, 384], sizes = [8, 128], strides = [1, 1]} : vector<8x512xf32> to vector<8x128xf32>
    %293 = arith.negf %292 : vector<8x128xf32>
    %294 = math.exp %293 : vector<8x128xf32>
    %cst_73 = arith.constant 1.000000e+00 : f32
    %295 = vector.broadcast %cst_73 : f32 to vector<8x128xf32>
    %296 = arith.addf %295, %294 : vector<8x128xf32>
    %297 = arith.divf %295, %296 : vector<8x128xf32>
    %298 = arith.mulf %289, %242 : vector<8x128xf32>
    %299 = arith.mulf %283, %291 : vector<8x128xf32>
    %300 = arith.addf %298, %299 : vector<8x128xf32>
    %301 = math.tanh %300 : vector<8x128xf32>
    %302 = arith.mulf %297, %301 : vector<8x128xf32>
    %c40 = arith.constant 40 : index
    %c0_74 = arith.constant 0 : index
    %303 = vector.load %arg11[%c40, %c0_74] : memref<64x512xf32, #tpu.memory_space<vmem>>, vector<8x512xf32>
    %c0_75 = arith.constant 0 : index
    %c0_76 = arith.constant 0 : index
    %304 = vector.load %arg3[%c0_75, %c0_76] : memref<128x512xf32, #tpu.memory_space<vmem>>, vector<128x512xf32>
    %cst_77 = arith.constant dense<0.000000e+00> : vector<8x512xf32>
    %305 = tpu.matmul %273, %304, %cst_77 {dimension_numbers = #tpu.dot_dimension_numbers<[1], [0], [0], [1], [0, 0, 1, 1], [], []>} : vector<8x128xf32>, vector<128x512xf32>, vector<8x512xf32> -> vector<8x512xf32>
    %306 = arith.addf %303, %305 : vector<8x512xf32>
    %307 = vector.extract_strided_slice %306 {offsets = [0, 0], sizes = [8, 128], strides = [1, 1]} : vector<8x512xf32> to vector<8x128xf32>
    %308 = arith.negf %307 : vector<8x128xf32>
    %309 = math.exp %308 : vector<8x128xf32>
    %cst_78 = arith.constant 1.000000e+00 : f32
    %310 = vector.broadcast %cst_78 : f32 to vector<8x128xf32>
    %311 = arith.addf %310, %309 : vector<8x128xf32>
    %312 = arith.divf %310, %311 : vector<8x128xf32>
    %313 = vector.extract_strided_slice %306 {offsets = [0, 128], sizes = [8, 128], strides = [1, 1]} : vector<8x512xf32> to vector<8x128xf32>
    %314 = arith.negf %313 : vector<8x128xf32>
    %315 = math.exp %314 : vector<8x128xf32>
    %cst_79 = arith.constant 1.000000e+00 : f32
    %316 = vector.broadcast %cst_79 : f32 to vector<8x128xf32>
    %317 = arith.addf %316, %315 : vector<8x128xf32>
    %318 = arith.divf %316, %317 : vector<8x128xf32>
    %319 = vector.extract_strided_slice %306 {offsets = [0, 256], sizes = [8, 128], strides = [1, 1]} : vector<8x512xf32> to vector<8x128xf32>
    %320 = math.tanh %319 : vector<8x128xf32>
    %321 = vector.extract_strided_slice %306 {offsets = [0, 384], sizes = [8, 128], strides = [1, 1]} : vector<8x512xf32> to vector<8x128xf32>
    %322 = arith.negf %321 : vector<8x128xf32>
    %323 = math.exp %322 : vector<8x128xf32>
    %cst_80 = arith.constant 1.000000e+00 : f32
    %324 = vector.broadcast %cst_80 : f32 to vector<8x128xf32>
    %325 = arith.addf %324, %323 : vector<8x128xf32>
    %326 = arith.divf %324, %325 : vector<8x128xf32>
    %327 = arith.mulf %318, %271 : vector<8x128xf32>
    %328 = arith.mulf %312, %320 : vector<8x128xf32>
    %329 = arith.addf %327, %328 : vector<8x128xf32>
    %330 = math.tanh %329 : vector<8x128xf32>
    %331 = arith.mulf %326, %330 : vector<8x128xf32>
    %332 = tpu.concatenate %331, %302 in 1 : vector<8x128xf32>, vector<8x128xf32> -> vector<8x256xf32>
    %c0_81 = arith.constant 0 : index
    %c0_82 = arith.constant 0 : index
    %333 = vector.load %arg4[%c0_81, %c0_82] : memref<256x512xf32, #tpu.memory_space<vmem>>, vector<256x512xf32>
    %cst_83 = arith.constant dense<0.000000e+00> : vector<8x512xf32>
    %334 = tpu.matmul %332, %333, %cst_83 {dimension_numbers = #tpu.dot_dimension_numbers<[1], [0], [0], [1], [0, 0, 1, 1], [], []>} : vector<8x256xf32>, vector<256x512xf32>, vector<8x512xf32> -> vector<8x512xf32>
    %335 = arith.addf %334, %11 : vector<8x512xf32>
    %336 = vector.extract_strided_slice %335 {offsets = [0, 0], sizes = [8, 128], strides = [1, 1]} : vector<8x512xf32> to vector<8x128xf32>
    %337 = arith.negf %336 : vector<8x128xf32>
    %338 = math.exp %337 : vector<8x128xf32>
    %cst_84 = arith.constant 1.000000e+00 : f32
    %339 = vector.broadcast %cst_84 : f32 to vector<8x128xf32>
    %340 = arith.addf %339, %338 : vector<8x128xf32>
    %341 = arith.divf %339, %340 : vector<8x128xf32>
    %342 = vector.extract_strided_slice %335 {offsets = [0, 128], sizes = [8, 128], strides = [1, 1]} : vector<8x512xf32> to vector<8x128xf32>
    %343 = arith.negf %342 : vector<8x128xf32>
    %344 = math.exp %343 : vector<8x128xf32>
    %cst_85 = arith.constant 1.000000e+00 : f32
    %345 = vector.broadcast %cst_85 : f32 to vector<8x128xf32>
    %346 = arith.addf %345, %344 : vector<8x128xf32>
    %347 = arith.divf %345, %346 : vector<8x128xf32>
    %348 = vector.extract_strided_slice %335 {offsets = [0, 256], sizes = [8, 128], strides = [1, 1]} : vector<8x512xf32> to vector<8x128xf32>
    %349 = math.tanh %348 : vector<8x128xf32>
    %350 = vector.extract_strided_slice %335 {offsets = [0, 384], sizes = [8, 128], strides = [1, 1]} : vector<8x512xf32> to vector<8x128xf32>
    %351 = arith.negf %350 : vector<8x128xf32>
    %352 = math.exp %351 : vector<8x128xf32>
    %cst_86 = arith.constant 1.000000e+00 : f32
    %353 = vector.broadcast %cst_86 : f32 to vector<8x128xf32>
    %354 = arith.addf %353, %352 : vector<8x128xf32>
    %355 = arith.divf %353, %354 : vector<8x128xf32>
    %356 = arith.mulf %347, %300 : vector<8x128xf32>
    %357 = arith.mulf %341, %349 : vector<8x128xf32>
    %358 = arith.addf %356, %357 : vector<8x128xf32>
    %359 = math.tanh %358 : vector<8x128xf32>
    %360 = arith.mulf %355, %359 : vector<8x128xf32>
    %c48 = arith.constant 48 : index
    %c0_87 = arith.constant 0 : index
    %361 = vector.load %arg11[%c48, %c0_87] : memref<64x512xf32, #tpu.memory_space<vmem>>, vector<8x512xf32>
    %c0_88 = arith.constant 0 : index
    %c0_89 = arith.constant 0 : index
    %362 = vector.load %arg3[%c0_88, %c0_89] : memref<128x512xf32, #tpu.memory_space<vmem>>, vector<128x512xf32>
    %cst_90 = arith.constant dense<0.000000e+00> : vector<8x512xf32>
    %363 = tpu.matmul %331, %362, %cst_90 {dimension_numbers = #tpu.dot_dimension_numbers<[1], [0], [0], [1], [0, 0, 1, 1], [], []>} : vector<8x128xf32>, vector<128x512xf32>, vector<8x512xf32> -> vector<8x512xf32>
    %364 = arith.addf %361, %363 : vector<8x512xf32>
    %365 = vector.extract_strided_slice %364 {offsets = [0, 0], sizes = [8, 128], strides = [1, 1]} : vector<8x512xf32> to vector<8x128xf32>
    %366 = arith.negf %365 : vector<8x128xf32>
    %367 = math.exp %366 : vector<8x128xf32>
    %cst_91 = arith.constant 1.000000e+00 : f32
    %368 = vector.broadcast %cst_91 : f32 to vector<8x128xf32>
    %369 = arith.addf %368, %367 : vector<8x128xf32>
    %370 = arith.divf %368, %369 : vector<8x128xf32>
    %371 = vector.extract_strided_slice %364 {offsets = [0, 128], sizes = [8, 128], strides = [1, 1]} : vector<8x512xf32> to vector<8x128xf32>
    %372 = arith.negf %371 : vector<8x128xf32>
    %373 = math.exp %372 : vector<8x128xf32>
    %cst_92 = arith.constant 1.000000e+00 : f32
    %374 = vector.broadcast %cst_92 : f32 to vector<8x128xf32>
    %375 = arith.addf %374, %373 : vector<8x128xf32>
    %376 = arith.divf %374, %375 : vector<8x128xf32>
    %377 = vector.extract_strided_slice %364 {offsets = [0, 256], sizes = [8, 128], strides = [1, 1]} : vector<8x512xf32> to vector<8x128xf32>
    %378 = math.tanh %377 : vector<8x128xf32>
    %379 = vector.extract_strided_slice %364 {offsets = [0, 384], sizes = [8, 128], strides = [1, 1]} : vector<8x512xf32> to vector<8x128xf32>
    %380 = arith.negf %379 : vector<8x128xf32>
    %381 = math.exp %380 : vector<8x128xf32>
    %cst_93 = arith.constant 1.000000e+00 : f32
    %382 = vector.broadcast %cst_93 : f32 to vector<8x128xf32>
    %383 = arith.addf %382, %381 : vector<8x128xf32>
    %384 = arith.divf %382, %383 : vector<8x128xf32>
    %385 = arith.mulf %376, %329 : vector<8x128xf32>
    %386 = arith.mulf %370, %378 : vector<8x128xf32>
    %387 = arith.addf %385, %386 : vector<8x128xf32>
    %388 = math.tanh %387 : vector<8x128xf32>
    %389 = arith.mulf %384, %388 : vector<8x128xf32>
    %390 = tpu.concatenate %389, %360 in 1 : vector<8x128xf32>, vector<8x128xf32> -> vector<8x256xf32>
    %c0_94 = arith.constant 0 : index
    %c0_95 = arith.constant 0 : index
    %391 = vector.load %arg4[%c0_94, %c0_95] : memref<256x512xf32, #tpu.memory_space<vmem>>, vector<256x512xf32>
    %cst_96 = arith.constant dense<0.000000e+00> : vector<8x512xf32>
    %392 = tpu.matmul %390, %391, %cst_96 {dimension_numbers = #tpu.dot_dimension_numbers<[1], [0], [0], [1], [0, 0, 1, 1], [], []>} : vector<8x256xf32>, vector<256x512xf32>, vector<8x512xf32> -> vector<8x512xf32>
    %393 = arith.addf %392, %11 : vector<8x512xf32>
    %394 = vector.extract_strided_slice %393 {offsets = [0, 0], sizes = [8, 128], strides = [1, 1]} : vector<8x512xf32> to vector<8x128xf32>
    %395 = arith.negf %394 : vector<8x128xf32>
    %396 = math.exp %395 : vector<8x128xf32>
    %cst_97 = arith.constant 1.000000e+00 : f32
    %397 = vector.broadcast %cst_97 : f32 to vector<8x128xf32>
    %398 = arith.addf %397, %396 : vector<8x128xf32>
    %399 = arith.divf %397, %398 : vector<8x128xf32>
    %400 = vector.extract_strided_slice %393 {offsets = [0, 128], sizes = [8, 128], strides = [1, 1]} : vector<8x512xf32> to vector<8x128xf32>
    %401 = arith.negf %400 : vector<8x128xf32>
    %402 = math.exp %401 : vector<8x128xf32>
    %cst_98 = arith.constant 1.000000e+00 : f32
    %403 = vector.broadcast %cst_98 : f32 to vector<8x128xf32>
    %404 = arith.addf %403, %402 : vector<8x128xf32>
    %405 = arith.divf %403, %404 : vector<8x128xf32>
    %406 = vector.extract_strided_slice %393 {offsets = [0, 256], sizes = [8, 128], strides = [1, 1]} : vector<8x512xf32> to vector<8x128xf32>
    %407 = math.tanh %406 : vector<8x128xf32>
    %408 = vector.extract_strided_slice %393 {offsets = [0, 384], sizes = [8, 128], strides = [1, 1]} : vector<8x512xf32> to vector<8x128xf32>
    %409 = arith.negf %408 : vector<8x128xf32>
    %410 = math.exp %409 : vector<8x128xf32>
    %cst_99 = arith.constant 1.000000e+00 : f32
    %411 = vector.broadcast %cst_99 : f32 to vector<8x128xf32>
    %412 = arith.addf %411, %410 : vector<8x128xf32>
    %413 = arith.divf %411, %412 : vector<8x128xf32>
    %414 = arith.mulf %405, %358 : vector<8x128xf32>
    %415 = arith.mulf %399, %407 : vector<8x128xf32>
    %416 = arith.addf %414, %415 : vector<8x128xf32>
    %417 = math.tanh %416 : vector<8x128xf32>
    %418 = arith.mulf %413, %417 : vector<8x128xf32>
    %c56 = arith.constant 56 : index
    %c0_100 = arith.constant 0 : index
    %419 = vector.load %arg11[%c56, %c0_100] : memref<64x512xf32, #tpu.memory_space<vmem>>, vector<8x512xf32>
    %c0_101 = arith.constant 0 : index
    %c0_102 = arith.constant 0 : index
    %420 = vector.load %arg3[%c0_101, %c0_102] : memref<128x512xf32, #tpu.memory_space<vmem>>, vector<128x512xf32>
    %cst_103 = arith.constant dense<0.000000e+00> : vector<8x512xf32>
    %421 = tpu.matmul %389, %420, %cst_103 {dimension_numbers = #tpu.dot_dimension_numbers<[1], [0], [0], [1], [0, 0, 1, 1], [], []>} : vector<8x128xf32>, vector<128x512xf32>, vector<8x512xf32> -> vector<8x512xf32>
    %422 = arith.addf %419, %421 : vector<8x512xf32>
    %423 = vector.extract_strided_slice %422 {offsets = [0, 0], sizes = [8, 128], strides = [1, 1]} : vector<8x512xf32> to vector<8x128xf32>
    %424 = arith.negf %423 : vector<8x128xf32>
    %425 = math.exp %424 : vector<8x128xf32>
    %cst_104 = arith.constant 1.000000e+00 : f32
    %426 = vector.broadcast %cst_104 : f32 to vector<8x128xf32>
    %427 = arith.addf %426, %425 : vector<8x128xf32>
    %428 = arith.divf %426, %427 : vector<8x128xf32>
    %429 = vector.extract_strided_slice %422 {offsets = [0, 128], sizes = [8, 128], strides = [1, 1]} : vector<8x512xf32> to vector<8x128xf32>
    %430 = arith.negf %429 : vector<8x128xf32>
    %431 = math.exp %430 : vector<8x128xf32>
    %cst_105 = arith.constant 1.000000e+00 : f32
    %432 = vector.broadcast %cst_105 : f32 to vector<8x128xf32>
    %433 = arith.addf %432, %431 : vector<8x128xf32>
    %434 = arith.divf %432, %433 : vector<8x128xf32>
    %435 = vector.extract_strided_slice %422 {offsets = [0, 256], sizes = [8, 128], strides = [1, 1]} : vector<8x512xf32> to vector<8x128xf32>
    %436 = math.tanh %435 : vector<8x128xf32>
    %437 = vector.extract_strided_slice %422 {offsets = [0, 384], sizes = [8, 128], strides = [1, 1]} : vector<8x512xf32> to vector<8x128xf32>
    %438 = arith.negf %437 : vector<8x128xf32>
    %439 = math.exp %438 : vector<8x128xf32>
    %cst_106 = arith.constant 1.000000e+00 : f32
    %440 = vector.broadcast %cst_106 : f32 to vector<8x128xf32>
    %441 = arith.addf %440, %439 : vector<8x128xf32>
    %442 = arith.divf %440, %441 : vector<8x128xf32>
    %443 = arith.mulf %434, %387 : vector<8x128xf32>
    %444 = arith.mulf %428, %436 : vector<8x128xf32>
    %445 = arith.addf %443, %444 : vector<8x128xf32>
    %446 = math.tanh %445 : vector<8x128xf32>
    %447 = arith.mulf %442, %446 : vector<8x128xf32>
    %448 = tpu.concatenate %447, %418 in 1 : vector<8x128xf32>, vector<8x128xf32> -> vector<8x256xf32>
    %c0_107 = arith.constant 0 : index
    %c0_108 = arith.constant 0 : index
    %449 = vector.load %arg4[%c0_107, %c0_108] : memref<256x512xf32, #tpu.memory_space<vmem>>, vector<256x512xf32>
    %cst_109 = arith.constant dense<0.000000e+00> : vector<8x512xf32>
    %450 = tpu.matmul %448, %449, %cst_109 {dimension_numbers = #tpu.dot_dimension_numbers<[1], [0], [0], [1], [0, 0, 1, 1], [], []>} : vector<8x256xf32>, vector<256x512xf32>, vector<8x512xf32> -> vector<8x512xf32>
    %451 = arith.addf %450, %11 : vector<8x512xf32>
    %452 = vector.extract_strided_slice %451 {offsets = [0, 0], sizes = [8, 128], strides = [1, 1]} : vector<8x512xf32> to vector<8x128xf32>
    %453 = arith.negf %452 : vector<8x128xf32>
    %454 = math.exp %453 : vector<8x128xf32>
    %cst_110 = arith.constant 1.000000e+00 : f32
    %455 = vector.broadcast %cst_110 : f32 to vector<8x128xf32>
    %456 = arith.addf %455, %454 : vector<8x128xf32>
    %457 = arith.divf %455, %456 : vector<8x128xf32>
    %458 = vector.extract_strided_slice %451 {offsets = [0, 128], sizes = [8, 128], strides = [1, 1]} : vector<8x512xf32> to vector<8x128xf32>
    %459 = arith.negf %458 : vector<8x128xf32>
    %460 = math.exp %459 : vector<8x128xf32>
    %cst_111 = arith.constant 1.000000e+00 : f32
    %461 = vector.broadcast %cst_111 : f32 to vector<8x128xf32>
    %462 = arith.addf %461, %460 : vector<8x128xf32>
    %463 = arith.divf %461, %462 : vector<8x128xf32>
    %464 = vector.extract_strided_slice %451 {offsets = [0, 256], sizes = [8, 128], strides = [1, 1]} : vector<8x512xf32> to vector<8x128xf32>
    %465 = math.tanh %464 : vector<8x128xf32>
    %466 = vector.extract_strided_slice %451 {offsets = [0, 384], sizes = [8, 128], strides = [1, 1]} : vector<8x512xf32> to vector<8x128xf32>
    %467 = arith.negf %466 : vector<8x128xf32>
    %468 = math.exp %467 : vector<8x128xf32>
    %cst_112 = arith.constant 1.000000e+00 : f32
    %469 = vector.broadcast %cst_112 : f32 to vector<8x128xf32>
    %470 = arith.addf %469, %468 : vector<8x128xf32>
    %471 = arith.divf %469, %470 : vector<8x128xf32>
    %472 = arith.mulf %463, %416 : vector<8x128xf32>
    %473 = arith.mulf %457, %465 : vector<8x128xf32>
    %474 = arith.addf %472, %473 : vector<8x128xf32>
    %475 = math.tanh %474 : vector<8x128xf32>
    %476 = arith.mulf %471, %475 : vector<8x128xf32>
    %c0_113 = arith.constant 0 : index
    %c0_114 = arith.constant 0 : index
    %477 = vector.load %arg6[%c0_113, %c0_114] : memref<128x128xf32, #tpu.memory_space<vmem>>, vector<128x128xf32>
    %cst_115 = arith.constant dense<0.000000e+00> : vector<8x128xf32>
    %478 = tpu.matmul %476, %477, %cst_115 {dimension_numbers = #tpu.dot_dimension_numbers<[1], [0], [0], [1], [0, 0, 1, 1], [], []>} : vector<8x128xf32>, vector<128x128xf32>, vector<8x128xf32> -> vector<8x128xf32>
    %c0_116 = arith.constant 0 : index
    %c0_117 = arith.constant 0 : index
    %479 = vector.load %arg7[%c0_116, %c0_117] : memref<1x128xf32, #tpu.memory_space<vmem>>, vector<1x128xf32>
    %480 = vector.broadcast %479 : vector<1x128xf32> to vector<8x128xf32>
    %481 = arith.addf %478, %480 : vector<8x128xf32>
    %cst_118 = arith.constant 0.000000e+00 : f32
    %482 = vector.broadcast %cst_118 : f32 to vector<8x128xf32>
    %483 = arith.maximumf %481, %482 : vector<8x128xf32>
    %c0_119 = arith.constant 0 : index
    %c0_120 = arith.constant 0 : index
    %484 = vector.load %arg8[%c0_119, %c0_120] : memref<128x128xf32, #tpu.memory_space<vmem>>, vector<128x128xf32>
    %cst_121 = arith.constant dense<0.000000e+00> : vector<8x128xf32>
    %485 = tpu.matmul %483, %484, %cst_121 {dimension_numbers = #tpu.dot_dimension_numbers<[1], [0], [0], [1], [0, 0, 1, 1], [], []>} : vector<8x128xf32>, vector<128x128xf32>, vector<8x128xf32> -> vector<8x128xf32>
    %c0_122 = arith.constant 0 : index
    %c0_123 = arith.constant 0 : index
    %486 = vector.load %arg9[%c0_122, %c0_123] : memref<1x128xf32, #tpu.memory_space<vmem>>, vector<1x128xf32>
    %487 = vector.broadcast %486 : vector<1x128xf32> to vector<8x128xf32>
    %488 = arith.addf %485, %487 : vector<8x128xf32>
    %c0_124 = arith.constant 0 : index
    %c0_125 = arith.constant 0 : index
    %489 = vector.load %arg10[%c0_124, %c0_125] : memref<8x128xf32, #tpu.memory_space<vmem>>, vector<8x128xf32>
    tpu.vector_store %arg10[%c0_124, %c0_125], %488 {strides = array<i32>} : memref<8x128xf32, #tpu.memory_space<vmem>>, vector<8x128xf32>,
    return
  }
  func.func @transform_0(%arg0: i32) -> (i32, i32) {
    %c0_i32 = arith.constant 0 : i32
    %c0_i32_0 = arith.constant 0 : i32
    return %arg0, %c0_i32 : i32, i32
  }
  func.func @transform_1(%arg0: i32) -> (i32, i32) {
    %c0_i32 = arith.constant 0 : i32
    %c0_i32_0 = arith.constant 0 : i32
    %c0_i32_1 = arith.constant 0 : i32
    return %c0_i32, %c0_i32_0 : i32, i32
  }
  func.func @transform_2(%arg0: i32) -> (i32, i32) {
    %c0_i32 = arith.constant 0 : i32
    %c0_i32_0 = arith.constant 0 : i32
    %c0_i32_1 = arith.constant 0 : i32
    return %c0_i32, %c0_i32_0 : i32, i32
  }
  func.func @transform_3(%arg0: i32) -> (i32, i32) {
    %c0_i32 = arith.constant 0 : i32
    %c0_i32_0 = arith.constant 0 : i32
    %c0_i32_1 = arith.constant 0 : i32
    return %c0_i32, %c0_i32_0 : i32, i32
  }
  func.func @transform_4(%arg0: i32) -> (i32, i32) {
    %c0_i32 = arith.constant 0 : i32
    %c0_i32_0 = arith.constant 0 : i32
    %c0_i32_1 = arith.constant 0 : i32
    return %c0_i32, %c0_i32_0 : i32, i32
  }
  func.func @transform_5(%arg0: i32) -> (i32, i32) {
    %c0_i32 = arith.constant 0 : i32
    %c0_i32_0 = arith.constant 0 : i32
    %c0_i32_1 = arith.constant 0 : i32
    return %c0_i32, %c0_i32_0 : i32, i32
  }
  func.func @transform_6(%arg0: i32) -> (i32, i32) {
    %c0_i32 = arith.constant 0 : i32
    %c0_i32_0 = arith.constant 0 : i32
    %c0_i32_1 = arith.constant 0 : i32
    return %c0_i32, %c0_i32_0 : i32, i32
  }
  func.func @transform_7(%arg0: i32) -> (i32, i32) {
    %c0_i32 = arith.constant 0 : i32
    %c0_i32_0 = arith.constant 0 : i32
    %c0_i32_1 = arith.constant 0 : i32
    return %c0_i32, %c0_i32_0 : i32, i32
  }
  func.func @transform_8(%arg0: i32) -> (i32, i32) {
    %c0_i32 = arith.constant 0 : i32
    %c0_i32_0 = arith.constant 0 : i32
    %c0_i32_1 = arith.constant 0 : i32
    return %c0_i32, %c0_i32_0 : i32, i32
  }
  func.func @transform_9(%arg0: i32) -> (i32, i32) {
    %c0_i32 = arith.constant 0 : i32
    %c0_i32_0 = arith.constant 0 : i32
    return %arg0, %c0_i32 : i32, i32
  }
}

</mosaic_0001>

<llo_original>
// kernel: mnist_lstm_forward.1
$region0: #{mnist_lstm_forward.1}
  #allocation0 [shape = 'u32[]', space=smem, size = 0x4, offset = 0x4, fixed_abs, tag = 'smem constant byte address 0x4 - core index']
  #allocation1 [shape = 'u32[144,128]{1,0:T(1,128)}', space=vmem, size = 0x12000, scoped, tag = 'internal scratch']
  #allocation2 [shape = 'f32[64,512]{1,0:T(8,128)}', space=vmem, size = 0x20000, scoped, tag = 'scratch operand']
  %s0 = inlined_call_operand.vmem [shape: s32[64,1], index: 0, kind: input, shape index: {}]
  %s1 = inlined_call_operand.hbm [shape: f32[128,512], index: 1, kind: input, shape index: {}]
  %s2 = inlined_call_operand.hbm [shape: f32[128,512], index: 2, kind: input, shape index: {}]
  %s3 = inlined_call_operand.hbm [shape: f32[256,512], index: 3, kind: input, shape index: {}]
  %s4 = inlined_call_operand.vmem [shape: f32[1,512], index: 4, kind: input, shape index: {}]
  %s5 = inlined_call_operand.hbm [shape: f32[128,128], index: 5, kind: input, shape index: {}]
  %s6 = inlined_call_operand.vmem [shape: f32[1,128], index: 6, kind: input, shape index: {}]
  %s7 = inlined_call_operand.hbm [shape: f32[128,128], index: 7, kind: input, shape index: {}]
  %s8 = inlined_call_operand.vmem [shape: f32[1,128], index: 8, kind: input, shape index: {}]
  %s9 = inlined_call_operand.vmem [shape: f32[8,128], index: 9, kind: output, shape index: {}]
  %s10 = sld [smem:[#allocation0]]
  $region66: #{mnist_lstm_forward.1} parent=0
    _
  %s12 = ssub.s32 1, %s10
  %s13 = scalar_select 0, %s12, %s10
  $region1: #{mnist_lstm_forward.1} parent=0
    #allocation3 [shape = 'u8[262144]{0}', space=vmem, size = 0x40000, scoped, tag = 'input window, operand 1, single buffered']
    #allocation4 [shape = 's32[1]{0}', space=sflag, size = 0x4, scoped, tag = 'scoped memory for mnist_lstm_forward.1']
    #allocation5 [shape = 'u8[262144]{0}', space=vmem, size = 0x40000, scoped, tag = 'input window, operand 2, single buffered']
    #allocation6 [shape = 's32[1]{0}', space=sflag, size = 0x4, scoped, tag = 'scoped memory for mnist_lstm_forward.1']
    #allocation7 [shape = 'u8[524288]{0}', space=vmem, size = 0x80000, scoped, tag = 'input window, operand 3, single buffered']
    #allocation8 [shape = 'u8[65536]{0}', space=vmem, size = 0x10000, scoped, tag = 'input window, operand 5, single buffered']
    #allocation9 [shape = 's32[1]{0}', space=sflag, size = 0x4, scoped, tag = 'scoped memory for mnist_lstm_forward.1']
    #allocation10 [shape = 'u8[65536]{0}', space=vmem, size = 0x10000, scoped, tag = 'input window, operand 7, single buffered']
    %14 = vsyncpa [#allocation4], 0
    %15 = vsyncpa [#allocation6], 0
    %16 = vsyncpa [#allocation9], 0
    // Predicated region
    $region2: #{mnist_lstm_forward.1} parent=1 // pred_check
      _
    $region3: #{mnist_lstm_forward.1} parent=1 // pred_check_branch
      %18 = sbr.rel (0) target = $region5
    $region4: #{mnist_lstm_forward.1} parent=1 // pred_region
      _
    $region5: #{mnist_lstm_forward.1} parent=1 // pred_fallthru
      _
    // Predicated region
    $region6: #{mnist_lstm_forward.1} parent=1 // pred_check
      _
    $region7: #{mnist_lstm_forward.1} parent=1 // pred_check_branch
      %20 = sbr.rel (0) target = $region9
    $region8: #{mnist_lstm_forward.1} parent=1 // pred_region
      %s22 = ssub.s32 8192, 8192
      %23 = vsyncadd [#allocation4], %s22
      %s24 = sshll.u32 [#allocation3], 4
      %s25 = int_to_ptr.vmem [resolvable:$true] %s24
      %30 = dma.hbm_to_vmem [thread:$0]  %s1, 8192, %s25, [#allocation4], 512, 512, 32
    $region9: #{mnist_lstm_forward.1} parent=1 // pred_fallthru
      _
    // Predicated region
    $region10: #{mnist_lstm_forward.1} parent=1 // pred_check
      _
    $region11: #{mnist_lstm_forward.1} parent=1 // pred_check_branch
      %32 = sbr.rel (0) target = $region13
    $region12: #{mnist_lstm_forward.1} parent=1 // pred_region
      %s34 = ssub.s32 8192, 8192
      %35 = vsyncadd [#allocation6], %s34
      %s36 = sshll.u32 [#allocation5], 4
      %s37 = int_to_ptr.vmem [resolvable:$true] %s36
      %42 = dma.hbm_to_vmem [thread:$0]  %s2, 8192, %s37, [#allocation6], 512, 512, 32
    $region13: #{mnist_lstm_forward.1} parent=1 // pred_fallthru
      _
    // Predicated region
    $region14: #{mnist_lstm_forward.1} parent=1 // pred_check
      _
    $region15: #{mnist_lstm_forward.1} parent=1 // pred_check_branch
      %44 = sbr.rel (0) target = $region17
    $region16: #{mnist_lstm_forward.1} parent=1 // pred_region
      %s46 = ssub.s32 16384, 16384
      %47 = vsyncadd [#allocation6], %s46
      %s48 = sshll.u32 [#allocation7], 4
      %s49 = int_to_ptr.vmem [resolvable:$true] %s48
      %54 = dma.hbm_to_vmem [thread:$0]  %s3, 16384, %s49, [#allocation6], 512, 512, 32
    $region17: #{mnist_lstm_forward.1} parent=1 // pred_fallthru
      _
    // Predicated region
    $region18: #{mnist_lstm_forward.1} parent=1 // pred_check
      _
    $region19: #{mnist_lstm_forward.1} parent=1 // pred_check_branch
      %56 = sbr.rel (0) target = $region21
    $region20: #{mnist_lstm_forward.1} parent=1 // pred_region
      _
    $region21: #{mnist_lstm_forward.1} parent=1 // pred_fallthru
      _
    // Predicated region
    $region22: #{mnist_lstm_forward.1} parent=1 // pred_check
      _
    $region23: #{mnist_lstm_forward.1} parent=1 // pred_check_branch
      %58 = sbr.rel (0) target = $region25
    $region24: #{mnist_lstm_forward.1} parent=1 // pred_region
      %s60 = ssub.s32 2048, 2048
      %61 = vsyncadd [#allocation9], %s60
      %s62 = sshll.u32 [#allocation8], 4
      %s63 = int_to_ptr.vmem [resolvable:$true] %s62
      %68 = dma.hbm_to_vmem [thread:$0]  %s5, 2048, %s63, [#allocation9], 128, 128, 8
    $region25: #{mnist_lstm_forward.1} parent=1 // pred_fallthru
      _
    // Predicated region
    $region26: #{mnist_lstm_forward.1} parent=1 // pred_check
      _
    $region27: #{mnist_lstm_forward.1} parent=1 // pred_check_branch
      %70 = sbr.rel (0) target = $region29
    $region28: #{mnist_lstm_forward.1} parent=1 // pred_region
      _
    $region29: #{mnist_lstm_forward.1} parent=1 // pred_fallthru
      _
    // Predicated region
    $region30: #{mnist_lstm_forward.1} parent=1 // pred_check
      _
    $region31: #{mnist_lstm_forward.1} parent=1 // pred_check_branch
      %72 = sbr.rel (0) target = $region33
    $region32: #{mnist_lstm_forward.1} parent=1 // pred_region
      %s74 = ssub.s32 2048, 2048
      %75 = vsyncadd [#allocation9], %s74
      %s76 = sshll.u32 [#allocation10], 4
      %s77 = int_to_ptr.vmem [resolvable:$true] %s76
      %82 = dma.hbm_to_vmem [thread:$0]  %s7, 2048, %s77, [#allocation9], 128, 128, 8
    $region33: #{mnist_lstm_forward.1} parent=1 // pred_fallthru
      _
    // Predicated region
    $region34: #{mnist_lstm_forward.1} parent=1 // pred_check
      _
    $region35: #{mnist_lstm_forward.1} parent=1 // pred_check_branch
      %84 = sbr.rel (0) target = $region37
    $region36: #{mnist_lstm_forward.1} parent=1 // pred_region
      _
    $region37: #{mnist_lstm_forward.1} parent=1 // pred_fallthru
      _
    // Predicated region
    $region38: #{mnist_lstm_forward.1} parent=1 // pred_check
      _
    $region39: #{mnist_lstm_forward.1} parent=1 // pred_check_branch
      %86 = sbr.rel (0) target = $region41
    $region40: #{mnist_lstm_forward.1} parent=1 // pred_region
      %87 = dma.done [#allocation4], 8192
    $region41: #{mnist_lstm_forward.1} parent=1 // pred_fallthru
      _
    // Predicated region
    $region42: #{mnist_lstm_forward.1} parent=1 // pred_check
      _
    $region43: #{mnist_lstm_forward.1} parent=1 // pred_check_branch
      %89 = sbr.rel (0) target = $region45
    $region44: #{mnist_lstm_forward.1} parent=1 // pred_region
      %90 = dma.done [#allocation6], 8192
    $region45: #{mnist_lstm_forward.1} parent=1 // pred_fallthru
      _
    // Predicated region
    $region46: #{mnist_lstm_forward.1} parent=1 // pred_check
      _
    $region47: #{mnist_lstm_forward.1} parent=1 // pred_check_branch
      %92 = sbr.rel (0) target = $region49
    $region48: #{mnist_lstm_forward.1} parent=1 // pred_region
      %93 = dma.done [#allocation6], 16384
    $region49: #{mnist_lstm_forward.1} parent=1 // pred_fallthru
      _
    // Predicated region
    $region50: #{mnist_lstm_forward.1} parent=1 // pred_check
      _
    $region51: #{mnist_lstm_forward.1} parent=1 // pred_check_branch
      %95 = sbr.rel (0) target = $region53
    $region52: #{mnist_lstm_forward.1} parent=1 // pred_region
      %96 = dma.done [#allocation9], 2048
    $region53: #{mnist_lstm_forward.1} parent=1 // pred_fallthru
      _
    // Predicated region
    $region54: #{mnist_lstm_forward.1} parent=1 // pred_check
      _
    $region55: #{mnist_lstm_forward.1} parent=1 // pred_check_branch
      %98 = sbr.rel (0) target = $region57
    $region56: #{mnist_lstm_forward.1} parent=1 // pred_region
      %99 = dma.done [#allocation9], 2048
    $region57: #{mnist_lstm_forward.1} parent=1 // pred_fallthru
      _
    %v100 = vld [vmem:[%s0] sm:$0xff]
    %v101 = vld [vmem:[%s0 + $0x8] sm:$0xff]
    %v102 = vld [vmem:[%s0 + $0x10] sm:$0xff]
    %v103 = vld [vmem:[%s0 + $0x18] sm:$0xff]
    %v104 = vld [vmem:[%s0 + $0x20] sm:$0xff]
    %v105 = vld [vmem:[%s0 + $0x28] sm:$0xff]
    %v106 = vld [vmem:[%s0 + $0x30] sm:$0xff]
    %v107 = vld [vmem:[%s0 + $0x38] sm:$0xff]
    %v108 = vlaneseq
    %v109 = vand.u32 %v108, 127
    %110 = vset.pattern.permute.xlu0 0
    %111 = vperm.xlu0 %110, %v100
    %v112 = vpop.permute.xlu0 %111
    %113 = vset.pattern.permute.xlu0 0
    %114 = vperm.xlu0 %113, %v101
    %v115 = vpop.permute.xlu0 %114
    %116 = vset.pattern.permute.xlu0 0
    %117 = vperm.xlu0 %116, %v102
    %v118 = vpop.permute.xlu0 %117
    %119 = vset.pattern.permute.xlu0 0
    %120 = vperm.xlu0 %119, %v103
    %v121 = vpop.permute.xlu0 %120
    %122 = vset.pattern.permute.xlu0 0
    %123 = vperm.xlu0 %122, %v104
    %v124 = vpop.permute.xlu0 %123
    %125 = vset.pattern.permute.xlu0 0
    %126 = vperm.xlu0 %125, %v105
    %v127 = vpop.permute.xlu0 %126
    %128 = vset.pattern.permute.xlu0 0
    %129 = vperm.xlu0 %128, %v106
    %v130 = vpop.permute.xlu0 %129
    %131 = vset.pattern.permute.xlu0 0
    %132 = vperm.xlu0 %131, %v107
    %v133 = vpop.permute.xlu0 %132
    %vm134 = vcmp.eq.s32.totalorder %v109, %v112
    %vm135 = vcmp.eq.s32.totalorder %v109, %v115
    %vm136 = vcmp.eq.s32.totalorder %v109, %v118
    %vm137 = vcmp.eq.s32.totalorder %v109, %v121
    %vm138 = vcmp.eq.s32.totalorder %v109, %v124
    %vm139 = vcmp.eq.s32.totalorder %v109, %v127
    %vm140 = vcmp.eq.s32.totalorder %v109, %v130
    %vm141 = vcmp.eq.s32.totalorder %v109, %v133
    %v142 = vsel %vm134, 1, 0
    %v143 = vsel %vm135, 1, 0
    %v144 = vsel %vm136, 1, 0
    %v145 = vsel %vm137, 1, 0
    %v146 = vsel %vm138, 1, 0
    %v147 = vsel %vm139, 1, 0
    %v148 = vsel %vm140, 1, 0
    %v149 = vsel %vm141, 1, 0
    %v150 = vcvt.s32.f32 %v142
    %v151 = vcvt.s32.f32 %v143
    %v152 = vcvt.s32.f32 %v144
    %v153 = vcvt.s32.f32 %v145
    %v154 = vcvt.s32.f32 %v146
    %v155 = vcvt.s32.f32 %v147
    %v156 = vcvt.s32.f32 %v148
    %v157 = vcvt.s32.f32 %v149
    %v158 = vld [vmem:[#allocation3] sm:$0xff]
    %v159 = vld [vmem:[#allocation3 + $0x8] sm:$0xff]
    %v160 = vld [vmem:[#allocation3 + $0x10] sm:$0xff]
    %v161 = vld [vmem:[#allocation3 + $0x18] sm:$0xff]
    %v162 = vld [vmem:[#allocation3 + $0x20] sm:$0xff]
    %v163 = vld [vmem:[#allocation3 + $0x28] sm:$0xff]
    %v164 = vld [vmem:[#allocation3 + $0x30] sm:$0xff]
    %v165 = vld [vmem:[#allocation3 + $0x38] sm:$0xff]
    %v166 = vld [vmem:[#allocation3 + $0x40] sm:$0xff]
    %v167 = vld [vmem:[#allocation3 + $0x48] sm:$0xff]
    %v168 = vld [vmem:[#allocation3 + $0x50] sm:$0xff]
    %v169 = vld [vmem:[#allocation3 + $0x58] sm:$0xff]
    %v170 = vld [vmem:[#allocation3 + $0x60] sm:$0xff]
    %v171 = vld [vmem:[#allocation3 + $0x68] sm:$0xff]
    %v172 = vld [vmem:[#allocation3 + $0x70] sm:$0xff]
    %v173 = vld [vmem:[#allocation3 + $0x78] sm:$0xff]
    %v174 = vld [vmem:[#allocation3 + $0x80] sm:$0xff]
    %v175 = vld [vmem:[#allocation3 + $0x88] sm:$0xff]
    %v176 = vld [vmem:[#allocation3 + $0x90] sm:$0xff]
    %v177 = vld [vmem:[#allocation3 + $0x98] sm:$0xff]
    %v178 = vld [vmem:[#allocation3 + $0xa0] sm:$0xff]
    %v179 = vld [vmem:[#allocation3 + $0xa8] sm:$0xff]
    %v180 = vld [vmem:[#allocation3 + $0xb0] sm:$0xff]
    %v181 = vld [vmem:[#allocation3 + $0xb8] sm:$0xff]
    %v182 = vld [vmem:[#allocation3 + $0xc0] sm:$0xff]
    %v183 = vld [vmem:[#allocation3 + $0xc8] sm:$0xff]
    %v184 = vld [vmem:[#allocation3 + $0xd0] sm:$0xff]
    %v185 = vld [vmem:[#allocation3 + $0xd8] sm:$0xff]
    %v186 = vld [vmem:[#allocation3 + $0xe0] sm:$0xff]
    %v187 = vld [vmem:[#allocation3 + $0xe8] sm:$0xff]
    %v188 = vld [vmem:[#allocation3 + $0xf0] sm:$0xff]
    %v189 = vld [vmem:[#allocation3 + $0xf8] sm:$0xff]
    %v190 = vld [vmem:[#allocation3 + $0x100] sm:$0xff]
    %v191 = vld [vmem:[#allocation3 + $0x108] sm:$0xff]
    %v192 = vld [vmem:[#allocation3 + $0x110] sm:$0xff]
    %v193 = vld [vmem:[#allocation3 + $0x118] sm:$0xff]
    %v194 = vld [vmem:[#allocation3 + $0x120] sm:$0xff]
    %v195 = vld [vmem:[#allocation3 + $0x128] sm:$0xff]
    %v196 = vld [vmem:[#allocation3 + $0x130] sm:$0xff]
    %v197 = vld [vmem:[#allocation3 + $0x138] sm:$0xff]
    %v198 = vld [vmem:[#allocation3 + $0x140] sm:$0xff]
    %v199 = vld [vmem:[#allocation3 + $0x148] sm:$0xff]
    %v200 = vld [vmem:[#allocation3 + $0x150] sm:$0xff]
    %v201 = vld [vmem:[#allocation3 + $0x158] sm:$0xff]
    %v202 = vld [vmem:[#allocation3 + $0x160] sm:$0xff]
    %v203 = vld [vmem:[#allocation3 + $0x168] sm:$0xff]
    %v204 = vld [vmem:[#allocation3 + $0x170] sm:$0xff]
    %v205 = vld [vmem:[#allocation3 + $0x178] sm:$0xff]
    %v206 = vld [vmem:[#allocation3 + $0x180] sm:$0xff]
    %v207 = vld [vmem:[#allocation3 + $0x188] sm:$0xff]
    %v208 = vld [vmem:[#allocation3 + $0x190] sm:$0xff]
    %v209 = vld [vmem:[#allocation3 + $0x198] sm:$0xff]
    %v210 = vld [vmem:[#allocation3 + $0x1a0] sm:$0xff]
    %v211 = vld [vmem:[#allocation3 + $0x1a8] sm:$0xff]
    %v212 = vld [vmem:[#allocation3 + $0x1b0] sm:$0xff]
    %v213 = vld [vmem:[#allocation3 + $0x1b8] sm:$0xff]
    %v214 = vld [vmem:[#allocation3 + $0x1c0] sm:$0xff]
    %v215 = vld [vmem:[#allocation3 + $0x1c8] sm:$0xff]
    %v216 = vld [vmem:[#allocation3 + $0x1d0] sm:$0xff]
    %v217 = vld [vmem:[#allocation3 + $0x1d8] sm:$0xff]
    %v218 = vld [vmem:[#allocation3 + $0x1e0] sm:$0xff]
    %v219 = vld [vmem:[#allocation3 + $0x1e8] sm:$0xff]
    %v220 = vld [vmem:[#allocation3 + $0x1f0] sm:$0xff]
    %v221 = vld [vmem:[#allocation3 + $0x1f8] sm:$0xff]
    %222 = vmatprep.subr.mxu0 %v159
    %223 = vmatpush1.msra.mxu0 %v158
    %224 = vmatprep.subr.mxu0 %v163
    %225 = vmatpush1.msra.mxu0 %v162
    %226 = vmatprep.subr.mxu0 %v167
    %227 = vmatpush1.msra.mxu0 %v166
    %228 = vmatprep.subr.mxu0 %v171
    %229 = vmatpush1.msra.mxu0 %v170
    %230 = vmatprep.subr.mxu0 %v175
    %231 = vmatpush1.msra.mxu0 %v174
    %232 = vmatprep.subr.mxu0 %v179
    %233 = vmatpush1.msra.mxu0 %v178
    %234 = vmatprep.subr.mxu0 %v183
    %235 = vmatpush1.msra.mxu0 %v182
    %236 = vmatprep.subr.mxu0 %v187
    %237 = vmatpush1.msra.mxu0 %v186
    %238 = vmatprep.subr.mxu0 %v191
    %239 = vmatpush1.msra.mxu0 %v190
    %240 = vmatprep.subr.mxu0 %v195
    %241 = vmatpush1.msra.mxu0 %v194
    %242 = vmatprep.subr.mxu0 %v199
    %243 = vmatpush1.msra.mxu0 %v198
    %244 = vmatprep.subr.mxu0 %v203
    %245 = vmatpush1.msra.mxu0 %v202
    %246 = vmatprep.subr.mxu0 %v207
    %247 = vmatpush1.msra.mxu0 %v206
    %248 = vmatprep.subr.mxu0 %v211
    %249 = vmatpush1.msra.mxu0 %v210
    %250 = vmatprep.subr.mxu0 %v215
    %251 = vmatpush1.msra.mxu0 %v214
    %252 = vmatprep.subr.mxu0 %v219
    %253 = vmatpush1.msra.mxu0 %v218
    %254 = vmatprep.subr.mxu0 0.0
    %255 = vmatpush1.msra.mxu0 0.0
    %256 = vmatprep.subr.mxu0 0.0
    %257 = vmatpush1.msra.mxu0 0.0
    %258 = vmatprep.subr.mxu0 0.0
    %259 = vmatpush1.msra.mxu0 0.0
    %260 = vmatprep.subr.mxu0 0.0
    %261 = vmatpush1.msra.mxu0 0.0
    %262 = vmatprep.subr.mxu0 0.0
    %263 = vmatpush1.msra.mxu0 0.0
    %264 = vmatprep.subr.mxu0 0.0
    %265 = vmatpush1.msra.mxu0 0.0
    %266 = vmatprep.subr.mxu0 0.0
    %267 = vmatpush1.msra.mxu0 0.0
    %268 = vmatprep.subr.mxu0 0.0
    %269 = vmatpush1.msra.mxu0 0.0
    %270 = vmatprep.subr.mxu0 0.0
    %271 = vmatpush1.msra.mxu0 0.0
    %272 = vmatprep.subr.mxu0 0.0
    %273 = vmatpush1.msra.mxu0 0.0
    %274 = vmatprep.subr.mxu0 0.0
    %275 = vmatpush1.msra.mxu0 0.0
    %276 = vmatprep.subr.mxu0 0.0
    %277 = vmatpush1.msra.mxu0 0.0
    %278 = vmatprep.subr.mxu0 0.0
    %279 = vmatpush1.msra.mxu0 0.0
    %280 = vmatprep.subr.mxu0 0.0
    %281 = vmatpush1.msra.mxu0 0.0
    %282 = vmatprep.subr.mxu0 0.0
    %283 = vmatpush1.msra.mxu0 0.0
    %284 = vmatprep.subr.mxu0 0.0
    %285 = vmatpush1.msra.mxu0 0.0
    %286 = vmatprep.mubr.f32.mxu0 0.0
    %287 = vmatmul.mubr.f32.gmra.mrb[0].mxu0 %v150
    %v288 = vpop.f32.mrb[0].mxu0
    %v289 = vadd.f32 0.0, %v288
    %v290 = vpop.f32.mrb[0].mxu0
    %v291 = vadd.f32 0.0, %v290
    %292 = vmatprep.mubr.f32.mxu0 0.0
    %293 = vmatmul.mubr.f32.gmra.mrb[0].mxu0 %v151
    %v294 = vpop.f32.mrb[0].mxu0
    %v295 = vadd.f32 0.0, %v294
    %v296 = vpop.f32.mrb[0].mxu0
    %v297 = vadd.f32 0.0, %v296
    %298 = vmatprep.mubr.f32.mxu0 0.0
    %299 = vmatmul.mubr.f32.gmra.mrb[0].mxu0 %v152
    %v300 = vpop.f32.mrb[0].mxu0
    %v301 = vadd.f32 0.0, %v300
    %v302 = vpop.f32.mrb[0].mxu0
    %v303 = vadd.f32 0.0, %v302
    %304 = vmatprep.mubr.f32.mxu0 0.0
    %305 = vmatmul.mubr.f32.gmra.mrb[0].mxu0 %v153
    %v306 = vpop.f32.mrb[0].mxu0
    %v307 = vadd.f32 0.0, %v306
    %v308 = vpop.f32.mrb[0].mxu0
    %v309 = vadd.f32 0.0, %v308
    %310 = vmatprep.mubr.f32.mxu0 0.0
    %311 = vmatmul.mubr.f32.gmra.mrb[0].mxu0 %v154
    %v312 = vpop.f32.mrb[0].mxu0
    %v313 = vadd.f32 0.0, %v312
    %v314 = vpop.f32.mrb[0].mxu0
    %v315 = vadd.f32 0.0, %v314
    %316 = vmatprep.mubr.f32.mxu0 0.0
    %317 = vmatmul.mubr.f32.gmra.mrb[0].mxu0 %v155
    %v318 = vpop.f32.mrb[0].mxu0
    %v319 = vadd.f32 0.0, %v318
    %v320 = vpop.f32.mrb[0].mxu0
    %v321 = vadd.f32 0.0, %v320
    %322 = vmatprep.mubr.f32.mxu0 0.0
    %323 = vmatmul.mubr.f32.gmra.mrb[0].mxu0 %v156
    %v324 = vpop.f32.mrb[0].mxu0
    %v325 = vadd.f32 0.0, %v324
    %v326 = vpop.f32.mrb[0].mxu0
    %v327 = vadd.f32 0.0, %v326
    %328 = vmatprep.mubr.f32.mxu0 0.0
    %329 = vmatmul.mubr.f32.gmra.mrb[0].mxu0 %v157
    %v330 = vpop.f32.mrb[0].mxu0
    %v331 = vadd.f32 0.0, %v330
    %v332 = vpop.f32.mrb[0].mxu0
    %v333 = vadd.f32 0.0, %v332
    %334 = vdwg.mxu0
    %335 = vmatprep.subr.mxu0 %v161
    %336 = vmatpush1.msra.mxu0 %v160
    %337 = vmatprep.subr.mxu0 %v165
    %338 = vmatpush1.msra.mxu0 %v164
    %339 = vmatprep.subr.mxu0 %v169
    %340 = vmatpush1.msra.mxu0 %v168
    %341 = vmatprep.subr.mxu0 %v173
    %342 = vmatpush1.msra.mxu0 %v172
    %343 = vmatprep.subr.mxu0 %v177
    %344 = vmatpush1.msra.mxu0 %v176
    %345 = vmatprep.subr.mxu0 %v181
    %346 = vmatpush1.msra.mxu0 %v180
    %347 = vmatprep.subr.mxu0 %v185
    %348 = vmatpush1.msra.mxu0 %v184
    %349 = vmatprep.subr.mxu0 %v189
    %350 = vmatpush1.msra.mxu0 %v188
    %351 = vmatprep.subr.mxu0 %v193
    %352 = vmatpush1.msra.mxu0 %v192
    %353 = vmatprep.subr.mxu0 %v197
    %354 = vmatpush1.msra.mxu0 %v196
    %355 = vmatprep.subr.mxu0 %v201
    %356 = vmatpush1.msra.mxu0 %v200
    %357 = vmatprep.subr.mxu0 %v205
    %358 = vmatpush1.msra.mxu0 %v204
    %359 = vmatprep.subr.mxu0 %v209
    %360 = vmatpush1.msra.mxu0 %v208
    %361 = vmatprep.subr.mxu0 %v213
    %362 = vmatpush1.msra.mxu0 %v212
    %363 = vmatprep.subr.mxu0 %v217
    %364 = vmatpush1.msra.mxu0 %v216
    %365 = vmatprep.subr.mxu0 %v221
    %366 = vmatpush1.msra.mxu0 %v220
    %367 = vmatprep.subr.mxu0 0.0
    %368 = vmatpush1.msra.mxu0 0.0
    %369 = vmatprep.subr.mxu0 0.0
    %370 = vmatpush1.msra.mxu0 0.0
    %371 = vmatprep.subr.mxu0 0.0
    %372 = vmatpush1.msra.mxu0 0.0
    %373 = vmatprep.subr.mxu0 0.0
    %374 = vmatpush1.msra.mxu0 0.0
    %375 = vmatprep.subr.mxu0 0.0
    %376 = vmatpush1.msra.mxu0 0.0
    %377 = vmatprep.subr.mxu0 0.0
    %378 = vmatpush1.msra.mxu0 0.0
    %379 = vmatprep.subr.mxu0 0.0
    %380 = vmatpush1.msra.mxu0 0.0
    %381 = vmatprep.subr.mxu0 0.0
    %382 = vmatpush1.msra.mxu0 0.0
    %383 = vmatprep.subr.mxu0 0.0
    %384 = vmatpush1.msra.mxu0 0.0
    %385 = vmatprep.subr.mxu0 0.0
    %386 = vmatpush1.msra.mxu0 0.0
    %387 = vmatprep.subr.mxu0 0.0
    %388 = vmatpush1.msra.mxu0 0.0
    %389 = vmatprep.subr.mxu0 0.0
    %390 = vmatpush1.msra.mxu0 0.0
    %391 = vmatprep.subr.mxu0 0.0
    %392 = vmatpush1.msra.mxu0 0.0
    %393 = vmatprep.subr.mxu0 0.0
    %394 = vmatpush1.msra.mxu0 0.0
    %395 = vmatprep.subr.mxu0 0.0
    %396 = vmatpush1.msra.mxu0 0.0
    %397 = vmatprep.subr.mxu0 0.0
    %398 = vmatpush1.msra.mxu0 0.0
    %399 = vmatprep.mubr.f32.mxu0 0.0
    %400 = vmatmul.mubr.f32.gmra.mrb[0].mxu0 %v150
    %v401 = vpop.f32.mrb[0].mxu0
    %v402 = vadd.f32 0.0, %v401
    %v403 = vpop.f32.mrb[0].mxu0
    %v404 = vadd.f32 0.0, %v403
    %405 = vmatprep.mubr.f32.mxu0 0.0
    %406 = vmatmul.mubr.f32.gmra.mrb[0].mxu0 %v151
    %v407 = vpop.f32.mrb[0].mxu0
    %v408 = vadd.f32 0.0, %v407
    %v409 = vpop.f32.mrb[0].mxu0
    %v410 = vadd.f32 0.0, %v409
    %411 = vmatprep.mubr.f32.mxu0 0.0
    %412 = vmatmul.mubr.f32.gmra.mrb[0].mxu0 %v152
    %v413 = vpop.f32.mrb[0].mxu0
    %v414 = vadd.f32 0.0, %v413
    %v415 = vpop.f32.mrb[0].mxu0
    %v416 = vadd.f32 0.0, %v415
    %417 = vmatprep.mubr.f32.mxu0 0.0
    %418 = vmatmul.mubr.f32.gmra.mrb[0].mxu0 %v153
    %v419 = vpop.f32.mrb[0].mxu0
    %v420 = vadd.f32 0.0, %v419
    %v421 = vpop.f32.mrb[0].mxu0
    %v422 = vadd.f32 0.0, %v421
    %423 = vmatprep.mubr.f32.mxu0 0.0
    %424 = vmatmul.mubr.f32.gmra.mrb[0].mxu0 %v154
    %v425 = vpop.f32.mrb[0].mxu0
    %v426 = vadd.f32 0.0, %v425
    %v427 = vpop.f32.mrb[0].mxu0
    %v428 = vadd.f32 0.0, %v427
    %429 = vmatprep.mubr.f32.mxu0 0.0
    %430 = vmatmul.mubr.f32.gmra.mrb[0].mxu0 %v155
    %v431 = vpop.f32.mrb[0].mxu0
    %v432 = vadd.f32 0.0, %v431
    %v433 = vpop.f32.mrb[0].mxu0
    %v434 = vadd.f32 0.0, %v433
    %435 = vmatprep.mubr.f32.mxu0 0.0
    %436 = vmatmul.mubr.f32.gmra.mrb[0].mxu0 %v156
    %v437 = vpop.f32.mrb[0].mxu0
    %v438 = vadd.f32 0.0, %v437
    %v439 = vpop.f32.mrb[0].mxu0
    %v440 = vadd.f32 0.0, %v439
    %441 = vmatprep.mubr.f32.mxu0 0.0
    %442 = vmatmul.mubr.f32.gmra.mrb[0].mxu0 %v157
    %v443 = vpop.f32.mrb[0].mxu0
    %v444 = vadd.f32 0.0, %v443
    %v445 = vpop.f32.mrb[0].mxu0
    %v446 = vadd.f32 0.0, %v445
    %447 = vdwg.mxu0
    %448 = vst [vmem:[#allocation2] sm:$0xff] %v289
    %449 = vst [vmem:[#allocation2 + $0x8] sm:$0xff] %v291
    %450 = vst [vmem:[#allocation2 + $0x10] sm:$0xff] %v402
    %451 = vst [vmem:[#allocation2 + $0x18] sm:$0xff] %v404
    %452 = vst [vmem:[#allocation2 + $0x20] sm:$0xff] %v295
    %453 = vst [vmem:[#allocation2 + $0x28] sm:$0xff] %v297
    %454 = vst [vmem:[#allocation2 + $0x30] sm:$0xff] %v408
    %455 = vst [vmem:[#allocation2 + $0x38] sm:$0xff] %v410
    %456 = vst [vmem:[#allocation2 + $0x40] sm:$0xff] %v301
    %457 = vst [vmem:[#allocation2 + $0x48] sm:$0xff] %v303
    %458 = vst [vmem:[#allocation2 + $0x50] sm:$0xff] %v414
    %459 = vst [vmem:[#allocation2 + $0x58] sm:$0xff] %v416
    %460 = vst [vmem:[#allocation2 + $0x60] sm:$0xff] %v307
    %461 = vst [vmem:[#allocation2 + $0x68] sm:$0xff] %v309
    %462 = vst [vmem:[#allocation2 + $0x70] sm:$0xff] %v420
    %463 = vst [vmem:[#allocation2 + $0x78] sm:$0xff] %v422
    %464 = vst [vmem:[#allocation2 + $0x80] sm:$0xff] %v313
    %465 = vst [vmem:[#allocation2 + $0x88] sm:$0xff] %v315
    %466 = vst [vmem:[#allocation2 + $0x90] sm:$0xff] %v426
    %467 = vst [vmem:[#allocation2 + $0x98] sm:$0xff] %v428
    %468 = vst [vmem:[#allocation2 + $0xa0] sm:$0xff] %v319
    %469 = vst [vmem:[#allocation2 + $0xa8] sm:$0xff] %v321
    %470 = vst [vmem:[#allocation2 + $0xb0] sm:$0xff] %v432
    %471 = vst [vmem:[#allocation2 + $0xb8] sm:$0xff] %v434
    %472 = vst [vmem:[#allocation2 + $0xc0] sm:$0xff] %v325
    %473 = vst [vmem:[#allocation2 + $0xc8] sm:$0xff] %v327
    %474 = vst [vmem:[#allocation2 + $0xd0] sm:$0xff] %v438
    %475 = vst [vmem:[#allocation2 + $0xd8] sm:$0xff] %v440
    %476 = vst [vmem:[#allocation2 + $0xe0] sm:$0xff] %v331
    %477 = vst [vmem:[#allocation2 + $0xe8] sm:$0xff] %v333
    %478 = vst [vmem:[#allocation2 + $0xf0] sm:$0xff] %v444
    %479 = vst [vmem:[#allocation2 + $0xf8] sm:$0xff] %v446
    %v480 = vld [vmem:[%s4] sm:$0xf]
    %v482 = vlaneseq
    %v483 = vshrl.u32 %v482, 7
    %v484 = vsub.s32 0, %v483
    %v485 = vrot.slane %v480, %v484
    %v486 = vlaneseq
    %v487 = vshrl.u32 %v486, 7
    %v488 = vsub.s32 1, %v487
    %v489 = vrot.slane %v480, %v488
    %v490 = vlaneseq
    %v491 = vshrl.u32 %v490, 7
    %v492 = vsub.s32 2, %v491
    %v493 = vrot.slane %v480, %v492
    %v494 = vlaneseq
    %v495 = vshrl.u32 %v494, 7
    %v496 = vsub.s32 3, %v495
    %v497 = vrot.slane %v480, %v496
    %v502 = vld [vmem:[#allocation2] sm:$0xff]
    %v503 = vld [vmem:[#allocation2 + $0x8] sm:$0xff]
    %v504 = vld [vmem:[#allocation2 + $0x10] sm:$0xff]
    %v505 = vld [vmem:[#allocation2 + $0x18] sm:$0xff]
    %v506 = vld [vmem:[#allocation5] sm:$0xff]
    %v507 = vld [vmem:[#allocation5 + $0x8] sm:$0xff]
    %v508 = vld [vmem:[#allocation5 + $0x10] sm:$0xff]
    %v509 = vld [vmem:[#allocation5 + $0x18] sm:$0xff]
    %v510 = vld [vmem:[#allocation5 + $0x20] sm:$0xff]
    %v511 = vld [vmem:[#allocation5 + $0x28] sm:$0xff]
    %v512 = vld [vmem:[#allocation5 + $0x30] sm:$0xff]
    %v513 = vld [vmem:[#allocation5 + $0x38] sm:$0xff]
    %v514 = vld [vmem:[#allocation5 + $0x40] sm:$0xff]
    %v515 = vld [vmem:[#allocation5 + $0x48] sm:$0xff]
    %v516 = vld [vmem:[#allocation5 + $0x50] sm:$0xff]
    %v517 = vld [vmem:[#allocation5 + $0x58] sm:$0xff]
    %v518 = vld [vmem:[#allocation5 + $0x60] sm:$0xff]
    %v519 = vld [vmem:[#allocation5 + $0x68] sm:$0xff]
    %v520 = vld [vmem:[#allocation5 + $0x70] sm:$0xff]
    %v521 = vld [vmem:[#allocation5 + $0x78] sm:$0xff]
    %v522 = vld [vmem:[#allocation5 + $0x80] sm:$0xff]
    %v523 = vld [vmem:[#allocation5 + $0x88] sm:$0xff]
    %v524 = vld [vmem:[#allocation5 + $0x90] sm:$0xff]
    %v525 = vld [vmem:[#allocation5 + $0x98] sm:$0xff]
    %v526 = vld [vmem:[#allocation5 + $0xa0] sm:$0xff]
    %v527 = vld [vmem:[#allocation5 + $0xa8] sm:$0xff]
    %v528 = vld [vmem:[#allocation5 + $0xb0] sm:$0xff]
    %v529 = vld [vmem:[#allocation5 + $0xb8] sm:$0xff]
    %v530 = vld [vmem:[#allocation5 + $0xc0] sm:$0xff]
    %v531 = vld [vmem:[#allocation5 + $0xc8] sm:$0xff]
    %v532 = vld [vmem:[#allocation5 + $0xd0] sm:$0xff]
    %v533 = vld [vmem:[#allocation5 + $0xd8] sm:$0xff]
    %v534 = vld [vmem:[#allocation5 + $0xe0] sm:$0xff]
    %v535 = vld [vmem:[#allocation5 + $0xe8] sm:$0xff]
    %v536 = vld [vmem:[#allocation5 + $0xf0] sm:$0xff]
    %v537 = vld [vmem:[#allocation5 + $0xf8] sm:$0xff]
    %v538 = vld [vmem:[#allocation5 + $0x100] sm:$0xff]
    %v539 = vld [vmem:[#allocation5 + $0x108] sm:$0xff]
    %v540 = vld [vmem:[#allocation5 + $0x110] sm:$0xff]
    %v541 = vld [vmem:[#allocation5 + $0x118] sm:$0xff]
    %v542 = vld [vmem:[#allocation5 + $0x120] sm:$0xff]
    %v543 = vld [vmem:[#allocation5 + $0x128] sm:$0xff]
    %v544 = vld [vmem:[#allocation5 + $0x130] sm:$0xff]
    %v545 = vld [vmem:[#allocation5 + $0x138] sm:$0xff]
    %v546 = vld [vmem:[#allocation5 + $0x140] sm:$0xff]
    %v547 = vld [vmem:[#allocation5 + $0x148] sm:$0xff]
    %v548 = vld [vmem:[#allocation5 + $0x150] sm:$0xff]
    %v549 = vld [vmem:[#allocation5 + $0x158] sm:$0xff]
    %v550 = vld [vmem:[#allocation5 + $0x160] sm:$0xff]
    %v551 = vld [vmem:[#allocation5 + $0x168] sm:$0xff]
    %v552 = vld [vmem:[#allocation5 + $0x170] sm:$0xff]
    %v553 = vld [vmem:[#allocation5 + $0x178] sm:$0xff]
    %v554 = vld [vmem:[#allocation5 + $0x180] sm:$0xff]
    %v555 = vld [vmem:[#allocation5 + $0x188] sm:$0xff]
    %v556 = vld [vmem:[#allocation5 + $0x190] sm:$0xff]
    %v557 = vld [vmem:[#allocation5 + $0x198] sm:$0xff]
    %v558 = vld [vmem:[#allocation5 + $0x1a0] sm:$0xff]
    %v559 = vld [vmem:[#allocation5 + $0x1a8] sm:$0xff]
    %v560 = vld [vmem:[#allocation5 + $0x1b0] sm:$0xff]
    %v561 = vld [vmem:[#allocation5 + $0x1b8] sm:$0xff]
    %v562 = vld [vmem:[#allocation5 + $0x1c0] sm:$0xff]
    %v563 = vld [vmem:[#allocation5 + $0x1c8] sm:$0xff]
    %v564 = vld [vmem:[#allocation5 + $0x1d0] sm:$0xff]
    %v565 = vld [vmem:[#allocation5 + $0x1d8] sm:$0xff]
    %v566 = vld [vmem:[#allocation5 + $0x1e0] sm:$0xff]
    %v567 = vld [vmem:[#allocation5 + $0x1e8] sm:$0xff]
    %v568 = vld [vmem:[#allocation5 + $0x1f0] sm:$0xff]
    %v569 = vld [vmem:[#allocation5 + $0x1f8] sm:$0xff]
    %570 = vmatprep.subr.mxu0 %v507
    %571 = vmatpush1.msra.mxu0 %v506
    %572 = vmatprep.subr.mxu0 %v511
    %573 = vmatpush1.msra.mxu0 %v510
    %574 = vmatprep.subr.mxu0 %v515
    %575 = vmatpush1.msra.mxu0 %v514
    %576 = vmatprep.subr.mxu0 %v519
    %577 = vmatpush1.msra.mxu0 %v518
    %578 = vmatprep.subr.mxu0 %v523
    %579 = vmatpush1.msra.mxu0 %v522
    %580 = vmatprep.subr.mxu0 %v527
    %581 = vmatpush1.msra.mxu0 %v526
    %582 = vmatprep.subr.mxu0 %v531
    %583 = vmatpush1.msra.mxu0 %v530
    %584 = vmatprep.subr.mxu0 %v535
    %585 = vmatpush1.msra.mxu0 %v534
    %586 = vmatprep.subr.mxu0 %v539
    %587 = vmatpush1.msra.mxu0 %v538
    %588 = vmatprep.subr.mxu0 %v543
    %589 = vmatpush1.msra.mxu0 %v542
    %590 = vmatprep.subr.mxu0 %v547
    %591 = vmatpush1.msra.mxu0 %v546
    %592 = vmatprep.subr.mxu0 %v551
    %593 = vmatpush1.msra.mxu0 %v550
    %594 = vmatprep.subr.mxu0 %v555
    %595 = vmatpush1.msra.mxu0 %v554
    %596 = vmatprep.subr.mxu0 %v559
    %597 = vmatpush1.msra.mxu0 %v558
    %598 = vmatprep.subr.mxu0 %v563
    %599 = vmatpush1.msra.mxu0 %v562
    %600 = vmatprep.subr.mxu0 %v567
    %601 = vmatpush1.msra.mxu0 %v566
    %602 = vmatprep.subr.mxu0 0.0
    %603 = vmatpush1.msra.mxu0 0.0
    %604 = vmatprep.subr.mxu0 0.0
    %605 = vmatpush1.msra.mxu0 0.0
    %606 = vmatprep.subr.mxu0 0.0
    %607 = vmatpush1.msra.mxu0 0.0
    %608 = vmatprep.subr.mxu0 0.0
    %609 = vmatpush1.msra.mxu0 0.0
    %610 = vmatprep.subr.mxu0 0.0
    %611 = vmatpush1.msra.mxu0 0.0
    %612 = vmatprep.subr.mxu0 0.0
    %613 = vmatpush1.msra.mxu0 0.0
    %614 = vmatprep.subr.mxu0 0.0
    %615 = vmatpush1.msra.mxu0 0.0
    %616 = vmatprep.subr.mxu0 0.0
    %617 = vmatpush1.msra.mxu0 0.0
    %618 = vmatprep.subr.mxu0 0.0
    %619 = vmatpush1.msra.mxu0 0.0
    %620 = vmatprep.subr.mxu0 0.0
    %621 = vmatpush1.msra.mxu0 0.0
    %622 = vmatprep.subr.mxu0 0.0
    %623 = vmatpush1.msra.mxu0 0.0
    %624 = vmatprep.subr.mxu0 0.0
    %625 = vmatpush1.msra.mxu0 0.0
    %626 = vmatprep.subr.mxu0 0.0
    %627 = vmatpush1.msra.mxu0 0.0
    %628 = vmatprep.subr.mxu0 0.0
    %629 = vmatpush1.msra.mxu0 0.0
    %630 = vmatprep.subr.mxu0 0.0
    %631 = vmatpush1.msra.mxu0 0.0
    %632 = vmatprep.subr.mxu0 0.0
    %633 = vmatpush1.msra.mxu0 0.0
    %634 = vmatprep.mubr.f32.mxu0 0.0
    %635 = vmatmul.mubr.f32.gmra.mrb[0].mxu0 0.0
    %v636 = vpop.f32.mrb[0].mxu0
    %v637 = vadd.f32 0.0, %v636
    %v638 = vpop.f32.mrb[0].mxu0
    %v639 = vadd.f32 0.0, %v638
    %640 = vdwg.mxu0
    %641 = vmatprep.subr.mxu0 %v509
    %642 = vmatpush1.msra.mxu0 %v508
    %643 = vmatprep.subr.mxu0 %v513
    %644 = vmatpush1.msra.mxu0 %v512
    %645 = vmatprep.subr.mxu0 %v517
    %646 = vmatpush1.msra.mxu0 %v516
    %647 = vmatprep.subr.mxu0 %v521
    %648 = vmatpush1.msra.mxu0 %v520
    %649 = vmatprep.subr.mxu0 %v525
    %650 = vmatpush1.msra.mxu0 %v524
    %651 = vmatprep.subr.mxu0 %v529
    %652 = vmatpush1.msra.mxu0 %v528
    %653 = vmatprep.subr.mxu0 %v533
    %654 = vmatpush1.msra.mxu0 %v532
    %655 = vmatprep.subr.mxu0 %v537
    %656 = vmatpush1.msra.mxu0 %v536
    %657 = vmatprep.subr.mxu0 %v541
    %658 = vmatpush1.msra.mxu0 %v540
    %659 = vmatprep.subr.mxu0 %v545
    %660 = vmatpush1.msra.mxu0 %v544
    %661 = vmatprep.subr.mxu0 %v549
    %662 = vmatpush1.msra.mxu0 %v548
    %663 = vmatprep.subr.mxu0 %v553
    %664 = vmatpush1.msra.mxu0 %v552
    %665 = vmatprep.subr.mxu0 %v557
    %666 = vmatpush1.msra.mxu0 %v556
    %667 = vmatprep.subr.mxu0 %v561
    %668 = vmatpush1.msra.mxu0 %v560
    %669 = vmatprep.subr.mxu0 %v565
    %670 = vmatpush1.msra.mxu0 %v564
    %671 = vmatprep.subr.mxu0 %v569
    %672 = vmatpush1.msra.mxu0 %v568
    %673 = vmatprep.subr.mxu0 0.0
    %674 = vmatpush1.msra.mxu0 0.0
    %675 = vmatprep.subr.mxu0 0.0
    %676 = vmatpush1.msra.mxu0 0.0
    %677 = vmatprep.subr.mxu0 0.0
    %678 = vmatpush1.msra.mxu0 0.0
    %679 = vmatprep.subr.mxu0 0.0
    %680 = vmatpush1.msra.mxu0 0.0
    %681 = vmatprep.subr.mxu0 0.0
    %682 = vmatpush1.msra.mxu0 0.0
    %683 = vmatprep.subr.mxu0 0.0
    %684 = vmatpush1.msra.mxu0 0.0
    %685 = vmatprep.subr.mxu0 0.0
    %686 = vmatpush1.msra.mxu0 0.0
    %687 = vmatprep.subr.mxu0 0.0
    %688 = vmatpush1.msra.mxu0 0.0
    %689 = vmatprep.subr.mxu0 0.0
    %690 = vmatpush1.msra.mxu0 0.0
    %691 = vmatprep.subr.mxu0 0.0
    %692 = vmatpush1.msra.mxu0 0.0
    %693 = vmatprep.subr.mxu0 0.0
    %694 = vmatpush1.msra.mxu0 0.0
    %695 = vmatprep.subr.mxu0 0.0
    %696 = vmatpush1.msra.mxu0 0.0
    %697 = vmatprep.subr.mxu0 0.0
    %698 = vmatpush1.msra.mxu0 0.0
    %699 = vmatprep.subr.mxu0 0.0
    %700 = vmatpush1.msra.mxu0 0.0
    %701 = vmatprep.subr.mxu0 0.0
    %702 = vmatpush1.msra.mxu0 0.0
    %703 = vmatprep.subr.mxu0 0.0
    %704 = vmatpush1.msra.mxu0 0.0
    %705 = vmatprep.mubr.f32.mxu0 0.0
    %706 = vmatmul.mubr.f32.gmra.mrb[0].mxu0 0.0
    %v707 = vpop.f32.mrb[0].mxu0
    %v708 = vadd.f32 0.0, %v707
    %v709 = vpop.f32.mrb[0].mxu0
    %v710 = vadd.f32 0.0, %v709
    %711 = vdwg.mxu0
    %v712 = vadd.f32 %v502, %v637
    %v713 = vadd.f32 %v503, %v639
    %v714 = vadd.f32 %v504, %v708
    %v715 = vadd.f32 %v505, %v710
    %v716 = vxor.u32 %v712, 2147483648
    %v717 = vmul.f32 %v716, 1.442695
    %v718 = vpow.pop %v717
    %v719 = vadd.f32 %v718, 1.0
    %v720 = vrcp.pop %v719
    %v721 = vmul.f32 1.0, %v720
    %v722 = vxor.u32 %v713, 2147483648
    %v723 = vmul.f32 %v722, 1.442695
    %v724 = vpow.pop %v723
    %v725 = vadd.f32 %v724, 1.0
    %v726 = vrcp.pop %v725
    %v727 = vmul.f32 1.0, %v726
    %v728 = vtanh.pop %v714
    %v729 = vxor.u32 %v715, 2147483648
    %v730 = vmul.f32 %v729, 1.442695
    %v731 = vpow.pop %v730
    %v732 = vadd.f32 %v731, 1.0
    %v733 = vrcp.pop %v732
    %v734 = vmul.f32 1.0, %v733
    %v735 = vmul.f32 %v727, 0.0
    %v736 = vmul.f32 %v721, %v728
    %v737 = vadd.f32 %v735, %v736
    %v738 = vtanh.pop %v737
    %v739 = vmul.f32 %v734, %v738
    %v740 = vld [vmem:[#allocation7] sm:$0xff]
    %v741 = vld [vmem:[#allocation7 + $0x8] sm:$0xff]
    %v742 = vld [vmem:[#allocation7 + $0x10] sm:$0xff]
    %v743 = vld [vmem:[#allocation7 + $0x18] sm:$0xff]
    %v744 = vld [vmem:[#allocation7 + $0x20] sm:$0xff]
    %v745 = vld [vmem:[#allocation7 + $0x28] sm:$0xff]
    %v746 = vld [vmem:[#allocation7 + $0x30] sm:$0xff]
    %v747 = vld [vmem:[#allocation7 + $0x38] sm:$0xff]
    %v748 = vld [vmem:[#allocation7 + $0x40] sm:$0xff]
    %v749 = vld [vmem:[#allocation7 + $0x48] sm:$0xff]
    %v750 = vld [vmem:[#allocation7 + $0x50] sm:$0xff]
    %v751 = vld [vmem:[#allocation7 + $0x58] sm:$0xff]
    %v752 = vld [vmem:[#allocation7 + $0x60] sm:$0xff]
    %v753 = vld [vmem:[#allocation7 + $0x68] sm:$0xff]
    %v754 = vld [vmem:[#allocation7 + $0x70] sm:$0xff]
    %v755 = vld [vmem:[#allocation7 + $0x78] sm:$0xff]
    %v756 = vld [vmem:[#allocation7 + $0x80] sm:$0xff]
    %v757 = vld [vmem:[#allocation7 + $0x88] sm:$0xff]
    %v758 = vld [vmem:[#allocation7 + $0x90] sm:$0xff]
    %v759 = vld [vmem:[#allocation7 + $0x98] sm:$0xff]
    %v760 = vld [vmem:[#allocation7 + $0xa0] sm:$0xff]
    %v761 = vld [vmem:[#allocation7 + $0xa8] sm:$0xff]
    %v762 = vld [vmem:[#allocation7 + $0xb0] sm:$0xff]
    %v763 = vld [vmem:[#allocation7 + $0xb8] sm:$0xff]
    %v764 = vld [vmem:[#allocation7 + $0xc0] sm:$0xff]
    %v765 = vld [vmem:[#allocation7 + $0xc8] sm:$0xff]
    %v766 = vld [vmem:[#allocation7 + $0xd0] sm:$0xff]
    %v767 = vld [vmem:[#allocation7 + $0xd8] sm:$0xff]
    %v768 = vld [vmem:[#allocation7 + $0xe0] sm:$0xff]
    %v769 = vld [vmem:[#allocation7 + $0xe8] sm:$0xff]
    %v770 = vld [vmem:[#allocation7 + $0xf0] sm:$0xff]
    %v771 = vld [vmem:[#allocation7 + $0xf8] sm:$0xff]
    %v772 = vld [vmem:[#allocation7 + $0x100] sm:$0xff]
    %v773 = vld [vmem:[#allocation7 + $0x108] sm:$0xff]
    %v774 = vld [vmem:[#allocation7 + $0x110] sm:$0xff]
    %v775 = vld [vmem:[#allocation7 + $0x118] sm:$0xff]
    %v776 = vld [vmem:[#allocation7 + $0x120] sm:$0xff]
    %v777 = vld [vmem:[#allocation7 + $0x128] sm:$0xff]
    %v778 = vld [vmem:[#allocation7 + $0x130] sm:$0xff]
    %v779 = vld [vmem:[#allocation7 + $0x138] sm:$0xff]
    %v780 = vld [vmem:[#allocation7 + $0x140] sm:$0xff]
    %v781 = vld [vmem:[#allocation7 + $0x148] sm:$0xff]
    %v782 = vld [vmem:[#allocation7 + $0x150] sm:$0xff]
    %v783 = vld [vmem:[#allocation7 + $0x158] sm:$0xff]
    %v784 = vld [vmem:[#allocation7 + $0x160] sm:$0xff]
    %v785 = vld [vmem:[#allocation7 + $0x168] sm:$0xff]
    %v786 = vld [vmem:[#allocation7 + $0x170] sm:$0xff]
    %v787 = vld [vmem:[#allocation7 + $0x178] sm:$0xff]
    %v788 = vld [vmem:[#allocation7 + $0x180] sm:$0xff]
    %v789 = vld [vmem:[#allocation7 + $0x188] sm:$0xff]
    %v790 = vld [vmem:[#allocation7 + $0x190] sm:$0xff]
    %v791 = vld [vmem:[#allocation7 + $0x198] sm:$0xff]
    %v792 = vld [vmem:[#allocation7 + $0x1a0] sm:$0xff]
    %v793 = vld [vmem:[#allocation7 + $0x1a8] sm:$0xff]
    %v794 = vld [vmem:[#allocation7 + $0x1b0] sm:$0xff]
    %v795 = vld [vmem:[#allocation7 + $0x1b8] sm:$0xff]
    %v796 = vld [vmem:[#allocation7 + $0x1c0] sm:$0xff]
    %v797 = vld [vmem:[#allocation7 + $0x1c8] sm:$0xff]
    %v798 = vld [vmem:[#allocation7 + $0x1d0] sm:$0xff]
    %v799 = vld [vmem:[#allocation7 + $0x1d8] sm:$0xff]
    %v800 = vld [vmem:[#allocation7 + $0x1e0] sm:$0xff]
    %v801 = vld [vmem:[#allocation7 + $0x1e8] sm:$0xff]
    %v802 = vld [vmem:[#allocation7 + $0x1f0] sm:$0xff]
    %v803 = vld [vmem:[#allocation7 + $0x1f8] sm:$0xff]
    %v804 = vld [vmem:[#allocation7 + $0x200] sm:$0xff]
    %v805 = vld [vmem:[#allocation7 + $0x208] sm:$0xff]
    %v806 = vld [vmem:[#allocation7 + $0x210] sm:$0xff]
    %v807 = vld [vmem:[#allocation7 + $0x218] sm:$0xff]
    %v808 = vld [vmem:[#allocation7 + $0x220] sm:$0xff]
    %v809 = vld [vmem:[#allocation7 + $0x228] sm:$0xff]
    %v810 = vld [vmem:[#allocation7 + $0x230] sm:$0xff]
    %v811 = vld [vmem:[#allocation7 + $0x238] sm:$0xff]
    %v812 = vld [vmem:[#allocation7 + $0x240] sm:$0xff]
    %v813 = vld [vmem:[#allocation7 + $0x248] sm:$0xff]
    %v814 = vld [vmem:[#allocation7 + $0x250] sm:$0xff]
    %v815 = vld [vmem:[#allocation7 + $0x258] sm:$0xff]
    %v816 = vld [vmem:[#allocation7 + $0x260] sm:$0xff]
    %v817 = vld [vmem:[#allocation7 + $0x268] sm:$0xff]
    %v818 = vld [vmem:[#allocation7 + $0x270] sm:$0xff]
    %v819 = vld [vmem:[#allocation7 + $0x278] sm:$0xff]
    %v820 = vld [vmem:[#allocation7 + $0x280] sm:$0xff]
    %v821 = vld [vmem:[#allocation7 + $0x288] sm:$0xff]
    %v822 = vld [vmem:[#allocation7 + $0x290] sm:$0xff]
    %v823 = vld [vmem:[#allocation7 + $0x298] sm:$0xff]
    %v824 = vld [vmem:[#allocation7 + $0x2a0] sm:$0xff]
    %v825 = vld [vmem:[#allocation7 + $0x2a8] sm:$0xff]
    %v826 = vld [vmem:[#allocation7 + $0x2b0] sm:$0xff]
    %v827 = vld [vmem:[#allocation7 + $0x2b8] sm:$0xff]
    %v828 = vld [vmem:[#allocation7 + $0x2c0] sm:$0xff]
    %v829 = vld [vmem:[#allocation7 + $0x2c8] sm:$0xff]
    %v830 = vld [vmem:[#allocation7 + $0x2d0] sm:$0xff]
    %v831 = vld [vmem:[#allocation7 + $0x2d8] sm:$0xff]
    %v832 = vld [vmem:[#allocation7 + $0x2e0] sm:$0xff]
    %v833 = vld [vmem:[#allocation7 + $0x2e8] sm:$0xff]
    %v834 = vld [vmem:[#allocation7 + $0x2f0] sm:$0xff]
    %v835 = vld [vmem:[#allocation7 + $0x2f8] sm:$0xff]
    %v836 = vld [vmem:[#allocation7 + $0x300] sm:$0xff]
    %v837 = vld [vmem:[#allocation7 + $0x308] sm:$0xff]
    %v838 = vld [vmem:[#allocation7 + $0x310] sm:$0xff]
    %v839 = vld [vmem:[#allocation7 + $0x318] sm:$0xff]
    %v840 = vld [vmem:[#allocation7 + $0x320] sm:$0xff]
    %v841 = vld [vmem:[#allocation7 + $0x328] sm:$0xff]
    %v842 = vld [vmem:[#allocation7 + $0x330] sm:$0xff]
    %v843 = vld [vmem:[#allocation7 + $0x338] sm:$0xff]
    %v844 = vld [vmem:[#allocation7 + $0x340] sm:$0xff]
    %v845 = vld [vmem:[#allocation7 + $0x348] sm:$0xff]
    %v846 = vld [vmem:[#allocation7 + $0x350] sm:$0xff]
    %v847 = vld [vmem:[#allocation7 + $0x358] sm:$0xff]
    %v848 = vld [vmem:[#allocation7 + $0x360] sm:$0xff]
    %v849 = vld [vmem:[#allocation7 + $0x368] sm:$0xff]
    %v850 = vld [vmem:[#allocation7 + $0x370] sm:$0xff]
    %v851 = vld [vmem:[#allocation7 + $0x378] sm:$0xff]
    %v852 = vld [vmem:[#allocation7 + $0x380] sm:$0xff]
    %v853 = vld [vmem:[#allocation7 + $0x388] sm:$0xff]
    %v854 = vld [vmem:[#allocation7 + $0x390] sm:$0xff]
    %v855 = vld [vmem:[#allocation7 + $0x398] sm:$0xff]
    %v856 = vld [vmem:[#allocation7 + $0x3a0] sm:$0xff]
    %v857 = vld [vmem:[#allocation7 + $0x3a8] sm:$0xff]
    %v858 = vld [vmem:[#allocation7 + $0x3b0] sm:$0xff]
    %v859 = vld [vmem:[#allocation7 + $0x3b8] sm:$0xff]
    %v860 = vld [vmem:[#allocation7 + $0x3c0] sm:$0xff]
    %v861 = vld [vmem:[#allocation7 + $0x3c8] sm:$0xff]
    %v862 = vld [vmem:[#allocation7 + $0x3d0] sm:$0xff]
    %v863 = vld [vmem:[#allocation7 + $0x3d8] sm:$0xff]
    %v864 = vld [vmem:[#allocation7 + $0x3e0] sm:$0xff]
    %v865 = vld [vmem:[#allocation7 + $0x3e8] sm:$0xff]
    %v866 = vld [vmem:[#allocation7 + $0x3f0] sm:$0xff]
    %v867 = vld [vmem:[#allocation7 + $0x3f8] sm:$0xff]
    %868 = vmatprep.subr.mxu0 %v741
    %869 = vmatpush1.msra.mxu0 %v740
    %870 = vmatprep.subr.mxu0 %v745
    %871 = vmatpush1.msra.mxu0 %v744
    %872 = vmatprep.subr.mxu0 %v749
    %873 = vmatpush1.msra.mxu0 %v748
    %874 = vmatprep.subr.mxu0 %v753
    %875 = vmatpush1.msra.mxu0 %v752
    %876 = vmatprep.subr.mxu0 %v757
    %877 = vmatpush1.msra.mxu0 %v756
    %878 = vmatprep.subr.mxu0 %v761
    %879 = vmatpush1.msra.mxu0 %v760
    %880 = vmatprep.subr.mxu0 %v765
    %881 = vmatpush1.msra.mxu0 %v764
    %882 = vmatprep.subr.mxu0 %v769
    %883 = vmatpush1.msra.mxu0 %v768
    %884 = vmatprep.subr.mxu0 %v773
    %885 = vmatpush1.msra.mxu0 %v772
    %886 = vmatprep.subr.mxu0 %v777
    %887 = vmatpush1.msra.mxu0 %v776
    %888 = vmatprep.subr.mxu0 %v781
    %889 = vmatpush1.msra.mxu0 %v780
    %890 = vmatprep.subr.mxu0 %v785
    %891 = vmatpush1.msra.mxu0 %v784
    %892 = vmatprep.subr.mxu0 %v789
    %893 = vmatpush1.msra.mxu0 %v788
    %894 = vmatprep.subr.mxu0 %v793
    %895 = vmatpush1.msra.mxu0 %v792
    %896 = vmatprep.subr.mxu0 %v797
    %897 = vmatpush1.msra.mxu0 %v796
    %898 = vmatprep.subr.mxu0 %v801
    %899 = vmatpush1.msra.mxu0 %v800
    %900 = vmatprep.subr.mxu0 %v805
    %901 = vmatpush1.msra.mxu0 %v804
    %902 = vmatprep.subr.mxu0 %v809
    %903 = vmatpush1.msra.mxu0 %v808
    %904 = vmatprep.subr.mxu0 %v813
    %905 = vmatpush1.msra.mxu0 %v812
    %906 = vmatprep.subr.mxu0 %v817
    %907 = vmatpush1.msra.mxu0 %v816
    %908 = vmatprep.subr.mxu0 %v821
    %909 = vmatpush1.msra.mxu0 %v820
    %910 = vmatprep.subr.mxu0 %v825
    %911 = vmatpush1.msra.mxu0 %v824
    %912 = vmatprep.subr.mxu0 %v829
    %913 = vmatpush1.msra.mxu0 %v828
    %914 = vmatprep.subr.mxu0 %v833
    %915 = vmatpush1.msra.mxu0 %v832
    %916 = vmatprep.subr.mxu0 %v837
    %917 = vmatpush1.msra.mxu0 %v836
    %918 = vmatprep.subr.mxu0 %v841
    %919 = vmatpush1.msra.mxu0 %v840
    %920 = vmatprep.subr.mxu0 %v845
    %921 = vmatpush1.msra.mxu0 %v844
    %922 = vmatprep.subr.mxu0 %v849
    %923 = vmatpush1.msra.mxu0 %v848
    %924 = vmatprep.subr.mxu0 %v853
    %925 = vmatpush1.msra.mxu0 %v852
    %926 = vmatprep.subr.mxu0 %v857
    %927 = vmatpush1.msra.mxu0 %v856
    %928 = vmatprep.subr.mxu0 %v861
    %929 = vmatpush1.msra.mxu0 %v860
    %930 = vmatprep.subr.mxu0 %v865
    %931 = vmatpush1.msra.mxu0 %v864
    %932 = vmatprep.mubr.f32.mxu0 0.0
    %933 = vmatmul.mubr.f32.gmra.mrb[0].mxu0 %v739
    %v934 = vpop.f32.mrb[0].mxu0
    %v935 = vadd.f32 %v485, %v934
    %v936 = vpop.f32.mrb[0].mxu0
    %v937 = vadd.f32 %v489, %v936
    %938 = vdwg.mxu0
    %939 = vmatprep.subr.mxu0 %v743
    %940 = vmatpush1.msra.mxu0 %v742
    %941 = vmatprep.subr.mxu0 %v747
    %942 = vmatpush1.msra.mxu0 %v746
    %943 = vmatprep.subr.mxu0 %v751
    %944 = vmatpush1.msra.mxu0 %v750
    %945 = vmatprep.subr.mxu0 %v755
    %946 = vmatpush1.msra.mxu0 %v754
    %947 = vmatprep.subr.mxu0 %v759
    %948 = vmatpush1.msra.mxu0 %v758
    %949 = vmatprep.subr.mxu0 %v763
    %950 = vmatpush1.msra.mxu0 %v762
    %951 = vmatprep.subr.mxu0 %v767
    %952 = vmatpush1.msra.mxu0 %v766
    %953 = vmatprep.subr.mxu0 %v771
    %954 = vmatpush1.msra.mxu0 %v770
    %955 = vmatprep.subr.mxu0 %v775
    %956 = vmatpush1.msra.mxu0 %v774
    %957 = vmatprep.subr.mxu0 %v779
    %958 = vmatpush1.msra.mxu0 %v778
    %959 = vmatprep.subr.mxu0 %v783
    %960 = vmatpush1.msra.mxu0 %v782
    %961 = vmatprep.subr.mxu0 %v787
    %962 = vmatpush1.msra.mxu0 %v786
    %963 = vmatprep.subr.mxu0 %v791
    %964 = vmatpush1.msra.mxu0 %v790
    %965 = vmatprep.subr.mxu0 %v795
    %966 = vmatpush1.msra.mxu0 %v794
    %967 = vmatprep.subr.mxu0 %v799
    %968 = vmatpush1.msra.mxu0 %v798
    %969 = vmatprep.subr.mxu0 %v803
    %970 = vmatpush1.msra.mxu0 %v802
    %971 = vmatprep.subr.mxu0 %v807
    %972 = vmatpush1.msra.mxu0 %v806
    %973 = vmatprep.subr.mxu0 %v811
    %974 = vmatpush1.msra.mxu0 %v810
    %975 = vmatprep.subr.mxu0 %v815
    %976 = vmatpush1.msra.mxu0 %v814
    %977 = vmatprep.subr.mxu0 %v819
    %978 = vmatpush1.msra.mxu0 %v818
    %979 = vmatprep.subr.mxu0 %v823
    %980 = vmatpush1.msra.mxu0 %v822
    %981 = vmatprep.subr.mxu0 %v827
    %982 = vmatpush1.msra.mxu0 %v826
    %983 = vmatprep.subr.mxu0 %v831
    %984 = vmatpush1.msra.mxu0 %v830
    %985 = vmatprep.subr.mxu0 %v835
    %986 = vmatpush1.msra.mxu0 %v834
    %987 = vmatprep.subr.mxu0 %v839
    %988 = vmatpush1.msra.mxu0 %v838
    %989 = vmatprep.subr.mxu0 %v843
    %990 = vmatpush1.msra.mxu0 %v842
    %991 = vmatprep.subr.mxu0 %v847
    %992 = vmatpush1.msra.mxu0 %v846
    %993 = vmatprep.subr.mxu0 %v851
    %994 = vmatpush1.msra.mxu0 %v850
    %995 = vmatprep.subr.mxu0 %v855
    %996 = vmatpush1.msra.mxu0 %v854
    %997 = vmatprep.subr.mxu0 %v859
    %998 = vmatpush1.msra.mxu0 %v858
    %999 = vmatprep.subr.mxu0 %v863
    %1000 = vmatpush1.msra.mxu0 %v862
    %1001 = vmatprep.subr.mxu0 %v867
    %1002 = vmatpush1.msra.mxu0 %v866
    %1003 = vmatprep.mubr.f32.mxu0 0.0
    %1004 = vmatmul.mubr.f32.gmra.mrb[0].mxu0 %v739
    %v1005 = vpop.f32.mrb[0].mxu0
    %v1006 = vadd.f32 %v493, %v1005
    %v1007 = vpop.f32.mrb[0].mxu0
    %v1008 = vadd.f32 %v497, %v1007
    %1009 = vdwg.mxu0
    %v1010 = vxor.u32 %v935, 2147483648
    %v1011 = vmul.f32 %v1010, 1.442695
    %v1012 = vpow.pop %v1011
    %v1013 = vadd.f32 %v1012, 1.0
    %v1014 = vrcp.pop %v1013
    %v1015 = vmul.f32 1.0, %v1014
    %v1016 = vxor.u32 %v937, 2147483648
    %v1017 = vmul.f32 %v1016, 1.442695
    %v1018 = vpow.pop %v1017
    %v1019 = vadd.f32 %v1018, 1.0
    %v1020 = vrcp.pop %v1019
    %v1021 = vmul.f32 1.0, %v1020
    %v1022 = vtanh.pop %v1006
    %v1023 = vxor.u32 %v1008, 2147483648
    %v1024 = vmul.f32 %v1023, 1.442695
    %v1025 = vpow.pop %v1024
    %v1026 = vadd.f32 %v1025, 1.0
    %v1027 = vrcp.pop %v1026
    %v1028 = vmul.f32 1.0, %v1027
    %v1029 = vmul.f32 %v1021, 0.0
    %v1030 = vmul.f32 %v1015, %v1022
    %v1031 = vadd.f32 %v1029, %v1030
    %v1032 = vtanh.pop %v1031
    %v1033 = vmul.f32 %v1028, %v1032
    %v1034 = vld [vmem:[#allocation2 + $0x20] sm:$0xff]
    %v1035 = vld [vmem:[#allocation2 + $0x28] sm:$0xff]
    %v1036 = vld [vmem:[#allocation2 + $0x30] sm:$0xff]
    %v1037 = vld [vmem:[#allocation2 + $0x38] sm:$0xff]
    %1038 = vmatprep.subr.mxu0 %v507
    %1039 = vmatpush1.msra.mxu0 %v506
    %1040 = vmatprep.subr.mxu0 %v511
    %1041 = vmatpush1.msra.mxu0 %v510
    %1042 = vmatprep.subr.mxu0 %v515
    %1043 = vmatpush1.msra.mxu0 %v514
    %1044 = vmatprep.subr.mxu0 %v519
    %1045 = vmatpush1.msra.mxu0 %v518
    %1046 = vmatprep.subr.mxu0 %v523
    %1047 = vmatpush1.msra.mxu0 %v522
    %1048 = vmatprep.subr.mxu0 %v527
    %1049 = vmatpush1.msra.mxu0 %v526
    %1050 = vmatprep.subr.mxu0 %v531
    %1051 = vmatpush1.msra.mxu0 %v530
    %1052 = vmatprep.subr.mxu0 %v535
    %1053 = vmatpush1.msra.mxu0 %v534
    %1054 = vmatprep.subr.mxu0 %v539
    %1055 = vmatpush1.msra.mxu0 %v538
    %1056 = vmatprep.subr.mxu0 %v543
    %1057 = vmatpush1.msra.mxu0 %v542
    %1058 = vmatprep.subr.mxu0 %v547
    %1059 = vmatpush1.msra.mxu0 %v546
    %1060 = vmatprep.subr.mxu0 %v551
    %1061 = vmatpush1.msra.mxu0 %v550
    %1062 = vmatprep.subr.mxu0 %v555
    %1063 = vmatpush1.msra.mxu0 %v554
    %1064 = vmatprep.subr.mxu0 %v559
    %1065 = vmatpush1.msra.mxu0 %v558
    %1066 = vmatprep.subr.mxu0 %v563
    %1067 = vmatpush1.msra.mxu0 %v562
    %1068 = vmatprep.subr.mxu0 %v567
    %1069 = vmatpush1.msra.mxu0 %v566
    %1070 = vmatprep.subr.mxu0 0.0
    %1071 = vmatpush1.msra.mxu0 0.0
    %1072 = vmatprep.subr.mxu0 0.0
    %1073 = vmatpush1.msra.mxu0 0.0
    %1074 = vmatprep.subr.mxu0 0.0
    %1075 = vmatpush1.msra.mxu0 0.0
    %1076 = vmatprep.subr.mxu0 0.0
    %1077 = vmatpush1.msra.mxu0 0.0
    %1078 = vmatprep.subr.mxu0 0.0
    %1079 = vmatpush1.msra.mxu0 0.0
    %1080 = vmatprep.subr.mxu0 0.0
    %1081 = vmatpush1.msra.mxu0 0.0
    %1082 = vmatprep.subr.mxu0 0.0
    %1083 = vmatpush1.msra.mxu0 0.0
    %1084 = vmatprep.subr.mxu0 0.0
    %1085 = vmatpush1.msra.mxu0 0.0
    %1086 = vmatprep.subr.mxu0 0.0
    %1087 = vmatpush1.msra.mxu0 0.0
    %1088 = vmatprep.subr.mxu0 0.0
    %1089 = vmatpush1.msra.mxu0 0.0
    %1090 = vmatprep.subr.mxu0 0.0
    %1091 = vmatpush1.msra.mxu0 0.0
    %1092 = vmatprep.subr.mxu0 0.0
    %1093 = vmatpush1.msra.mxu0 0.0
    %1094 = vmatprep.subr.mxu0 0.0
    %1095 = vmatpush1.msra.mxu0 0.0
    %1096 = vmatprep.subr.mxu0 0.0
    %1097 = vmatpush1.msra.mxu0 0.0
    %1098 = vmatprep.subr.mxu0 0.0
    %1099 = vmatpush1.msra.mxu0 0.0
    %1100 = vmatprep.subr.mxu0 0.0
    %1101 = vmatpush1.msra.mxu0 0.0
    %1102 = vmatprep.mubr.f32.mxu0 0.0
    %1103 = vmatmul.mubr.f32.gmra.mrb[0].mxu0 %v739
    %v1104 = vpop.f32.mrb[0].mxu0
    %v1105 = vadd.f32 0.0, %v1104
    %v1106 = vpop.f32.mrb[0].mxu0
    %v1107 = vadd.f32 0.0, %v1106
    %1108 = vdwg.mxu0
    %1109 = vmatprep.subr.mxu0 %v509
    %1110 = vmatpush1.msra.mxu0 %v508
    %1111 = vmatprep.subr.mxu0 %v513
    %1112 = vmatpush1.msra.mxu0 %v512
    %1113 = vmatprep.subr.mxu0 %v517
    %1114 = vmatpush1.msra.mxu0 %v516
    %1115 = vmatprep.subr.mxu0 %v521
    %1116 = vmatpush1.msra.mxu0 %v520
    %1117 = vmatprep.subr.mxu0 %v525
    %1118 = vmatpush1.msra.mxu0 %v524
    %1119 = vmatprep.subr.mxu0 %v529
    %1120 = vmatpush1.msra.mxu0 %v528
    %1121 = vmatprep.subr.mxu0 %v533
    %1122 = vmatpush1.msra.mxu0 %v532
    %1123 = vmatprep.subr.mxu0 %v537
    %1124 = vmatpush1.msra.mxu0 %v536
    %1125 = vmatprep.subr.mxu0 %v541
    %1126 = vmatpush1.msra.mxu0 %v540
    %1127 = vmatprep.subr.mxu0 %v545
    %1128 = vmatpush1.msra.mxu0 %v544
    %1129 = vmatprep.subr.mxu0 %v549
    %1130 = vmatpush1.msra.mxu0 %v548
    %1131 = vmatprep.subr.mxu0 %v553
    %1132 = vmatpush1.msra.mxu0 %v552
    %1133 = vmatprep.subr.mxu0 %v557
    %1134 = vmatpush1.msra.mxu0 %v556
    %1135 = vmatprep.subr.mxu0 %v561
    %1136 = vmatpush1.msra.mxu0 %v560
    %1137 = vmatprep.subr.mxu0 %v565
    %1138 = vmatpush1.msra.mxu0 %v564
    %1139 = vmatprep.subr.mxu0 %v569
    %1140 = vmatpush1.msra.mxu0 %v568
    %1141 = vmatprep.subr.mxu0 0.0
    %1142 = vmatpush1.msra.mxu0 0.0
    %1143 = vmatprep.subr.mxu0 0.0
    %1144 = vmatpush1.msra.mxu0 0.0
    %1145 = vmatprep.subr.mxu0 0.0
    %1146 = vmatpush1.msra.mxu0 0.0
    %1147 = vmatprep.subr.mxu0 0.0
    %1148 = vmatpush1.msra.mxu0 0.0
    %1149 = vmatprep.subr.mxu0 0.0
    %1150 = vmatpush1.msra.mxu0 0.0
    %1151 = vmatprep.subr.mxu0 0.0
    %1152 = vmatpush1.msra.mxu0 0.0
    %1153 = vmatprep.subr.mxu0 0.0
    %1154 = vmatpush1.msra.mxu0 0.0
    %1155 = vmatprep.subr.mxu0 0.0
    %1156 = vmatpush1.msra.mxu0 0.0
    %1157 = vmatprep.subr.mxu0 0.0
    %1158 = vmatpush1.msra.mxu0 0.0
    %1159 = vmatprep.subr.mxu0 0.0
    %1160 = vmatpush1.msra.mxu0 0.0
    %1161 = vmatprep.subr.mxu0 0.0
    %1162 = vmatpush1.msra.mxu0 0.0
    %1163 = vmatprep.subr.mxu0 0.0
    %1164 = vmatpush1.msra.mxu0 0.0
    %1165 = vmatprep.subr.mxu0 0.0
    %1166 = vmatpush1.msra.mxu0 0.0
    %1167 = vmatprep.subr.mxu0 0.0
    %1168 = vmatpush1.msra.mxu0 0.0
    %1169 = vmatprep.subr.mxu0 0.0
    %1170 = vmatpush1.msra.mxu0 0.0
    %1171 = vmatprep.subr.mxu0 0.0
    %1172 = vmatpush1.msra.mxu0 0.0
    %1173 = vmatprep.mubr.f32.mxu0 0.0
    %1174 = vmatmul.mubr.f32.gmra.mrb[0].mxu0 %v739
    %v1175 = vpop.f32.mrb[0].mxu0
    %v1176 = vadd.f32 0.0, %v1175
    %v1177 = vpop.f32.mrb[0].mxu0
    %v1178 = vadd.f32 0.0, %v1177
    %1179 = vdwg.mxu0
    %v1180 = vadd.f32 %v1034, %v1105
    %v1181 = vadd.f32 %v1035, %v1107
    %v1182 = vadd.f32 %v1036, %v1176
    %v1183 = vadd.f32 %v1037, %v1178
    %v1184 = vxor.u32 %v1180, 2147483648
    %v1185 = vmul.f32 %v1184, 1.442695
    %v1186 = vpow.pop %v1185
    %v1187 = vadd.f32 %v1186, 1.0
    %v1188 = vrcp.pop %v1187
    %v1189 = vmul.f32 1.0, %v1188
    %v1190 = vxor.u32 %v1181, 2147483648
    %v1191 = vmul.f32 %v1190, 1.442695
    %v1192 = vpow.pop %v1191
    %v1193 = vadd.f32 %v1192, 1.0
    %v1194 = vrcp.pop %v1193
    %v1195 = vmul.f32 1.0, %v1194
    %v1196 = vtanh.pop %v1182
    %v1197 = vxor.u32 %v1183, 2147483648
    %v1198 = vmul.f32 %v1197, 1.442695
    %v1199 = vpow.pop %v1198
    %v1200 = vadd.f32 %v1199, 1.0
    %v1201 = vrcp.pop %v1200
    %v1202 = vmul.f32 1.0, %v1201
    %v1203 = vmul.f32 %v1195, %v737
    %v1204 = vmul.f32 %v1189, %v1196
    %v1205 = vadd.f32 %v1203, %v1204
    %v1206 = vtanh.pop %v1205
    %v1207 = vmul.f32 %v1202, %v1206
    %1208 = vmatprep.subr.mxu0 %v741
    %1209 = vmatpush1.msra.mxu0 %v740
    %1210 = vmatprep.subr.mxu0 %v745
    %1211 = vmatpush1.msra.mxu0 %v744
    %1212 = vmatprep.subr.mxu0 %v749
    %1213 = vmatpush1.msra.mxu0 %v748
    %1214 = vmatprep.subr.mxu0 %v753
    %1215 = vmatpush1.msra.mxu0 %v752
    %1216 = vmatprep.subr.mxu0 %v757
    %1217 = vmatpush1.msra.mxu0 %v756
    %1218 = vmatprep.subr.mxu0 %v761
    %1219 = vmatpush1.msra.mxu0 %v760
    %1220 = vmatprep.subr.mxu0 %v765
    %1221 = vmatpush1.msra.mxu0 %v764
    %1222 = vmatprep.subr.mxu0 %v769
    %1223 = vmatpush1.msra.mxu0 %v768
    %1224 = vmatprep.subr.mxu0 %v773
    %1225 = vmatpush1.msra.mxu0 %v772
    %1226 = vmatprep.subr.mxu0 %v777
    %1227 = vmatpush1.msra.mxu0 %v776
    %1228 = vmatprep.subr.mxu0 %v781
    %1229 = vmatpush1.msra.mxu0 %v780
    %1230 = vmatprep.subr.mxu0 %v785
    %1231 = vmatpush1.msra.mxu0 %v784
    %1232 = vmatprep.subr.mxu0 %v789
    %1233 = vmatpush1.msra.mxu0 %v788
    %1234 = vmatprep.subr.mxu0 %v793
    %1235 = vmatpush1.msra.mxu0 %v792
    %1236 = vmatprep.subr.mxu0 %v797
    %1237 = vmatpush1.msra.mxu0 %v796
    %1238 = vmatprep.subr.mxu0 %v801
    %1239 = vmatpush1.msra.mxu0 %v800
    %1240 = vmatprep.subr.mxu0 %v805
    %1241 = vmatpush1.msra.mxu0 %v804
    %1242 = vmatprep.subr.mxu0 %v809
    %1243 = vmatpush1.msra.mxu0 %v808
    %1244 = vmatprep.subr.mxu0 %v813
    %1245 = vmatpush1.msra.mxu0 %v812
    %1246 = vmatprep.subr.mxu0 %v817
    %1247 = vmatpush1.msra.mxu0 %v816
    %1248 = vmatprep.subr.mxu0 %v821
    %1249 = vmatpush1.msra.mxu0 %v820
    %1250 = vmatprep.subr.mxu0 %v825
    %1251 = vmatpush1.msra.mxu0 %v824
    %1252 = vmatprep.subr.mxu0 %v829
    %1253 = vmatpush1.msra.mxu0 %v828
    %1254 = vmatprep.subr.mxu0 %v833
    %1255 = vmatpush1.msra.mxu0 %v832
    %1256 = vmatprep.subr.mxu0 %v837
    %1257 = vmatpush1.msra.mxu0 %v836
    %1258 = vmatprep.subr.mxu0 %v841
    %1259 = vmatpush1.msra.mxu0 %v840
    %1260 = vmatprep.subr.mxu0 %v845
    %1261 = vmatpush1.msra.mxu0 %v844
    %1262 = vmatprep.subr.mxu0 %v849
    %1263 = vmatpush1.msra.mxu0 %v848
    %1264 = vmatprep.subr.mxu0 %v853
    %1265 = vmatpush1.msra.mxu0 %v852
    %1266 = vmatprep.subr.mxu0 %v857
    %1267 = vmatpush1.msra.mxu0 %v856
    %1268 = vmatprep.subr.mxu0 %v861
    %1269 = vmatpush1.msra.mxu0 %v860
    %1270 = vmatprep.subr.mxu0 %v865
    %1271 = vmatpush1.msra.mxu0 %v864
    %1272 = vmatprep.mubr.f32.mxu0 %v1033
    %1273 = vmatmul.mubr.f32.gmra.mrb[0].mxu0 %v1207
    %v1274 = vpop.f32.mrb[0].mxu0
    %v1275 = vadd.f32 %v485, %v1274
    %v1276 = vpop.f32.mrb[0].mxu0
    %v1277 = vadd.f32 %v489, %v1276
    %1278 = vdwg.mxu0
    %1279 = vmatprep.subr.mxu0 %v743
    %1280 = vmatpush1.msra.mxu0 %v742
    %1281 = vmatprep.subr.mxu0 %v747
    %1282 = vmatpush1.msra.mxu0 %v746
    %1283 = vmatprep.subr.mxu0 %v751
    %1284 = vmatpush1.msra.mxu0 %v750
    %1285 = vmatprep.subr.mxu0 %v755
    %1286 = vmatpush1.msra.mxu0 %v754
    %1287 = vmatprep.subr.mxu0 %v759
    %1288 = vmatpush1.msra.mxu0 %v758
    %1289 = vmatprep.subr.mxu0 %v763
    %1290 = vmatpush1.msra.mxu0 %v762
    %1291 = vmatprep.subr.mxu0 %v767
    %1292 = vmatpush1.msra.mxu0 %v766
    %1293 = vmatprep.subr.mxu0 %v771
    %1294 = vmatpush1.msra.mxu0 %v770
    %1295 = vmatprep.subr.mxu0 %v775
    %1296 = vmatpush1.msra.mxu0 %v774
    %1297 = vmatprep.subr.mxu0 %v779
    %1298 = vmatpush1.msra.mxu0 %v778
    %1299 = vmatprep.subr.mxu0 %v783
    %1300 = vmatpush1.msra.mxu0 %v782
    %1301 = vmatprep.subr.mxu0 %v787
    %1302 = vmatpush1.msra.mxu0 %v786
    %1303 = vmatprep.subr.mxu0 %v791
    %1304 = vmatpush1.msra.mxu0 %v790
    %1305 = vmatprep.subr.mxu0 %v795
    %1306 = vmatpush1.msra.mxu0 %v794
    %1307 = vmatprep.subr.mxu0 %v799
    %1308 = vmatpush1.msra.mxu0 %v798
    %1309 = vmatprep.subr.mxu0 %v803
    %1310 = vmatpush1.msra.mxu0 %v802
    %1311 = vmatprep.subr.mxu0 %v807
    %1312 = vmatpush1.msra.mxu0 %v806
    %1313 = vmatprep.subr.mxu0 %v811
    %1314 = vmatpush1.msra.mxu0 %v810
    %1315 = vmatprep.subr.mxu0 %v815
    %1316 = vmatpush1.msra.mxu0 %v814
    %1317 = vmatprep.subr.mxu0 %v819
    %1318 = vmatpush1.msra.mxu0 %v818
    %1319 = vmatprep.subr.mxu0 %v823
    %1320 = vmatpush1.msra.mxu0 %v822
    %1321 = vmatprep.subr.mxu0 %v827
    %1322 = vmatpush1.msra.mxu0 %v826
    %1323 = vmatprep.subr.mxu0 %v831
    %1324 = vmatpush1.msra.mxu0 %v830
    %1325 = vmatprep.subr.mxu0 %v835
    %1326 = vmatpush1.msra.mxu0 %v834
    %1327 = vmatprep.subr.mxu0 %v839
    %1328 = vmatpush1.msra.mxu0 %v838
    %1329 = vmatprep.subr.mxu0 %v843
    %1330 = vmatpush1.msra.mxu0 %v842
    %1331 = vmatprep.subr.mxu0 %v847
    %1332 = vmatpush1.msra.mxu0 %v846
    %1333 = vmatprep.subr.mxu0 %v851
    %1334 = vmatpush1.msra.mxu0 %v850
    %1335 = vmatprep.subr.mxu0 %v855
    %1336 = vmatpush1.msra.mxu0 %v854
    %1337 = vmatprep.subr.mxu0 %v859
    %1338 = vmatpush1.msra.mxu0 %v858
    %1339 = vmatprep.subr.mxu0 %v863
    %1340 = vmatpush1.msra.mxu0 %v862
    %1341 = vmatprep.subr.mxu0 %v867
    %1342 = vmatpush1.msra.mxu0 %v866
    %1343 = vmatprep.mubr.f32.mxu0 %v1033
    %1344 = vmatmul.mubr.f32.gmra.mrb[0].mxu0 %v1207
    %v1345 = vpop.f32.mrb[0].mxu0
    %v1346 = vadd.f32 %v493, %v1345
    %v1347 = vpop.f32.mrb[0].mxu0
    %v1348 = vadd.f32 %v497, %v1347
    %1349 = vdwg.mxu0
    %v1350 = vxor.u32 %v1275, 2147483648
    %v1351 = vmul.f32 %v1350, 1.442695
    %v1352 = vpow.pop %v1351
    %v1353 = vadd.f32 %v1352, 1.0
    %v1354 = vrcp.pop %v1353
    %v1355 = vmul.f32 1.0, %v1354
    %v1356 = vxor.u32 %v1277, 2147483648
    %v1357 = vmul.f32 %v1356, 1.442695
    %v1358 = vpow.pop %v1357
    %v1359 = vadd.f32 %v1358, 1.0
    %v1360 = vrcp.pop %v1359
    %v1361 = vmul.f32 1.0, %v1360
    %v1362 = vtanh.pop %v1346
    %v1363 = vxor.u32 %v1348, 2147483648
    %v1364 = vmul.f32 %v1363, 1.442695
    %v1365 = vpow.pop %v1364
    %v1366 = vadd.f32 %v1365, 1.0
    %v1367 = vrcp.pop %v1366
    %v1368 = vmul.f32 1.0, %v1367
    %v1369 = vmul.f32 %v1361, %v1031
    %v1370 = vmul.f32 %v1355, %v1362
    %v1371 = vadd.f32 %v1369, %v1370
    %v1372 = vtanh.pop %v1371
    %v1373 = vmul.f32 %v1368, %v1372
    %v1374 = vld [vmem:[#allocation2 + $0x40] sm:$0xff]
    %v1375 = vld [vmem:[#allocation2 + $0x48] sm:$0xff]
    %v1376 = vld [vmem:[#allocation2 + $0x50] sm:$0xff]
    %v1377 = vld [vmem:[#allocation2 + $0x58] sm:$0xff]
    %1378 = vmatprep.subr.mxu0 %v507
    %1379 = vmatpush1.msra.mxu0 %v506
    %1380 = vmatprep.subr.mxu0 %v511
    %1381 = vmatpush1.msra.mxu0 %v510
    %1382 = vmatprep.subr.mxu0 %v515
    %1383 = vmatpush1.msra.mxu0 %v514
    %1384 = vmatprep.subr.mxu0 %v519
    %1385 = vmatpush1.msra.mxu0 %v518
    %1386 = vmatprep.subr.mxu0 %v523
    %1387 = vmatpush1.msra.mxu0 %v522
    %1388 = vmatprep.subr.mxu0 %v527
    %1389 = vmatpush1.msra.mxu0 %v526
    %1390 = vmatprep.subr.mxu0 %v531
    %1391 = vmatpush1.msra.mxu0 %v530
    %1392 = vmatprep.subr.mxu0 %v535
    %1393 = vmatpush1.msra.mxu0 %v534
    %1394 = vmatprep.subr.mxu0 %v539
    %1395 = vmatpush1.msra.mxu0 %v538
    %1396 = vmatprep.subr.mxu0 %v543
    %1397 = vmatpush1.msra.mxu0 %v542
    %1398 = vmatprep.subr.mxu0 %v547
    %1399 = vmatpush1.msra.mxu0 %v546
    %1400 = vmatprep.subr.mxu0 %v551
    %1401 = vmatpush1.msra.mxu0 %v550
    %1402 = vmatprep.subr.mxu0 %v555
    %1403 = vmatpush1.msra.mxu0 %v554
    %1404 = vmatprep.subr.mxu0 %v559
    %1405 = vmatpush1.msra.mxu0 %v558
    %1406 = vmatprep.subr.mxu0 %v563
    %1407 = vmatpush1.msra.mxu0 %v562
    %1408 = vmatprep.subr.mxu0 %v567
    %1409 = vmatpush1.msra.mxu0 %v566
    %1410 = vmatprep.subr.mxu0 0.0
    %1411 = vmatpush1.msra.mxu0 0.0
    %1412 = vmatprep.subr.mxu0 0.0
    %1413 = vmatpush1.msra.mxu0 0.0
    %1414 = vmatprep.subr.mxu0 0.0
    %1415 = vmatpush1.msra.mxu0 0.0
    %1416 = vmatprep.subr.mxu0 0.0
    %1417 = vmatpush1.msra.mxu0 0.0
    %1418 = vmatprep.subr.mxu0 0.0
    %1419 = vmatpush1.msra.mxu0 0.0
    %1420 = vmatprep.subr.mxu0 0.0
    %1421 = vmatpush1.msra.mxu0 0.0
    %1422 = vmatprep.subr.mxu0 0.0
    %1423 = vmatpush1.msra.mxu0 0.0
    %1424 = vmatprep.subr.mxu0 0.0
    %1425 = vmatpush1.msra.mxu0 0.0
    %1426 = vmatprep.subr.mxu0 0.0
    %1427 = vmatpush1.msra.mxu0 0.0
    %1428 = vmatprep.subr.mxu0 0.0
    %1429 = vmatpush1.msra.mxu0 0.0
    %1430 = vmatprep.subr.mxu0 0.0
    %1431 = vmatpush1.msra.mxu0 0.0
    %1432 = vmatprep.subr.mxu0 0.0
    %1433 = vmatpush1.msra.mxu0 0.0
    %1434 = vmatprep.subr.mxu0 0.0
    %1435 = vmatpush1.msra.mxu0 0.0
    %1436 = vmatprep.subr.mxu0 0.0
    %1437 = vmatpush1.msra.mxu0 0.0
    %1438 = vmatprep.subr.mxu0 0.0
    %1439 = vmatpush1.msra.mxu0 0.0
    %1440 = vmatprep.subr.mxu0 0.0
    %1441 = vmatpush1.msra.mxu0 0.0
    %1442 = vmatprep.mubr.f32.mxu0 0.0
    %1443 = vmatmul.mubr.f32.gmra.mrb[0].mxu0 %v1207
    %v1444 = vpop.f32.mrb[0].mxu0
    %v1445 = vadd.f32 0.0, %v1444
    %v1446 = vpop.f32.mrb[0].mxu0
    %v1447 = vadd.f32 0.0, %v1446
    %1448 = vdwg.mxu0
    %1449 = vmatprep.subr.mxu0 %v509
    %1450 = vmatpush1.msra.mxu0 %v508
    %1451 = vmatprep.subr.mxu0 %v513
    %1452 = vmatpush1.msra.mxu0 %v512
    %1453 = vmatprep.subr.mxu0 %v517
    %1454 = vmatpush1.msra.mxu0 %v516
    %1455 = vmatprep.subr.mxu0 %v521
    %1456 = vmatpush1.msra.mxu0 %v520
    %1457 = vmatprep.subr.mxu0 %v525
    %1458 = vmatpush1.msra.mxu0 %v524
    %1459 = vmatprep.subr.mxu0 %v529
    %1460 = vmatpush1.msra.mxu0 %v528
    %1461 = vmatprep.subr.mxu0 %v533
    %1462 = vmatpush1.msra.mxu0 %v532
    %1463 = vmatprep.subr.mxu0 %v537
    %1464 = vmatpush1.msra.mxu0 %v536
    %1465 = vmatprep.subr.mxu0 %v541
    %1466 = vmatpush1.msra.mxu0 %v540
    %1467 = vmatprep.subr.mxu0 %v545
    %1468 = vmatpush1.msra.mxu0 %v544
    %1469 = vmatprep.subr.mxu0 %v549
    %1470 = vmatpush1.msra.mxu0 %v548
    %1471 = vmatprep.subr.mxu0 %v553
    %1472 = vmatpush1.msra.mxu0 %v552
    %1473 = vmatprep.subr.mxu0 %v557
    %1474 = vmatpush1.msra.mxu0 %v556
    %1475 = vmatprep.subr.mxu0 %v561
    %1476 = vmatpush1.msra.mxu0 %v560
    %1477 = vmatprep.subr.mxu0 %v565
    %1478 = vmatpush1.msra.mxu0 %v564
    %1479 = vmatprep.subr.mxu0 %v569
    %1480 = vmatpush1.msra.mxu0 %v568
    %1481 = vmatprep.subr.mxu0 0.0
    %1482 = vmatpush1.msra.mxu0 0.0
    %1483 = vmatprep.subr.mxu0 0.0
    %1484 = vmatpush1.msra.mxu0 0.0
    %1485 = vmatprep.subr.mxu0 0.0
    %1486 = vmatpush1.msra.mxu0 0.0
    %1487 = vmatprep.subr.mxu0 0.0
    %1488 = vmatpush1.msra.mxu0 0.0
    %1489 = vmatprep.subr.mxu0 0.0
    %1490 = vmatpush1.msra.mxu0 0.0
    %1491 = vmatprep.subr.mxu0 0.0
    %1492 = vmatpush1.msra.mxu0 0.0
    %1493 = vmatprep.subr.mxu0 0.0
    %1494 = vmatpush1.msra.mxu0 0.0
    %1495 = vmatprep.subr.mxu0 0.0
    %1496 = vmatpush1.msra.mxu0 0.0
    %1497 = vmatprep.subr.mxu0 0.0
    %1498 = vmatpush1.msra.mxu0 0.0
    %1499 = vmatprep.subr.mxu0 0.0
    %1500 = vmatpush1.msra.mxu0 0.0
    %1501 = vmatprep.subr.mxu0 0.0
    %1502 = vmatpush1.msra.mxu0 0.0
    %1503 = vmatprep.subr.mxu0 0.0
    %1504 = vmatpush1.msra.mxu0 0.0
    %1505 = vmatprep.subr.mxu0 0.0
    %1506 = vmatpush1.msra.mxu0 0.0
    %1507 = vmatprep.subr.mxu0 0.0
    %1508 = vmatpush1.msra.mxu0 0.0
    %1509 = vmatprep.subr.mxu0 0.0
    %1510 = vmatpush1.msra.mxu0 0.0
    %1511 = vmatprep.subr.mxu0 0.0
    %1512 = vmatpush1.msra.mxu0 0.0
    %1513 = vmatprep.mubr.f32.mxu0 0.0
    %1514 = vmatmul.mubr.f32.gmra.mrb[0].mxu0 %v1207
    %v1515 = vpop.f32.mrb[0].mxu0
    %v1516 = vadd.f32 0.0, %v1515
    %v1517 = vpop.f32.mrb[0].mxu0
    %v1518 = vadd.f32 0.0, %v1517
    %1519 = vdwg.mxu0
    %v1520 = vadd.f32 %v1374, %v1445
    %v1521 = vadd.f32 %v1375, %v1447
    %v1522 = vadd.f32 %v1376, %v1516
    %v1523 = vadd.f32 %v1377, %v1518
    %v1524 = vxor.u32 %v1520, 2147483648
    %v1525 = vmul.f32 %v1524, 1.442695
    %v1526 = vpow.pop %v1525
    %v1527 = vadd.f32 %v1526, 1.0
    %v1528 = vrcp.pop %v1527
    %v1529 = vmul.f32 1.0, %v1528
    %v1530 = vxor.u32 %v1521, 2147483648
    %v1531 = vmul.f32 %v1530, 1.442695
    %v1532 = vpow.pop %v1531
    %v1533 = vadd.f32 %v1532, 1.0
    %v1534 = vrcp.pop %v1533
    %v1535 = vmul.f32 1.0, %v1534
    %v1536 = vtanh.pop %v1522
    %v1537 = vxor.u32 %v1523, 2147483648
    %v1538 = vmul.f32 %v1537, 1.442695
    %v1539 = vpow.pop %v1538
    %v1540 = vadd.f32 %v1539, 1.0
    %v1541 = vrcp.pop %v1540
    %v1542 = vmul.f32 1.0, %v1541
    %v1543 = vmul.f32 %v1535, %v1205
    %v1544 = vmul.f32 %v1529, %v1536
    %v1545 = vadd.f32 %v1543, %v1544
    %v1546 = vtanh.pop %v1545
    %v1547 = vmul.f32 %v1542, %v1546
    %1548 = vmatprep.subr.mxu0 %v741
    %1549 = vmatpush1.msra.mxu0 %v740
    %1550 = vmatprep.subr.mxu0 %v745
    %1551 = vmatpush1.msra.mxu0 %v744
    %1552 = vmatprep.subr.mxu0 %v749
    %1553 = vmatpush1.msra.mxu0 %v748
    %1554 = vmatprep.subr.mxu0 %v753
    %1555 = vmatpush1.msra.mxu0 %v752
    %1556 = vmatprep.subr.mxu0 %v757
    %1557 = vmatpush1.msra.mxu0 %v756
    %1558 = vmatprep.subr.mxu0 %v761
    %1559 = vmatpush1.msra.mxu0 %v760
    %1560 = vmatprep.subr.mxu0 %v765
    %1561 = vmatpush1.msra.mxu0 %v764
    %1562 = vmatprep.subr.mxu0 %v769
    %1563 = vmatpush1.msra.mxu0 %v768
    %1564 = vmatprep.subr.mxu0 %v773
    %1565 = vmatpush1.msra.mxu0 %v772
    %1566 = vmatprep.subr.mxu0 %v777
    %1567 = vmatpush1.msra.mxu0 %v776
    %1568 = vmatprep.subr.mxu0 %v781
    %1569 = vmatpush1.msra.mxu0 %v780
    %1570 = vmatprep.subr.mxu0 %v785
    %1571 = vmatpush1.msra.mxu0 %v784
    %1572 = vmatprep.subr.mxu0 %v789
    %1573 = vmatpush1.msra.mxu0 %v788
    %1574 = vmatprep.subr.mxu0 %v793
    %1575 = vmatpush1.msra.mxu0 %v792
    %1576 = vmatprep.subr.mxu0 %v797
    %1577 = vmatpush1.msra.mxu0 %v796
    %1578 = vmatprep.subr.mxu0 %v801
    %1579 = vmatpush1.msra.mxu0 %v800
    %1580 = vmatprep.subr.mxu0 %v805
    %1581 = vmatpush1.msra.mxu0 %v804
    %1582 = vmatprep.subr.mxu0 %v809
    %1583 = vmatpush1.msra.mxu0 %v808
    %1584 = vmatprep.subr.mxu0 %v813
    %1585 = vmatpush1.msra.mxu0 %v812
    %1586 = vmatprep.subr.mxu0 %v817
    %1587 = vmatpush1.msra.mxu0 %v816
    %1588 = vmatprep.subr.mxu0 %v821
    %1589 = vmatpush1.msra.mxu0 %v820
    %1590 = vmatprep.subr.mxu0 %v825
    %1591 = vmatpush1.msra.mxu0 %v824
    %1592 = vmatprep.subr.mxu0 %v829
    %1593 = vmatpush1.msra.mxu0 %v828
    %1594 = vmatprep.subr.mxu0 %v833
    %1595 = vmatpush1.msra.mxu0 %v832
    %1596 = vmatprep.subr.mxu0 %v837
    %1597 = vmatpush1.msra.mxu0 %v836
    %1598 = vmatprep.subr.mxu0 %v841
    %1599 = vmatpush1.msra.mxu0 %v840
    %1600 = vmatprep.subr.mxu0 %v845
    %1601 = vmatpush1.msra.mxu0 %v844
    %1602 = vmatprep.subr.mxu0 %v849
    %1603 = vmatpush1.msra.mxu0 %v848
    %1604 = vmatprep.subr.mxu0 %v853
    %1605 = vmatpush1.msra.mxu0 %v852
    %1606 = vmatprep.subr.mxu0 %v857
    %1607 = vmatpush1.msra.mxu0 %v856
    %1608 = vmatprep.subr.mxu0 %v861
    %1609 = vmatpush1.msra.mxu0 %v860
    %1610 = vmatprep.subr.mxu0 %v865
    %1611 = vmatpush1.msra.mxu0 %v864
    %1612 = vmatprep.mubr.f32.mxu0 %v1373
    %1613 = vmatmul.mubr.f32.gmra.mrb[0].mxu0 %v1547
    %v1614 = vpop.f32.mrb[0].mxu0
    %v1615 = vadd.f32 %v485, %v1614
    %v1616 = vpop.f32.mrb[0].mxu0
    %v1617 = vadd.f32 %v489, %v1616
    %1618 = vdwg.mxu0
    %1619 = vmatprep.subr.mxu0 %v743
    %1620 = vmatpush1.msra.mxu0 %v742
    %1621 = vmatprep.subr.mxu0 %v747
    %1622 = vmatpush1.msra.mxu0 %v746
    %1623 = vmatprep.subr.mxu0 %v751
    %1624 = vmatpush1.msra.mxu0 %v750
    %1625 = vmatprep.subr.mxu0 %v755
    %1626 = vmatpush1.msra.mxu0 %v754
    %1627 = vmatprep.subr.mxu0 %v759
    %1628 = vmatpush1.msra.mxu0 %v758
    %1629 = vmatprep.subr.mxu0 %v763
    %1630 = vmatpush1.msra.mxu0 %v762
    %1631 = vmatprep.subr.mxu0 %v767
    %1632 = vmatpush1.msra.mxu0 %v766
    %1633 = vmatprep.subr.mxu0 %v771
    %1634 = vmatpush1.msra.mxu0 %v770
    %1635 = vmatprep.subr.mxu0 %v775
    %1636 = vmatpush1.msra.mxu0 %v774
    %1637 = vmatprep.subr.mxu0 %v779
    %1638 = vmatpush1.msra.mxu0 %v778
    %1639 = vmatprep.subr.mxu0 %v783
    %1640 = vmatpush1.msra.mxu0 %v782
    %1641 = vmatprep.subr.mxu0 %v787
    %1642 = vmatpush1.msra.mxu0 %v786
    %1643 = vmatprep.subr.mxu0 %v791
    %1644 = vmatpush1.msra.mxu0 %v790
    %1645 = vmatprep.subr.mxu0 %v795
    %1646 = vmatpush1.msra.mxu0 %v794
    %1647 = vmatprep.subr.mxu0 %v799
    %1648 = vmatpush1.msra.mxu0 %v798
    %1649 = vmatprep.subr.mxu0 %v803
    %1650 = vmatpush1.msra.mxu0 %v802
    %1651 = vmatprep.subr.mxu0 %v807
    %1652 = vmatpush1.msra.mxu0 %v806
    %1653 = vmatprep.subr.mxu0 %v811
    %1654 = vmatpush1.msra.mxu0 %v810
    %1655 = vmatprep.subr.mxu0 %v815
    %1656 = vmatpush1.msra.mxu0 %v814
    %1657 = vmatprep.subr.mxu0 %v819
    %1658 = vmatpush1.msra.mxu0 %v818
    %1659 = vmatprep.subr.mxu0 %v823
    %1660 = vmatpush1.msra.mxu0 %v822
    %1661 = vmatprep.subr.mxu0 %v827
    %1662 = vmatpush1.msra.mxu0 %v826
    %1663 = vmatprep.subr.mxu0 %v831
    %1664 = vmatpush1.msra.mxu0 %v830
    %1665 = vmatprep.subr.mxu0 %v835
    %1666 = vmatpush1.msra.mxu0 %v834
    %1667 = vmatprep.subr.mxu0 %v839
    %1668 = vmatpush1.msra.mxu0 %v838
    %1669 = vmatprep.subr.mxu0 %v843
    %1670 = vmatpush1.msra.mxu0 %v842
    %1671 = vmatprep.subr.mxu0 %v847
    %1672 = vmatpush1.msra.mxu0 %v846
    %1673 = vmatprep.subr.mxu0 %v851
    %1674 = vmatpush1.msra.mxu0 %v850
    %1675 = vmatprep.subr.mxu0 %v855
    %1676 = vmatpush1.msra.mxu0 %v854
    %1677 = vmatprep.subr.mxu0 %v859
    %1678 = vmatpush1.msra.mxu0 %v858
    %1679 = vmatprep.subr.mxu0 %v863
    %1680 = vmatpush1.msra.mxu0 %v862
    %1681 = vmatprep.subr.mxu0 %v867
    %1682 = vmatpush1.msra.mxu0 %v866
    %1683 = vmatprep.mubr.f32.mxu0 %v1373
    %1684 = vmatmul.mubr.f32.gmra.mrb[0].mxu0 %v1547
    %v1685 = vpop.f32.mrb[0].mxu0
    %v1686 = vadd.f32 %v493, %v1685
    %v1687 = vpop.f32.mrb[0].mxu0
    %v1688 = vadd.f32 %v497, %v1687
    %1689 = vdwg.mxu0
    %v1690 = vxor.u32 %v1615, 2147483648
    %v1691 = vmul.f32 %v1690, 1.442695
    %v1692 = vpow.pop %v1691
    %v1693 = vadd.f32 %v1692, 1.0
    %v1694 = vrcp.pop %v1693
    %v1695 = vmul.f32 1.0, %v1694
    %v1696 = vxor.u32 %v1617, 2147483648
    %v1697 = vmul.f32 %v1696, 1.442695
    %v1698 = vpow.pop %v1697
    %v1699 = vadd.f32 %v1698, 1.0
    %v1700 = vrcp.pop %v1699
    %v1701 = vmul.f32 1.0, %v1700
    %v1702 = vtanh.pop %v1686
    %v1703 = vxor.u32 %v1688, 2147483648
    %v1704 = vmul.f32 %v1703, 1.442695
    %v1705 = vpow.pop %v1704
    %v1706 = vadd.f32 %v1705, 1.0
    %v1707 = vrcp.pop %v1706
    %v1708 = vmul.f32 1.0, %v1707
    %v1709 = vmul.f32 %v1701, %v1371
    %v1710 = vmul.f32 %v1695, %v1702
    %v1711 = vadd.f32 %v1709, %v1710
    %v1712 = vtanh.pop %v1711
    %v1713 = vmul.f32 %v1708, %v1712
    %v1714 = vld [vmem:[#allocation2 + $0x60] sm:$0xff]
    %v1715 = vld [vmem:[#allocation2 + $0x68] sm:$0xff]
    %v1716 = vld [vmem:[#allocation2 + $0x70] sm:$0xff]
    %v1717 = vld [vmem:[#allocation2 + $0x78] sm:$0xff]
    %1718 = vmatprep.subr.mxu0 %v507
    %1719 = vmatpush1.msra.mxu0 %v506
    %1720 = vmatprep.subr.mxu0 %v511
    %1721 = vmatpush1.msra.mxu0 %v510
    %1722 = vmatprep.subr.mxu0 %v515
    %1723 = vmatpush1.msra.mxu0 %v514
    %1724 = vmatprep.subr.mxu0 %v519
    %1725 = vmatpush1.msra.mxu0 %v518
    %1726 = vmatprep.subr.mxu0 %v523
    %1727 = vmatpush1.msra.mxu0 %v522
    %1728 = vmatprep.subr.mxu0 %v527
    %1729 = vmatpush1.msra.mxu0 %v526
    %1730 = vmatprep.subr.mxu0 %v531
    %1731 = vmatpush1.msra.mxu0 %v530
    %1732 = vmatprep.subr.mxu0 %v535
    %1733 = vmatpush1.msra.mxu0 %v534
    %1734 = vmatprep.subr.mxu0 %v539
    %1735 = vmatpush1.msra.mxu0 %v538
    %1736 = vmatprep.subr.mxu0 %v543
    %1737 = vmatpush1.msra.mxu0 %v542
    %1738 = vmatprep.subr.mxu0 %v547
    %1739 = vmatpush1.msra.mxu0 %v546
    %1740 = vmatprep.subr.mxu0 %v551
    %1741 = vmatpush1.msra.mxu0 %v550
    %1742 = vmatprep.subr.mxu0 %v555
    %1743 = vmatpush1.msra.mxu0 %v554
    %1744 = vmatprep.subr.mxu0 %v559
    %1745 = vmatpush1.msra.mxu0 %v558
    %1746 = vmatprep.subr.mxu0 %v563
    %1747 = vmatpush1.msra.mxu0 %v562
    %1748 = vmatprep.subr.mxu0 %v567
    %1749 = vmatpush1.msra.mxu0 %v566
    %1750 = vmatprep.subr.mxu0 0.0
    %1751 = vmatpush1.msra.mxu0 0.0
    %1752 = vmatprep.subr.mxu0 0.0
    %1753 = vmatpush1.msra.mxu0 0.0
    %1754 = vmatprep.subr.mxu0 0.0
    %1755 = vmatpush1.msra.mxu0 0.0
    %1756 = vmatprep.subr.mxu0 0.0
    %1757 = vmatpush1.msra.mxu0 0.0
    %1758 = vmatprep.subr.mxu0 0.0
    %1759 = vmatpush1.msra.mxu0 0.0
    %1760 = vmatprep.subr.mxu0 0.0
    %1761 = vmatpush1.msra.mxu0 0.0
    %1762 = vmatprep.subr.mxu0 0.0
    %1763 = vmatpush1.msra.mxu0 0.0
    %1764 = vmatprep.subr.mxu0 0.0
    %1765 = vmatpush1.msra.mxu0 0.0
    %1766 = vmatprep.subr.mxu0 0.0
    %1767 = vmatpush1.msra.mxu0 0.0
    %1768 = vmatprep.subr.mxu0 0.0
    %1769 = vmatpush1.msra.mxu0 0.0
    %1770 = vmatprep.subr.mxu0 0.0
    %1771 = vmatpush1.msra.mxu0 0.0
    %1772 = vmatprep.subr.mxu0 0.0
    %1773 = vmatpush1.msra.mxu0 0.0
    %1774 = vmatprep.subr.mxu0 0.0
    %1775 = vmatpush1.msra.mxu0 0.0
    %1776 = vmatprep.subr.mxu0 0.0
    %1777 = vmatpush1.msra.mxu0 0.0
    %1778 = vmatprep.subr.mxu0 0.0
    %1779 = vmatpush1.msra.mxu0 0.0
    %1780 = vmatprep.subr.mxu0 0.0
    %1781 = vmatpush1.msra.mxu0 0.0
    %1782 = vmatprep.mubr.f32.mxu0 0.0
    %1783 = vmatmul.mubr.f32.gmra.mrb[0].mxu0 %v1547
    %v1784 = vpop.f32.mrb[0].mxu0
    %v1785 = vadd.f32 0.0, %v1784
    %v1786 = vpop.f32.mrb[0].mxu0
    %v1787 = vadd.f32 0.0, %v1786
    %1788 = vdwg.mxu0
    %1789 = vmatprep.subr.mxu0 %v509
    %1790 = vmatpush1.msra.mxu0 %v508
    %1791 = vmatprep.subr.mxu0 %v513
    %1792 = vmatpush1.msra.mxu0 %v512
    %1793 = vmatprep.subr.mxu0 %v517
    %1794 = vmatpush1.msra.mxu0 %v516
    %1795 = vmatprep.subr.mxu0 %v521
    %1796 = vmatpush1.msra.mxu0 %v520
    %1797 = vmatprep.subr.mxu0 %v525
    %1798 = vmatpush1.msra.mxu0 %v524
    %1799 = vmatprep.subr.mxu0 %v529
    %1800 = vmatpush1.msra.mxu0 %v528
    %1801 = vmatprep.subr.mxu0 %v533
    %1802 = vmatpush1.msra.mxu0 %v532
    %1803 = vmatprep.subr.mxu0 %v537
    %1804 = vmatpush1.msra.mxu0 %v536
    %1805 = vmatprep.subr.mxu0 %v541
    %1806 = vmatpush1.msra.mxu0 %v540
    %1807 = vmatprep.subr.mxu0 %v545
    %1808 = vmatpush1.msra.mxu0 %v544
    %1809 = vmatprep.subr.mxu0 %v549
    %1810 = vmatpush1.msra.mxu0 %v548
    %1811 = vmatprep.subr.mxu0 %v553
    %1812 = vmatpush1.msra.mxu0 %v552
    %1813 = vmatprep.subr.mxu0 %v557
    %1814 = vmatpush1.msra.mxu0 %v556
    %1815 = vmatprep.subr.mxu0 %v561
    %1816 = vmatpush1.msra.mxu0 %v560
    %1817 = vmatprep.subr.mxu0 %v565
    %1818 = vmatpush1.msra.mxu0 %v564
    %1819 = vmatprep.subr.mxu0 %v569
    %1820 = vmatpush1.msra.mxu0 %v568
    %1821 = vmatprep.subr.mxu0 0.0
    %1822 = vmatpush1.msra.mxu0 0.0
    %1823 = vmatprep.subr.mxu0 0.0
    %1824 = vmatpush1.msra.mxu0 0.0
    %1825 = vmatprep.subr.mxu0 0.0
    %1826 = vmatpush1.msra.mxu0 0.0
    %1827 = vmatprep.subr.mxu0 0.0
    %1828 = vmatpush1.msra.mxu0 0.0
    %1829 = vmatprep.subr.mxu0 0.0
    %1830 = vmatpush1.msra.mxu0 0.0
    %1831 = vmatprep.subr.mxu0 0.0
    %1832 = vmatpush1.msra.mxu0 0.0
    %1833 = vmatprep.subr.mxu0 0.0
    %1834 = vmatpush1.msra.mxu0 0.0
    %1835 = vmatprep.subr.mxu0 0.0
    %1836 = vmatpush1.msra.mxu0 0.0
    %1837 = vmatprep.subr.mxu0 0.0
    %1838 = vmatpush1.msra.mxu0 0.0
    %1839 = vmatprep.subr.mxu0 0.0
    %1840 = vmatpush1.msra.mxu0 0.0
    %1841 = vmatprep.subr.mxu0 0.0
    %1842 = vmatpush1.msra.mxu0 0.0
    %1843 = vmatprep.subr.mxu0 0.0
    %1844 = vmatpush1.msra.mxu0 0.0
    %1845 = vmatprep.subr.mxu0 0.0
    %1846 = vmatpush1.msra.mxu0 0.0
    %1847 = vmatprep.subr.mxu0 0.0
    %1848 = vmatpush1.msra.mxu0 0.0
    %1849 = vmatprep.subr.mxu0 0.0
    %1850 = vmatpush1.msra.mxu0 0.0
    %1851 = vmatprep.subr.mxu0 0.0
    %1852 = vmatpush1.msra.mxu0 0.0
    %1853 = vmatprep.mubr.f32.mxu0 0.0
    %1854 = vmatmul.mubr.f32.gmra.mrb[0].mxu0 %v1547
    %v1855 = vpop.f32.mrb[0].mxu0
    %v1856 = vadd.f32 0.0, %v1855
    %v1857 = vpop.f32.mrb[0].mxu0
    %v1858 = vadd.f32 0.0, %v1857
    %1859 = vdwg.mxu0
    %v1860 = vadd.f32 %v1714, %v1785
    %v1861 = vadd.f32 %v1715, %v1787
    %v1862 = vadd.f32 %v1716, %v1856
    %v1863 = vadd.f32 %v1717, %v1858
    %v1864 = vxor.u32 %v1860, 2147483648
    %v1865 = vmul.f32 %v1864, 1.442695
    %v1866 = vpow.pop %v1865
    %v1867 = vadd.f32 %v1866, 1.0
    %v1868 = vrcp.pop %v1867
    %v1869 = vmul.f32 1.0, %v1868
    %v1870 = vxor.u32 %v1861, 2147483648
    %v1871 = vmul.f32 %v1870, 1.442695
    %v1872 = vpow.pop %v1871
    %v1873 = vadd.f32 %v1872, 1.0
    %v1874 = vrcp.pop %v1873
    %v1875 = vmul.f32 1.0, %v1874
    %v1876 = vtanh.pop %v1862
    %v1877 = vxor.u32 %v1863, 2147483648
    %v1878 = vmul.f32 %v1877, 1.442695
    %v1879 = vpow.pop %v1878
    %v1880 = vadd.f32 %v1879, 1.0
    %v1881 = vrcp.pop %v1880
    %v1882 = vmul.f32 1.0, %v1881
    %v1883 = vmul.f32 %v1875, %v1545
    %v1884 = vmul.f32 %v1869, %v1876
    %v1885 = vadd.f32 %v1883, %v1884
    %v1886 = vtanh.pop %v1885
    %v1887 = vmul.f32 %v1882, %v1886
    %1888 = vmatprep.subr.mxu0 %v741
    %1889 = vmatpush1.msra.mxu0 %v740
    %1890 = vmatprep.subr.mxu0 %v745
    %1891 = vmatpush1.msra.mxu0 %v744
    %1892 = vmatprep.subr.mxu0 %v749
    %1893 = vmatpush1.msra.mxu0 %v748
    %1894 = vmatprep.subr.mxu0 %v753
    %1895 = vmatpush1.msra.mxu0 %v752
    %1896 = vmatprep.subr.mxu0 %v757
    %1897 = vmatpush1.msra.mxu0 %v756
    %1898 = vmatprep.subr.mxu0 %v761
    %1899 = vmatpush1.msra.mxu0 %v760
    %1900 = vmatprep.subr.mxu0 %v765
    %1901 = vmatpush1.msra.mxu0 %v764
    %1902 = vmatprep.subr.mxu0 %v769
    %1903 = vmatpush1.msra.mxu0 %v768
    %1904 = vmatprep.subr.mxu0 %v773
    %1905 = vmatpush1.msra.mxu0 %v772
    %1906 = vmatprep.subr.mxu0 %v777
    %1907 = vmatpush1.msra.mxu0 %v776
    %1908 = vmatprep.subr.mxu0 %v781
    %1909 = vmatpush1.msra.mxu0 %v780
    %1910 = vmatprep.subr.mxu0 %v785
    %1911 = vmatpush1.msra.mxu0 %v784
    %1912 = vmatprep.subr.mxu0 %v789
    %1913 = vmatpush1.msra.mxu0 %v788
    %1914 = vmatprep.subr.mxu0 %v793
    %1915 = vmatpush1.msra.mxu0 %v792
    %1916 = vmatprep.subr.mxu0 %v797
    %1917 = vmatpush1.msra.mxu0 %v796
    %1918 = vmatprep.subr.mxu0 %v801
    %1919 = vmatpush1.msra.mxu0 %v800
    %1920 = vmatprep.subr.mxu0 %v805
    %1921 = vmatpush1.msra.mxu0 %v804
    %1922 = vmatprep.subr.mxu0 %v809
    %1923 = vmatpush1.msra.mxu0 %v808
    %1924 = vmatprep.subr.mxu0 %v813
    %1925 = vmatpush1.msra.mxu0 %v812
    %1926 = vmatprep.subr.mxu0 %v817
    %1927 = vmatpush1.msra.mxu0 %v816
    %1928 = vmatprep.subr.mxu0 %v821
    %1929 = vmatpush1.msra.mxu0 %v820
    %1930 = vmatprep.subr.mxu0 %v825
    %1931 = vmatpush1.msra.mxu0 %v824
    %1932 = vmatprep.subr.mxu0 %v829
    %1933 = vmatpush1.msra.mxu0 %v828
    %1934 = vmatprep.subr.mxu0 %v833
    %1935 = vmatpush1.msra.mxu0 %v832
    %1936 = vmatprep.subr.mxu0 %v837
    %1937 = vmatpush1.msra.mxu0 %v836
    %1938 = vmatprep.subr.mxu0 %v841
    %1939 = vmatpush1.msra.mxu0 %v840
    %1940 = vmatprep.subr.mxu0 %v845
    %1941 = vmatpush1.msra.mxu0 %v844
    %1942 = vmatprep.subr.mxu0 %v849
    %1943 = vmatpush1.msra.mxu0 %v848
    %1944 = vmatprep.subr.mxu0 %v853
    %1945 = vmatpush1.msra.mxu0 %v852
    %1946 = vmatprep.subr.mxu0 %v857
    %1947 = vmatpush1.msra.mxu0 %v856
    %1948 = vmatprep.subr.mxu0 %v861
    %1949 = vmatpush1.msra.mxu0 %v860
    %1950 = vmatprep.subr.mxu0 %v865
    %1951 = vmatpush1.msra.mxu0 %v864
    %1952 = vmatprep.mubr.f32.mxu0 %v1713
    %1953 = vmatmul.mubr.f32.gmra.mrb[0].mxu0 %v1887
    %v1954 = vpop.f32.mrb[0].mxu0
    %v1955 = vadd.f32 %v485, %v1954
    %v1956 = vpop.f32.mrb[0].mxu0
    %v1957 = vadd.f32 %v489, %v1956
    %1958 = vdwg.mxu0
    %1959 = vmatprep.subr.mxu0 %v743
    %1960 = vmatpush1.msra.mxu0 %v742
    %1961 = vmatprep.subr.mxu0 %v747
    %1962 = vmatpush1.msra.mxu0 %v746
    %1963 = vmatprep.subr.mxu0 %v751
    %1964 = vmatpush1.msra.mxu0 %v750
    %1965 = vmatprep.subr.mxu0 %v755
    %1966 = vmatpush1.msra.mxu0 %v754
    %1967 = vmatprep.subr.mxu0 %v759
    %1968 = vmatpush1.msra.mxu0 %v758
    %1969 = vmatprep.subr.mxu0 %v763
    %1970 = vmatpush1.msra.mxu0 %v762
    %1971 = vmatprep.subr.mxu0 %v767
    %1972 = vmatpush1.msra.mxu0 %v766
    %1973 = vmatprep.subr.mxu0 %v771
    %1974 = vmatpush1.msra.mxu0 %v770
    %1975 = vmatprep.subr.mxu0 %v775
    %1976 = vmatpush1.msra.mxu0 %v774
    %1977 = vmatprep.subr.mxu0 %v779
    %1978 = vmatpush1.msra.mxu0 %v778
    %1979 = vmatprep.subr.mxu0 %v783
    %1980 = vmatpush1.msra.mxu0 %v782
    %1981 = vmatprep.subr.mxu0 %v787
    %1982 = vmatpush1.msra.mxu0 %v786
    %1983 = vmatprep.subr.mxu0 %v791
    %1984 = vmatpush1.msra.mxu0 %v790
    %1985 = vmatprep.subr.mxu0 %v795
    %1986 = vmatpush1.msra.mxu0 %v794
    %1987 = vmatprep.subr.mxu0 %v799
    %1988 = vmatpush1.msra.mxu0 %v798
    %1989 = vmatprep.subr.mxu0 %v803
    %1990 = vmatpush1.msra.mxu0 %v802
    %1991 = vmatprep.subr.mxu0 %v807
    %1992 = vmatpush1.msra.mxu0 %v806
    %1993 = vmatprep.subr.mxu0 %v811
    %1994 = vmatpush1.msra.mxu0 %v810
    %1995 = vmatprep.subr.mxu0 %v815
    %1996 = vmatpush1.msra.mxu0 %v814
    %1997 = vmatprep.subr.mxu0 %v819
    %1998 = vmatpush1.msra.mxu0 %v818
    %1999 = vmatprep.subr.mxu0 %v823
    %2000 = vmatpush1.msra.mxu0 %v822
    %2001 = vmatprep.subr.mxu0 %v827
    %2002 = vmatpush1.msra.mxu0 %v826
    %2003 = vmatprep.subr.mxu0 %v831
    %2004 = vmatpush1.msra.mxu0 %v830
    %2005 = vmatprep.subr.mxu0 %v835
    %2006 = vmatpush1.msra.mxu0 %v834
    %2007 = vmatprep.subr.mxu0 %v839
    %2008 = vmatpush1.msra.mxu0 %v838
    %2009 = vmatprep.subr.mxu0 %v843
    %2010 = vmatpush1.msra.mxu0 %v842
    %2011 = vmatprep.subr.mxu0 %v847
    %2012 = vmatpush1.msra.mxu0 %v846
    %2013 = vmatprep.subr.mxu0 %v851
    %2014 = vmatpush1.msra.mxu0 %v850
    %2015 = vmatprep.subr.mxu0 %v855
    %2016 = vmatpush1.msra.mxu0 %v854
    %2017 = vmatprep.subr.mxu0 %v859
    %2018 = vmatpush1.msra.mxu0 %v858
    %2019 = vmatprep.subr.mxu0 %v863
    %2020 = vmatpush1.msra.mxu0 %v862
    %2021 = vmatprep.subr.mxu0 %v867
    %2022 = vmatpush1.msra.mxu0 %v866
    %2023 = vmatprep.mubr.f32.mxu0 %v1713
    %2024 = vmatmul.mubr.f32.gmra.mrb[0].mxu0 %v1887
    %v2025 = vpop.f32.mrb[0].mxu0
    %v2026 = vadd.f32 %v493, %v2025
    %v2027 = vpop.f32.mrb[0].mxu0
    %v2028 = vadd.f32 %v497, %v2027
    %2029 = vdwg.mxu0
    %v2030 = vxor.u32 %v1955, 2147483648
    %v2031 = vmul.f32 %v2030, 1.442695
    %v2032 = vpow.pop %v2031
    %v2033 = vadd.f32 %v2032, 1.0
    %v2034 = vrcp.pop %v2033
    %v2035 = vmul.f32 1.0, %v2034
    %v2036 = vxor.u32 %v1957, 2147483648
    %v2037 = vmul.f32 %v2036, 1.442695
    %v2038 = vpow.pop %v2037
    %v2039 = vadd.f32 %v2038, 1.0
    %v2040 = vrcp.pop %v2039
    %v2041 = vmul.f32 1.0, %v2040
    %v2042 = vtanh.pop %v2026
    %v2043 = vxor.u32 %v2028, 2147483648
    %v2044 = vmul.f32 %v2043, 1.442695
    %v2045 = vpow.pop %v2044
    %v2046 = vadd.f32 %v2045, 1.0
    %v2047 = vrcp.pop %v2046
    %v2048 = vmul.f32 1.0, %v2047
    %v2049 = vmul.f32 %v2041, %v1711
    %v2050 = vmul.f32 %v2035, %v2042
    %v2051 = vadd.f32 %v2049, %v2050
    %v2052 = vtanh.pop %v2051
    %v2053 = vmul.f32 %v2048, %v2052
    %v2054 = vld [vmem:[#allocation2 + $0x80] sm:$0xff]
    %v2055 = vld [vmem:[#allocation2 + $0x88] sm:$0xff]
    %v2056 = vld [vmem:[#allocation2 + $0x90] sm:$0xff]
    %v2057 = vld [vmem:[#allocation2 + $0x98] sm:$0xff]
    %2058 = vmatprep.subr.mxu0 %v507
    %2059 = vmatpush1.msra.mxu0 %v506
    %2060 = vmatprep.subr.mxu0 %v511
    %2061 = vmatpush1.msra.mxu0 %v510
    %2062 = vmatprep.subr.mxu0 %v515
    %2063 = vmatpush1.msra.mxu0 %v514
    %2064 = vmatprep.subr.mxu0 %v519
    %2065 = vmatpush1.msra.mxu0 %v518
    %2066 = vmatprep.subr.mxu0 %v523
    %2067 = vmatpush1.msra.mxu0 %v522
    %2068 = vmatprep.subr.mxu0 %v527
    %2069 = vmatpush1.msra.mxu0 %v526
    %2070 = vmatprep.subr.mxu0 %v531
    %2071 = vmatpush1.msra.mxu0 %v530
    %2072 = vmatprep.subr.mxu0 %v535
    %2073 = vmatpush1.msra.mxu0 %v534
    %2074 = vmatprep.subr.mxu0 %v539
    %2075 = vmatpush1.msra.mxu0 %v538
    %2076 = vmatprep.subr.mxu0 %v543
    %2077 = vmatpush1.msra.mxu0 %v542
    %2078 = vmatprep.subr.mxu0 %v547
    %2079 = vmatpush1.msra.mxu0 %v546
    %2080 = vmatprep.subr.mxu0 %v551
    %2081 = vmatpush1.msra.mxu0 %v550
    %2082 = vmatprep.subr.mxu0 %v555
    %2083 = vmatpush1.msra.mxu0 %v554
    %2084 = vmatprep.subr.mxu0 %v559
    %2085 = vmatpush1.msra.mxu0 %v558
    %2086 = vmatprep.subr.mxu0 %v563
    %2087 = vmatpush1.msra.mxu0 %v562
    %2088 = vmatprep.subr.mxu0 %v567
    %2089 = vmatpush1.msra.mxu0 %v566
    %2090 = vmatprep.subr.mxu0 0.0
    %2091 = vmatpush1.msra.mxu0 0.0
    %2092 = vmatprep.subr.mxu0 0.0
    %2093 = vmatpush1.msra.mxu0 0.0
    %2094 = vmatprep.subr.mxu0 0.0
    %2095 = vmatpush1.msra.mxu0 0.0
    %2096 = vmatprep.subr.mxu0 0.0
    %2097 = vmatpush1.msra.mxu0 0.0
    %2098 = vmatprep.subr.mxu0 0.0
    %2099 = vmatpush1.msra.mxu0 0.0
    %2100 = vmatprep.subr.mxu0 0.0
    %2101 = vmatpush1.msra.mxu0 0.0
    %2102 = vmatprep.subr.mxu0 0.0
    %2103 = vmatpush1.msra.mxu0 0.0
    %2104 = vmatprep.subr.mxu0 0.0
    %2105 = vmatpush1.msra.mxu0 0.0
    %2106 = vmatprep.subr.mxu0 0.0
    %2107 = vmatpush1.msra.mxu0 0.0
    %2108 = vmatprep.subr.mxu0 0.0
    %2109 = vmatpush1.msra.mxu0 0.0
    %2110 = vmatprep.subr.mxu0 0.0
    %2111 = vmatpush1.msra.mxu0 0.0
    %2112 = vmatprep.subr.mxu0 0.0
    %2113 = vmatpush1.msra.mxu0 0.0
    %2114 = vmatprep.subr.mxu0 0.0
    %2115 = vmatpush1.msra.mxu0 0.0
    %2116 = vmatprep.subr.mxu0 0.0
    %2117 = vmatpush1.msra.mxu0 0.0
    %2118 = vmatprep.subr.mxu0 0.0
    %2119 = vmatpush1.msra.mxu0 0.0
    %2120 = vmatprep.subr.mxu0 0.0
    %2121 = vmatpush1.msra.mxu0 0.0
    %2122 = vmatprep.mubr.f32.mxu0 0.0
    %2123 = vmatmul.mubr.f32.gmra.mrb[0].mxu0 %v1887
    %v2124 = vpop.f32.mrb[0].mxu0
    %v2125 = vadd.f32 0.0, %v2124
    %v2126 = vpop.f32.mrb[0].mxu0
    %v2127 = vadd.f32 0.0, %v2126
    %2128 = vdwg.mxu0
    %2129 = vmatprep.subr.mxu0 %v509
    %2130 = vmatpush1.msra.mxu0 %v508
    %2131 = vmatprep.subr.mxu0 %v513
    %2132 = vmatpush1.msra.mxu0 %v512
    %2133 = vmatprep.subr.mxu0 %v517
    %2134 = vmatpush1.msra.mxu0 %v516
    %2135 = vmatprep.subr.mxu0 %v521
    %2136 = vmatpush1.msra.mxu0 %v520
    %2137 = vmatprep.subr.mxu0 %v525
    %2138 = vmatpush1.msra.mxu0 %v524
    %2139 = vmatprep.subr.mxu0 %v529
    %2140 = vmatpush1.msra.mxu0 %v528
    %2141 = vmatprep.subr.mxu0 %v533
    %2142 = vmatpush1.msra.mxu0 %v532
    %2143 = vmatprep.subr.mxu0 %v537
    %2144 = vmatpush1.msra.mxu0 %v536
    %2145 = vmatprep.subr.mxu0 %v541
    %2146 = vmatpush1.msra.mxu0 %v540
    %2147 = vmatprep.subr.mxu0 %v545
    %2148 = vmatpush1.msra.mxu0 %v544
    %2149 = vmatprep.subr.mxu0 %v549
    %2150 = vmatpush1.msra.mxu0 %v548
    %2151 = vmatprep.subr.mxu0 %v553
    %2152 = vmatpush1.msra.mxu0 %v552
    %2153 = vmatprep.subr.mxu0 %v557
    %2154 = vmatpush1.msra.mxu0 %v556
    %2155 = vmatprep.subr.mxu0 %v561
    %2156 = vmatpush1.msra.mxu0 %v560
    %2157 = vmatprep.subr.mxu0 %v565
    %2158 = vmatpush1.msra.mxu0 %v564
    %2159 = vmatprep.subr.mxu0 %v569
    %2160 = vmatpush1.msra.mxu0 %v568
    %2161 = vmatprep.subr.mxu0 0.0
    %2162 = vmatpush1.msra.mxu0 0.0
    %2163 = vmatprep.subr.mxu0 0.0
    %2164 = vmatpush1.msra.mxu0 0.0
    %2165 = vmatprep.subr.mxu0 0.0
    %2166 = vmatpush1.msra.mxu0 0.0
    %2167 = vmatprep.subr.mxu0 0.0
    %2168 = vmatpush1.msra.mxu0 0.0
    %2169 = vmatprep.subr.mxu0 0.0
    %2170 = vmatpush1.msra.mxu0 0.0
    %2171 = vmatprep.subr.mxu0 0.0
    %2172 = vmatpush1.msra.mxu0 0.0
    %2173 = vmatprep.subr.mxu0 0.0
    %2174 = vmatpush1.msra.mxu0 0.0
    %2175 = vmatprep.subr.mxu0 0.0
    %2176 = vmatpush1.msra.mxu0 0.0
    %2177 = vmatprep.subr.mxu0 0.0
    %2178 = vmatpush1.msra.mxu0 0.0
    %2179 = vmatprep.subr.mxu0 0.0
    %2180 = vmatpush1.msra.mxu0 0.0
    %2181 = vmatprep.subr.mxu0 0.0
    %2182 = vmatpush1.msra.mxu0 0.0
    %2183 = vmatprep.subr.mxu0 0.0
    %2184 = vmatpush1.msra.mxu0 0.0
    %2185 = vmatprep.subr.mxu0 0.0
    %2186 = vmatpush1.msra.mxu0 0.0
    %2187 = vmatprep.subr.mxu0 0.0
    %2188 = vmatpush1.msra.mxu0 0.0
    %2189 = vmatprep.subr.mxu0 0.0
    %2190 = vmatpush1.msra.mxu0 0.0
    %2191 = vmatprep.subr.mxu0 0.0
    %2192 = vmatpush1.msra.mxu0 0.0
    %2193 = vmatprep.mubr.f32.mxu0 0.0
    %2194 = vmatmul.mubr.f32.gmra.mrb[0].mxu0 %v1887
    %v2195 = vpop.f32.mrb[0].mxu0
    %v2196 = vadd.f32 0.0, %v2195
    %v2197 = vpop.f32.mrb[0].mxu0
    %v2198 = vadd.f32 0.0, %v2197
    %2199 = vdwg.mxu0
    %v2200 = vadd.f32 %v2054, %v2125
    %v2201 = vadd.f32 %v2055, %v2127
    %v2202 = vadd.f32 %v2056, %v2196
    %v2203 = vadd.f32 %v2057, %v2198
    %v2204 = vxor.u32 %v2200, 2147483648
    %v2205 = vmul.f32 %v2204, 1.442695
    %v2206 = vpow.pop %v2205
    %v2207 = vadd.f32 %v2206, 1.0
    %v2208 = vrcp.pop %v2207
    %v2209 = vmul.f32 1.0, %v2208
    %v2210 = vxor.u32 %v2201, 2147483648
    %v2211 = vmul.f32 %v2210, 1.442695
    %v2212 = vpow.pop %v2211
    %v2213 = vadd.f32 %v2212, 1.0
    %v2214 = vrcp.pop %v2213
    %v2215 = vmul.f32 1.0, %v2214
    %v2216 = vtanh.pop %v2202
    %v2217 = vxor.u32 %v2203, 2147483648
    %v2218 = vmul.f32 %v2217, 1.442695
    %v2219 = vpow.pop %v2218
    %v2220 = vadd.f32 %v2219, 1.0
    %v2221 = vrcp.pop %v2220
    %v2222 = vmul.f32 1.0, %v2221
    %v2223 = vmul.f32 %v2215, %v1885
    %v2224 = vmul.f32 %v2209, %v2216
    %v2225 = vadd.f32 %v2223, %v2224
    %v2226 = vtanh.pop %v2225
    %v2227 = vmul.f32 %v2222, %v2226
    %2228 = vmatprep.subr.mxu0 %v741
    %2229 = vmatpush1.msra.mxu0 %v740
    %2230 = vmatprep.subr.mxu0 %v745
    %2231 = vmatpush1.msra.mxu0 %v744
    %2232 = vmatprep.subr.mxu0 %v749
    %2233 = vmatpush1.msra.mxu0 %v748
    %2234 = vmatprep.subr.mxu0 %v753
    %2235 = vmatpush1.msra.mxu0 %v752
    %2236 = vmatprep.subr.mxu0 %v757
    %2237 = vmatpush1.msra.mxu0 %v756
    %2238 = vmatprep.subr.mxu0 %v761
    %2239 = vmatpush1.msra.mxu0 %v760
    %2240 = vmatprep.subr.mxu0 %v765
    %2241 = vmatpush1.msra.mxu0 %v764
    %2242 = vmatprep.subr.mxu0 %v769
    %2243 = vmatpush1.msra.mxu0 %v768
    %2244 = vmatprep.subr.mxu0 %v773
    %2245 = vmatpush1.msra.mxu0 %v772
    %2246 = vmatprep.subr.mxu0 %v777
    %2247 = vmatpush1.msra.mxu0 %v776
    %2248 = vmatprep.subr.mxu0 %v781
    %2249 = vmatpush1.msra.mxu0 %v780
    %2250 = vmatprep.subr.mxu0 %v785
    %2251 = vmatpush1.msra.mxu0 %v784
    %2252 = vmatprep.subr.mxu0 %v789
    %2253 = vmatpush1.msra.mxu0 %v788
    %2254 = vmatprep.subr.mxu0 %v793
    %2255 = vmatpush1.msra.mxu0 %v792
    %2256 = vmatprep.subr.mxu0 %v797
    %2257 = vmatpush1.msra.mxu0 %v796
    %2258 = vmatprep.subr.mxu0 %v801
    %2259 = vmatpush1.msra.mxu0 %v800
    %2260 = vmatprep.subr.mxu0 %v805
    %2261 = vmatpush1.msra.mxu0 %v804
    %2262 = vmatprep.subr.mxu0 %v809
    %2263 = vmatpush1.msra.mxu0 %v808
    %2264 = vmatprep.subr.mxu0 %v813
    %2265 = vmatpush1.msra.mxu0 %v812
    %2266 = vmatprep.subr.mxu0 %v817
    %2267 = vmatpush1.msra.mxu0 %v816
    %2268 = vmatprep.subr.mxu0 %v821
    %2269 = vmatpush1.msra.mxu0 %v820
    %2270 = vmatprep.subr.mxu0 %v825
    %2271 = vmatpush1.msra.mxu0 %v824
    %2272 = vmatprep.subr.mxu0 %v829
    %2273 = vmatpush1.msra.mxu0 %v828
    %2274 = vmatprep.subr.mxu0 %v833
    %2275 = vmatpush1.msra.mxu0 %v832
    %2276 = vmatprep.subr.mxu0 %v837
    %2277 = vmatpush1.msra.mxu0 %v836
    %2278 = vmatprep.subr.mxu0 %v841
    %2279 = vmatpush1.msra.mxu0 %v840
    %2280 = vmatprep.subr.mxu0 %v845
    %2281 = vmatpush1.msra.mxu0 %v844
    %2282 = vmatprep.subr.mxu0 %v849
    %2283 = vmatpush1.msra.mxu0 %v848
    %2284 = vmatprep.subr.mxu0 %v853
    %2285 = vmatpush1.msra.mxu0 %v852
    %2286 = vmatprep.subr.mxu0 %v857
    %2287 = vmatpush1.msra.mxu0 %v856
    %2288 = vmatprep.subr.mxu0 %v861
    %2289 = vmatpush1.msra.mxu0 %v860
    %2290 = vmatprep.subr.mxu0 %v865
    %2291 = vmatpush1.msra.mxu0 %v864
    %2292 = vmatprep.mubr.f32.mxu0 %v2053
    %2293 = vmatmul.mubr.f32.gmra.mrb[0].mxu0 %v2227
    %v2294 = vpop.f32.mrb[0].mxu0
    %v2295 = vadd.f32 %v485, %v2294
    %v2296 = vpop.f32.mrb[0].mxu0
    %v2297 = vadd.f32 %v489, %v2296
    %2298 = vdwg.mxu0
    %2299 = vmatprep.subr.mxu0 %v743
    %2300 = vmatpush1.msra.mxu0 %v742
    %2301 = vmatprep.subr.mxu0 %v747
    %2302 = vmatpush1.msra.mxu0 %v746
    %2303 = vmatprep.subr.mxu0 %v751
    %2304 = vmatpush1.msra.mxu0 %v750
    %2305 = vmatprep.subr.mxu0 %v755
    %2306 = vmatpush1.msra.mxu0 %v754
    %2307 = vmatprep.subr.mxu0 %v759
    %2308 = vmatpush1.msra.mxu0 %v758
    %2309 = vmatprep.subr.mxu0 %v763
    %2310 = vmatpush1.msra.mxu0 %v762
    %2311 = vmatprep.subr.mxu0 %v767
    %2312 = vmatpush1.msra.mxu0 %v766
    %2313 = vmatprep.subr.mxu0 %v771
    %2314 = vmatpush1.msra.mxu0 %v770
    %2315 = vmatprep.subr.mxu0 %v775
    %2316 = vmatpush1.msra.mxu0 %v774
    %2317 = vmatprep.subr.mxu0 %v779
    %2318 = vmatpush1.msra.mxu0 %v778
    %2319 = vmatprep.subr.mxu0 %v783
    %2320 = vmatpush1.msra.mxu0 %v782
    %2321 = vmatprep.subr.mxu0 %v787
    %2322 = vmatpush1.msra.mxu0 %v786
    %2323 = vmatprep.subr.mxu0 %v791
    %2324 = vmatpush1.msra.mxu0 %v790
    %2325 = vmatprep.subr.mxu0 %v795
    %2326 = vmatpush1.msra.mxu0 %v794
    %2327 = vmatprep.subr.mxu0 %v799
    %2328 = vmatpush1.msra.mxu0 %v798
    %2329 = vmatprep.subr.mxu0 %v803
    %2330 = vmatpush1.msra.mxu0 %v802
    %2331 = vmatprep.subr.mxu0 %v807
    %2332 = vmatpush1.msra.mxu0 %v806
    %2333 = vmatprep.subr.mxu0 %v811
    %2334 = vmatpush1.msra.mxu0 %v810
    %2335 = vmatprep.subr.mxu0 %v815
    %2336 = vmatpush1.msra.mxu0 %v814
    %2337 = vmatprep.subr.mxu0 %v819
    %2338 = vmatpush1.msra.mxu0 %v818
    %2339 = vmatprep.subr.mxu0 %v823
    %2340 = vmatpush1.msra.mxu0 %v822
    %2341 = vmatprep.subr.mxu0 %v827
    %2342 = vmatpush1.msra.mxu0 %v826
    %2343 = vmatprep.subr.mxu0 %v831
    %2344 = vmatpush1.msra.mxu0 %v830
    %2345 = vmatprep.subr.mxu0 %v835
    %2346 = vmatpush1.msra.mxu0 %v834
    %2347 = vmatprep.subr.mxu0 %v839
    %2348 = vmatpush1.msra.mxu0 %v838
    %2349 = vmatprep.subr.mxu0 %v843
    %2350 = vmatpush1.msra.mxu0 %v842
    %2351 = vmatprep.subr.mxu0 %v847
    %2352 = vmatpush1.msra.mxu0 %v846
    %2353 = vmatprep.subr.mxu0 %v851
    %2354 = vmatpush1.msra.mxu0 %v850
    %2355 = vmatprep.subr.mxu0 %v855
    %2356 = vmatpush1.msra.mxu0 %v854
    %2357 = vmatprep.subr.mxu0 %v859
    %2358 = vmatpush1.msra.mxu0 %v858
    %2359 = vmatprep.subr.mxu0 %v863
    %2360 = vmatpush1.msra.mxu0 %v862
    %2361 = vmatprep.subr.mxu0 %v867
    %2362 = vmatpush1.msra.mxu0 %v866
    %2363 = vmatprep.mubr.f32.mxu0 %v2053
    %2364 = vmatmul.mubr.f32.gmra.mrb[0].mxu0 %v2227
    %v2365 = vpop.f32.mrb[0].mxu0
    %v2366 = vadd.f32 %v493, %v2365
    %v2367 = vpop.f32.mrb[0].mxu0
    %v2368 = vadd.f32 %v497, %v2367
    %2369 = vdwg.mxu0
    %v2370 = vxor.u32 %v2295, 2147483648
    %v2371 = vmul.f32 %v2370, 1.442695
    %v2372 = vpow.pop %v2371
    %v2373 = vadd.f32 %v2372, 1.0
    %v2374 = vrcp.pop %v2373
    %v2375 = vmul.f32 1.0, %v2374
    %v2376 = vxor.u32 %v2297, 2147483648
    %v2377 = vmul.f32 %v2376, 1.442695
    %v2378 = vpow.pop %v2377
    %v2379 = vadd.f32 %v2378, 1.0
    %v2380 = vrcp.pop %v2379
    %v2381 = vmul.f32 1.0, %v2380
    %v2382 = vtanh.pop %v2366
    %v2383 = vxor.u32 %v2368, 2147483648
    %v2384 = vmul.f32 %v2383, 1.442695
    %v2385 = vpow.pop %v2384
    %v2386 = vadd.f32 %v2385, 1.0
    %v2387 = vrcp.pop %v2386
    %v2388 = vmul.f32 1.0, %v2387
    %v2389 = vmul.f32 %v2381, %v2051
    %v2390 = vmul.f32 %v2375, %v2382
    %v2391 = vadd.f32 %v2389, %v2390
    %v2392 = vtanh.pop %v2391
    %v2393 = vmul.f32 %v2388, %v2392
    %v2394 = vld [vmem:[#allocation2 + $0xa0] sm:$0xff]
    %v2395 = vld [vmem:[#allocation2 + $0xa8] sm:$0xff]
    %v2396 = vld [vmem:[#allocation2 + $0xb0] sm:$0xff]
    %v2397 = vld [vmem:[#allocation2 + $0xb8] sm:$0xff]
    %2398 = vmatprep.subr.mxu0 %v507
    %2399 = vmatpush1.msra.mxu0 %v506
    %2400 = vmatprep.subr.mxu0 %v511
    %2401 = vmatpush1.msra.mxu0 %v510
    %2402 = vmatprep.subr.mxu0 %v515
    %2403 = vmatpush1.msra.mxu0 %v514
    %2404 = vmatprep.subr.mxu0 %v519
    %2405 = vmatpush1.msra.mxu0 %v518
    %2406 = vmatprep.subr.mxu0 %v523
    %2407 = vmatpush1.msra.mxu0 %v522
    %2408 = vmatprep.subr.mxu0 %v527
    %2409 = vmatpush1.msra.mxu0 %v526
    %2410 = vmatprep.subr.mxu0 %v531
    %2411 = vmatpush1.msra.mxu0 %v530
    %2412 = vmatprep.subr.mxu0 %v535
    %2413 = vmatpush1.msra.mxu0 %v534
    %2414 = vmatprep.subr.mxu0 %v539
    %2415 = vmatpush1.msra.mxu0 %v538
    %2416 = vmatprep.subr.mxu0 %v543
    %2417 = vmatpush1.msra.mxu0 %v542
    %2418 = vmatprep.subr.mxu0 %v547
    %2419 = vmatpush1.msra.mxu0 %v546
    %2420 = vmatprep.subr.mxu0 %v551
    %2421 = vmatpush1.msra.mxu0 %v550
    %2422 = vmatprep.subr.mxu0 %v555
    %2423 = vmatpush1.msra.mxu0 %v554
    %2424 = vmatprep.subr.mxu0 %v559
    %2425 = vmatpush1.msra.mxu0 %v558
    %2426 = vmatprep.subr.mxu0 %v563
    %2427 = vmatpush1.msra.mxu0 %v562
    %2428 = vmatprep.subr.mxu0 %v567
    %2429 = vmatpush1.msra.mxu0 %v566
    %2430 = vmatprep.subr.mxu0 0.0
    %2431 = vmatpush1.msra.mxu0 0.0
    %2432 = vmatprep.subr.mxu0 0.0
    %2433 = vmatpush1.msra.mxu0 0.0
    %2434 = vmatprep.subr.mxu0 0.0
    %2435 = vmatpush1.msra.mxu0 0.0
    %2436 = vmatprep.subr.mxu0 0.0
    %2437 = vmatpush1.msra.mxu0 0.0
    %2438 = vmatprep.subr.mxu0 0.0
    %2439 = vmatpush1.msra.mxu0 0.0
    %2440 = vmatprep.subr.mxu0 0.0
    %2441 = vmatpush1.msra.mxu0 0.0
    %2442 = vmatprep.subr.mxu0 0.0
    %2443 = vmatpush1.msra.mxu0 0.0
    %2444 = vmatprep.subr.mxu0 0.0
    %2445 = vmatpush1.msra.mxu0 0.0
    %2446 = vmatprep.subr.mxu0 0.0
    %2447 = vmatpush1.msra.mxu0 0.0
    %2448 = vmatprep.subr.mxu0 0.0
    %2449 = vmatpush1.msra.mxu0 0.0
    %2450 = vmatprep.subr.mxu0 0.0
    %2451 = vmatpush1.msra.mxu0 0.0
    %2452 = vmatprep.subr.mxu0 0.0
    %2453 = vmatpush1.msra.mxu0 0.0
    %2454 = vmatprep.subr.mxu0 0.0
    %2455 = vmatpush1.msra.mxu0 0.0
    %2456 = vmatprep.subr.mxu0 0.0
    %2457 = vmatpush1.msra.mxu0 0.0
    %2458 = vmatprep.subr.mxu0 0.0
    %2459 = vmatpush1.msra.mxu0 0.0
    %2460 = vmatprep.subr.mxu0 0.0
    %2461 = vmatpush1.msra.mxu0 0.0
    %2462 = vmatprep.mubr.f32.mxu0 0.0
    %2463 = vmatmul.mubr.f32.gmra.mrb[0].mxu0 %v2227
    %v2464 = vpop.f32.mrb[0].mxu0
    %v2465 = vadd.f32 0.0, %v2464
    %v2466 = vpop.f32.mrb[0].mxu0
    %v2467 = vadd.f32 0.0, %v2466
    %2468 = vdwg.mxu0
    %2469 = vmatprep.subr.mxu0 %v509
    %2470 = vmatpush1.msra.mxu0 %v508
    %2471 = vmatprep.subr.mxu0 %v513
    %2472 = vmatpush1.msra.mxu0 %v512
    %2473 = vmatprep.subr.mxu0 %v517
    %2474 = vmatpush1.msra.mxu0 %v516
    %2475 = vmatprep.subr.mxu0 %v521
    %2476 = vmatpush1.msra.mxu0 %v520
    %2477 = vmatprep.subr.mxu0 %v525
    %2478 = vmatpush1.msra.mxu0 %v524
    %2479 = vmatprep.subr.mxu0 %v529
    %2480 = vmatpush1.msra.mxu0 %v528
    %2481 = vmatprep.subr.mxu0 %v533
    %2482 = vmatpush1.msra.mxu0 %v532
    %2483 = vmatprep.subr.mxu0 %v537
    %2484 = vmatpush1.msra.mxu0 %v536
    %2485 = vmatprep.subr.mxu0 %v541
    %2486 = vmatpush1.msra.mxu0 %v540
    %2487 = vmatprep.subr.mxu0 %v545
    %2488 = vmatpush1.msra.mxu0 %v544
    %2489 = vmatprep.subr.mxu0 %v549
    %2490 = vmatpush1.msra.mxu0 %v548
    %2491 = vmatprep.subr.mxu0 %v553
    %2492 = vmatpush1.msra.mxu0 %v552
    %2493 = vmatprep.subr.mxu0 %v557
    %2494 = vmatpush1.msra.mxu0 %v556
    %2495 = vmatprep.subr.mxu0 %v561
    %2496 = vmatpush1.msra.mxu0 %v560
    %2497 = vmatprep.subr.mxu0 %v565
    %2498 = vmatpush1.msra.mxu0 %v564
    %2499 = vmatprep.subr.mxu0 %v569
    %2500 = vmatpush1.msra.mxu0 %v568
    %2501 = vmatprep.subr.mxu0 0.0
    %2502 = vmatpush1.msra.mxu0 0.0
    %2503 = vmatprep.subr.mxu0 0.0
    %2504 = vmatpush1.msra.mxu0 0.0
    %2505 = vmatprep.subr.mxu0 0.0
    %2506 = vmatpush1.msra.mxu0 0.0
    %2507 = vmatprep.subr.mxu0 0.0
    %2508 = vmatpush1.msra.mxu0 0.0
    %2509 = vmatprep.subr.mxu0 0.0
    %2510 = vmatpush1.msra.mxu0 0.0
    %2511 = vmatprep.subr.mxu0 0.0
    %2512 = vmatpush1.msra.mxu0 0.0
    %2513 = vmatprep.subr.mxu0 0.0
    %2514 = vmatpush1.msra.mxu0 0.0
    %2515 = vmatprep.subr.mxu0 0.0
    %2516 = vmatpush1.msra.mxu0 0.0
    %2517 = vmatprep.subr.mxu0 0.0
    %2518 = vmatpush1.msra.mxu0 0.0
    %2519 = vmatprep.subr.mxu0 0.0
    %2520 = vmatpush1.msra.mxu0 0.0
    %2521 = vmatprep.subr.mxu0 0.0
    %2522 = vmatpush1.msra.mxu0 0.0
    %2523 = vmatprep.subr.mxu0 0.0
    %2524 = vmatpush1.msra.mxu0 0.0
    %2525 = vmatprep.subr.mxu0 0.0
    %2526 = vmatpush1.msra.mxu0 0.0
    %2527 = vmatprep.subr.mxu0 0.0
    %2528 = vmatpush1.msra.mxu0 0.0
    %2529 = vmatprep.subr.mxu0 0.0
    %2530 = vmatpush1.msra.mxu0 0.0
    %2531 = vmatprep.subr.mxu0 0.0
    %2532 = vmatpush1.msra.mxu0 0.0
    %2533 = vmatprep.mubr.f32.mxu0 0.0
    %2534 = vmatmul.mubr.f32.gmra.mrb[0].mxu0 %v2227
    %v2535 = vpop.f32.mrb[0].mxu0
    %v2536 = vadd.f32 0.0, %v2535
    %v2537 = vpop.f32.mrb[0].mxu0
    %v2538 = vadd.f32 0.0, %v2537
    %2539 = vdwg.mxu0
    %v2540 = vadd.f32 %v2394, %v2465
    %v2541 = vadd.f32 %v2395, %v2467
    %v2542 = vadd.f32 %v2396, %v2536
    %v2543 = vadd.f32 %v2397, %v2538
    %v2544 = vxor.u32 %v2540, 2147483648
    %v2545 = vmul.f32 %v2544, 1.442695
    %v2546 = vpow.pop %v2545
    %v2547 = vadd.f32 %v2546, 1.0
    %v2548 = vrcp.pop %v2547
    %v2549 = vmul.f32 1.0, %v2548
    %v2550 = vxor.u32 %v2541, 2147483648
    %v2551 = vmul.f32 %v2550, 1.442695
    %v2552 = vpow.pop %v2551
    %v2553 = vadd.f32 %v2552, 1.0
    %v2554 = vrcp.pop %v2553
    %v2555 = vmul.f32 1.0, %v2554
    %v2556 = vtanh.pop %v2542
    %v2557 = vxor.u32 %v2543, 2147483648
    %v2558 = vmul.f32 %v2557, 1.442695
    %v2559 = vpow.pop %v2558
    %v2560 = vadd.f32 %v2559, 1.0
    %v2561 = vrcp.pop %v2560
    %v2562 = vmul.f32 1.0, %v2561
    %v2563 = vmul.f32 %v2555, %v2225
    %v2564 = vmul.f32 %v2549, %v2556
    %v2565 = vadd.f32 %v2563, %v2564
    %v2566 = vtanh.pop %v2565
    %v2567 = vmul.f32 %v2562, %v2566
    %2568 = vmatprep.subr.mxu0 %v741
    %2569 = vmatpush1.msra.mxu0 %v740
    %2570 = vmatprep.subr.mxu0 %v745
    %2571 = vmatpush1.msra.mxu0 %v744
    %2572 = vmatprep.subr.mxu0 %v749
    %2573 = vmatpush1.msra.mxu0 %v748
    %2574 = vmatprep.subr.mxu0 %v753
    %2575 = vmatpush1.msra.mxu0 %v752
    %2576 = vmatprep.subr.mxu0 %v757
    %2577 = vmatpush1.msra.mxu0 %v756
    %2578 = vmatprep.subr.mxu0 %v761
    %2579 = vmatpush1.msra.mxu0 %v760
    %2580 = vmatprep.subr.mxu0 %v765
    %2581 = vmatpush1.msra.mxu0 %v764
    %2582 = vmatprep.subr.mxu0 %v769
    %2583 = vmatpush1.msra.mxu0 %v768
    %2584 = vmatprep.subr.mxu0 %v773
    %2585 = vmatpush1.msra.mxu0 %v772
    %2586 = vmatprep.subr.mxu0 %v777
    %2587 = vmatpush1.msra.mxu0 %v776
    %2588 = vmatprep.subr.mxu0 %v781
    %2589 = vmatpush1.msra.mxu0 %v780
    %2590 = vmatprep.subr.mxu0 %v785
    %2591 = vmatpush1.msra.mxu0 %v784
    %2592 = vmatprep.subr.mxu0 %v789
    %2593 = vmatpush1.msra.mxu0 %v788
    %2594 = vmatprep.subr.mxu0 %v793
    %2595 = vmatpush1.msra.mxu0 %v792
    %2596 = vmatprep.subr.mxu0 %v797
    %2597 = vmatpush1.msra.mxu0 %v796
    %2598 = vmatprep.subr.mxu0 %v801
    %2599 = vmatpush1.msra.mxu0 %v800
    %2600 = vmatprep.subr.mxu0 %v805
    %2601 = vmatpush1.msra.mxu0 %v804
    %2602 = vmatprep.subr.mxu0 %v809
    %2603 = vmatpush1.msra.mxu0 %v808
    %2604 = vmatprep.subr.mxu0 %v813
    %2605 = vmatpush1.msra.mxu0 %v812
    %2606 = vmatprep.subr.mxu0 %v817
    %2607 = vmatpush1.msra.mxu0 %v816
    %2608 = vmatprep.subr.mxu0 %v821
    %2609 = vmatpush1.msra.mxu0 %v820
    %2610 = vmatprep.subr.mxu0 %v825
    %2611 = vmatpush1.msra.mxu0 %v824
    %2612 = vmatprep.subr.mxu0 %v829
    %2613 = vmatpush1.msra.mxu0 %v828
    %2614 = vmatprep.subr.mxu0 %v833
    %2615 = vmatpush1.msra.mxu0 %v832
    %2616 = vmatprep.subr.mxu0 %v837
    %2617 = vmatpush1.msra.mxu0 %v836
    %2618 = vmatprep.subr.mxu0 %v841
    %2619 = vmatpush1.msra.mxu0 %v840
    %2620 = vmatprep.subr.mxu0 %v845
    %2621 = vmatpush1.msra.mxu0 %v844
    %2622 = vmatprep.subr.mxu0 %v849
    %2623 = vmatpush1.msra.mxu0 %v848
    %2624 = vmatprep.subr.mxu0 %v853
    %2625 = vmatpush1.msra.mxu0 %v852
    %2626 = vmatprep.subr.mxu0 %v857
    %2627 = vmatpush1.msra.mxu0 %v856
    %2628 = vmatprep.subr.mxu0 %v861
    %2629 = vmatpush1.msra.mxu0 %v860
    %2630 = vmatprep.subr.mxu0 %v865
    %2631 = vmatpush1.msra.mxu0 %v864
    %2632 = vmatprep.mubr.f32.mxu0 %v2393
    %2633 = vmatmul.mubr.f32.gmra.mrb[0].mxu0 %v2567
    %v2634 = vpop.f32.mrb[0].mxu0
    %v2635 = vadd.f32 %v485, %v2634
    %v2636 = vpop.f32.mrb[0].mxu0
    %v2637 = vadd.f32 %v489, %v2636
    %2638 = vdwg.mxu0
    %2639 = vmatprep.subr.mxu0 %v743
    %2640 = vmatpush1.msra.mxu0 %v742
    %2641 = vmatprep.subr.mxu0 %v747
    %2642 = vmatpush1.msra.mxu0 %v746
    %2643 = vmatprep.subr.mxu0 %v751
    %2644 = vmatpush1.msra.mxu0 %v750
    %2645 = vmatprep.subr.mxu0 %v755
    %2646 = vmatpush1.msra.mxu0 %v754
    %2647 = vmatprep.subr.mxu0 %v759
    %2648 = vmatpush1.msra.mxu0 %v758
    %2649 = vmatprep.subr.mxu0 %v763
    %2650 = vmatpush1.msra.mxu0 %v762
    %2651 = vmatprep.subr.mxu0 %v767
    %2652 = vmatpush1.msra.mxu0 %v766
    %2653 = vmatprep.subr.mxu0 %v771
    %2654 = vmatpush1.msra.mxu0 %v770
    %2655 = vmatprep.subr.mxu0 %v775
    %2656 = vmatpush1.msra.mxu0 %v774
    %2657 = vmatprep.subr.mxu0 %v779
    %2658 = vmatpush1.msra.mxu0 %v778
    %2659 = vmatprep.subr.mxu0 %v783
    %2660 = vmatpush1.msra.mxu0 %v782
    %2661 = vmatprep.subr.mxu0 %v787
    %2662 = vmatpush1.msra.mxu0 %v786
    %2663 = vmatprep.subr.mxu0 %v791
    %2664 = vmatpush1.msra.mxu0 %v790
    %2665 = vmatprep.subr.mxu0 %v795
    %2666 = vmatpush1.msra.mxu0 %v794
    %2667 = vmatprep.subr.mxu0 %v799
    %2668 = vmatpush1.msra.mxu0 %v798
    %2669 = vmatprep.subr.mxu0 %v803
    %2670 = vmatpush1.msra.mxu0 %v802
    %2671 = vmatprep.subr.mxu0 %v807
    %2672 = vmatpush1.msra.mxu0 %v806
    %2673 = vmatprep.subr.mxu0 %v811
    %2674 = vmatpush1.msra.mxu0 %v810
    %2675 = vmatprep.subr.mxu0 %v815
    %2676 = vmatpush1.msra.mxu0 %v814
    %2677 = vmatprep.subr.mxu0 %v819
    %2678 = vmatpush1.msra.mxu0 %v818
    %2679 = vmatprep.subr.mxu0 %v823
    %2680 = vmatpush1.msra.mxu0 %v822
    %2681 = vmatprep.subr.mxu0 %v827
    %2682 = vmatpush1.msra.mxu0 %v826
    %2683 = vmatprep.subr.mxu0 %v831
    %2684 = vmatpush1.msra.mxu0 %v830
    %2685 = vmatprep.subr.mxu0 %v835
    %2686 = vmatpush1.msra.mxu0 %v834
    %2687 = vmatprep.subr.mxu0 %v839
    %2688 = vmatpush1.msra.mxu0 %v838
    %2689 = vmatprep.subr.mxu0 %v843
    %2690 = vmatpush1.msra.mxu0 %v842
    %2691 = vmatprep.subr.mxu0 %v847
    %2692 = vmatpush1.msra.mxu0 %v846
    %2693 = vmatprep.subr.mxu0 %v851
    %2694 = vmatpush1.msra.mxu0 %v850
    %2695 = vmatprep.subr.mxu0 %v855
    %2696 = vmatpush1.msra.mxu0 %v854
    %2697 = vmatprep.subr.mxu0 %v859
    %2698 = vmatpush1.msra.mxu0 %v858
    %2699 = vmatprep.subr.mxu0 %v863
    %2700 = vmatpush1.msra.mxu0 %v862
    %2701 = vmatprep.subr.mxu0 %v867
    %2702 = vmatpush1.msra.mxu0 %v866
    %2703 = vmatprep.mubr.f32.mxu0 %v2393
    %2704 = vmatmul.mubr.f32.gmra.mrb[0].mxu0 %v2567
    %v2705 = vpop.f32.mrb[0].mxu0
    %v2706 = vadd.f32 %v493, %v2705
    %v2707 = vpop.f32.mrb[0].mxu0
    %v2708 = vadd.f32 %v497, %v2707
    %2709 = vdwg.mxu0
    %v2710 = vxor.u32 %v2635, 2147483648
    %v2711 = vmul.f32 %v2710, 1.442695
    %v2712 = vpow.pop %v2711
    %v2713 = vadd.f32 %v2712, 1.0
    %v2714 = vrcp.pop %v2713
    %v2715 = vmul.f32 1.0, %v2714
    %v2716 = vxor.u32 %v2637, 2147483648
    %v2717 = vmul.f32 %v2716, 1.442695
    %v2718 = vpow.pop %v2717
    %v2719 = vadd.f32 %v2718, 1.0
    %v2720 = vrcp.pop %v2719
    %v2721 = vmul.f32 1.0, %v2720
    %v2722 = vtanh.pop %v2706
    %v2723 = vxor.u32 %v2708, 2147483648
    %v2724 = vmul.f32 %v2723, 1.442695
    %v2725 = vpow.pop %v2724
    %v2726 = vadd.f32 %v2725, 1.0
    %v2727 = vrcp.pop %v2726
    %v2728 = vmul.f32 1.0, %v2727
    %v2729 = vmul.f32 %v2721, %v2391
    %v2730 = vmul.f32 %v2715, %v2722
    %v2731 = vadd.f32 %v2729, %v2730
    %v2732 = vtanh.pop %v2731
    %v2733 = vmul.f32 %v2728, %v2732
    %v2734 = vld [vmem:[#allocation2 + $0xc0] sm:$0xff]
    %v2735 = vld [vmem:[#allocation2 + $0xc8] sm:$0xff]
    %v2736 = vld [vmem:[#allocation2 + $0xd0] sm:$0xff]
    %v2737 = vld [vmem:[#allocation2 + $0xd8] sm:$0xff]
    %2738 = vmatprep.subr.mxu0 %v507
    %2739 = vmatpush1.msra.mxu0 %v506
    %2740 = vmatprep.subr.mxu0 %v511
    %2741 = vmatpush1.msra.mxu0 %v510
    %2742 = vmatprep.subr.mxu0 %v515
    %2743 = vmatpush1.msra.mxu0 %v514
    %2744 = vmatprep.subr.mxu0 %v519
    %2745 = vmatpush1.msra.mxu0 %v518
    %2746 = vmatprep.subr.mxu0 %v523
    %2747 = vmatpush1.msra.mxu0 %v522
    %2748 = vmatprep.subr.mxu0 %v527
    %2749 = vmatpush1.msra.mxu0 %v526
    %2750 = vmatprep.subr.mxu0 %v531
    %2751 = vmatpush1.msra.mxu0 %v530
    %2752 = vmatprep.subr.mxu0 %v535
    %2753 = vmatpush1.msra.mxu0 %v534
    %2754 = vmatprep.subr.mxu0 %v539
    %2755 = vmatpush1.msra.mxu0 %v538
    %2756 = vmatprep.subr.mxu0 %v543
    %2757 = vmatpush1.msra.mxu0 %v542
    %2758 = vmatprep.subr.mxu0 %v547
    %2759 = vmatpush1.msra.mxu0 %v546
    %2760 = vmatprep.subr.mxu0 %v551
    %2761 = vmatpush1.msra.mxu0 %v550
    %2762 = vmatprep.subr.mxu0 %v555
    %2763 = vmatpush1.msra.mxu0 %v554
    %2764 = vmatprep.subr.mxu0 %v559
    %2765 = vmatpush1.msra.mxu0 %v558
    %2766 = vmatprep.subr.mxu0 %v563
    %2767 = vmatpush1.msra.mxu0 %v562
    %2768 = vmatprep.subr.mxu0 %v567
    %2769 = vmatpush1.msra.mxu0 %v566
    %2770 = vmatprep.subr.mxu0 0.0
    %2771 = vmatpush1.msra.mxu0 0.0
    %2772 = vmatprep.subr.mxu0 0.0
    %2773 = vmatpush1.msra.mxu0 0.0
    %2774 = vmatprep.subr.mxu0 0.0
    %2775 = vmatpush1.msra.mxu0 0.0
    %2776 = vmatprep.subr.mxu0 0.0
    %2777 = vmatpush1.msra.mxu0 0.0
    %2778 = vmatprep.subr.mxu0 0.0
    %2779 = vmatpush1.msra.mxu0 0.0
    %2780 = vmatprep.subr.mxu0 0.0
    %2781 = vmatpush1.msra.mxu0 0.0
    %2782 = vmatprep.subr.mxu0 0.0
    %2783 = vmatpush1.msra.mxu0 0.0
    %2784 = vmatprep.subr.mxu0 0.0
    %2785 = vmatpush1.msra.mxu0 0.0
    %2786 = vmatprep.subr.mxu0 0.0
    %2787 = vmatpush1.msra.mxu0 0.0
    %2788 = vmatprep.subr.mxu0 0.0
    %2789 = vmatpush1.msra.mxu0 0.0
    %2790 = vmatprep.subr.mxu0 0.0
    %2791 = vmatpush1.msra.mxu0 0.0
    %2792 = vmatprep.subr.mxu0 0.0
    %2793 = vmatpush1.msra.mxu0 0.0
    %2794 = vmatprep.subr.mxu0 0.0
    %2795 = vmatpush1.msra.mxu0 0.0
    %2796 = vmatprep.subr.mxu0 0.0
    %2797 = vmatpush1.msra.mxu0 0.0
    %2798 = vmatprep.subr.mxu0 0.0
    %2799 = vmatpush1.msra.mxu0 0.0
    %2800 = vmatprep.subr.mxu0 0.0
    %2801 = vmatpush1.msra.mxu0 0.0
    %2802 = vmatprep.mubr.f32.mxu0 0.0
    %2803 = vmatmul.mubr.f32.gmra.mrb[0].mxu0 %v2567
    %v2804 = vpop.f32.mrb[0].mxu0
    %v2805 = vadd.f32 0.0, %v2804
    %v2806 = vpop.f32.mrb[0].mxu0
    %v2807 = vadd.f32 0.0, %v2806
    %2808 = vdwg.mxu0
    %2809 = vmatprep.subr.mxu0 %v509
    %2810 = vmatpush1.msra.mxu0 %v508
    %2811 = vmatprep.subr.mxu0 %v513
    %2812 = vmatpush1.msra.mxu0 %v512
    %2813 = vmatprep.subr.mxu0 %v517
    %2814 = vmatpush1.msra.mxu0 %v516
    %2815 = vmatprep.subr.mxu0 %v521
    %2816 = vmatpush1.msra.mxu0 %v520
    %2817 = vmatprep.subr.mxu0 %v525
    %2818 = vmatpush1.msra.mxu0 %v524
    %2819 = vmatprep.subr.mxu0 %v529
    %2820 = vmatpush1.msra.mxu0 %v528
    %2821 = vmatprep.subr.mxu0 %v533
    %2822 = vmatpush1.msra.mxu0 %v532
    %2823 = vmatprep.subr.mxu0 %v537
    %2824 = vmatpush1.msra.mxu0 %v536
    %2825 = vmatprep.subr.mxu0 %v541
    %2826 = vmatpush1.msra.mxu0 %v540
    %2827 = vmatprep.subr.mxu0 %v545
    %2828 = vmatpush1.msra.mxu0 %v544
    %2829 = vmatprep.subr.mxu0 %v549
    %2830 = vmatpush1.msra.mxu0 %v548
    %2831 = vmatprep.subr.mxu0 %v553
    %2832 = vmatpush1.msra.mxu0 %v552
    %2833 = vmatprep.subr.mxu0 %v557
    %2834 = vmatpush1.msra.mxu0 %v556
    %2835 = vmatprep.subr.mxu0 %v561
    %2836 = vmatpush1.msra.mxu0 %v560
    %2837 = vmatprep.subr.mxu0 %v565
    %2838 = vmatpush1.msra.mxu0 %v564
    %2839 = vmatprep.subr.mxu0 %v569
    %2840 = vmatpush1.msra.mxu0 %v568
    %2841 = vmatprep.subr.mxu0 0.0
    %2842 = vmatpush1.msra.mxu0 0.0
    %2843 = vmatprep.subr.mxu0 0.0
    %2844 = vmatpush1.msra.mxu0 0.0
    %2845 = vmatprep.subr.mxu0 0.0
    %2846 = vmatpush1.msra.mxu0 0.0
    %2847 = vmatprep.subr.mxu0 0.0
    %2848 = vmatpush1.msra.mxu0 0.0
    %2849 = vmatprep.subr.mxu0 0.0
    %2850 = vmatpush1.msra.mxu0 0.0
    %2851 = vmatprep.subr.mxu0 0.0
    %2852 = vmatpush1.msra.mxu0 0.0
    %2853 = vmatprep.subr.mxu0 0.0
    %2854 = vmatpush1.msra.mxu0 0.0
    %2855 = vmatprep.subr.mxu0 0.0
    %2856 = vmatpush1.msra.mxu0 0.0
    %2857 = vmatprep.subr.mxu0 0.0
    %2858 = vmatpush1.msra.mxu0 0.0
    %2859 = vmatprep.subr.mxu0 0.0
    %2860 = vmatpush1.msra.mxu0 0.0
    %2861 = vmatprep.subr.mxu0 0.0
    %2862 = vmatpush1.msra.mxu0 0.0
    %2863 = vmatprep.subr.mxu0 0.0
    %2864 = vmatpush1.msra.mxu0 0.0
    %2865 = vmatprep.subr.mxu0 0.0
    %2866 = vmatpush1.msra.mxu0 0.0
    %2867 = vmatprep.subr.mxu0 0.0
    %2868 = vmatpush1.msra.mxu0 0.0
    %2869 = vmatprep.subr.mxu0 0.0
    %2870 = vmatpush1.msra.mxu0 0.0
    %2871 = vmatprep.subr.mxu0 0.0
    %2872 = vmatpush1.msra.mxu0 0.0
    %2873 = vmatprep.mubr.f32.mxu0 0.0
    %2874 = vmatmul.mubr.f32.gmra.mrb[0].mxu0 %v2567
    %v2875 = vpop.f32.mrb[0].mxu0
    %v2876 = vadd.f32 0.0, %v2875
    %v2877 = vpop.f32.mrb[0].mxu0
    %v2878 = vadd.f32 0.0, %v2877
    %2879 = vdwg.mxu0
    %v2880 = vadd.f32 %v2734, %v2805
    %v2881 = vadd.f32 %v2735, %v2807
    %v2882 = vadd.f32 %v2736, %v2876
    %v2883 = vadd.f32 %v2737, %v2878
    %v2884 = vxor.u32 %v2880, 2147483648
    %v2885 = vmul.f32 %v2884, 1.442695
    %v2886 = vpow.pop %v2885
    %v2887 = vadd.f32 %v2886, 1.0
    %v2888 = vrcp.pop %v2887
    %v2889 = vmul.f32 1.0, %v2888
    %v2890 = vxor.u32 %v2881, 2147483648
    %v2891 = vmul.f32 %v2890, 1.442695
    %v2892 = vpow.pop %v2891
    %v2893 = vadd.f32 %v2892, 1.0
    %v2894 = vrcp.pop %v2893
    %v2895 = vmul.f32 1.0, %v2894
    %v2896 = vtanh.pop %v2882
    %v2897 = vxor.u32 %v2883, 2147483648
    %v2898 = vmul.f32 %v2897, 1.442695
    %v2899 = vpow.pop %v2898
    %v2900 = vadd.f32 %v2899, 1.0
    %v2901 = vrcp.pop %v2900
    %v2902 = vmul.f32 1.0, %v2901
    %v2903 = vmul.f32 %v2895, %v2565
    %v2904 = vmul.f32 %v2889, %v2896
    %v2905 = vadd.f32 %v2903, %v2904
    %v2906 = vtanh.pop %v2905
    %v2907 = vmul.f32 %v2902, %v2906
    %2908 = vmatprep.subr.mxu0 %v741
    %2909 = vmatpush1.msra.mxu0 %v740
    %2910 = vmatprep.subr.mxu0 %v745
    %2911 = vmatpush1.msra.mxu0 %v744
    %2912 = vmatprep.subr.mxu0 %v749
    %2913 = vmatpush1.msra.mxu0 %v748
    %2914 = vmatprep.subr.mxu0 %v753
    %2915 = vmatpush1.msra.mxu0 %v752
    %2916 = vmatprep.subr.mxu0 %v757
    %2917 = vmatpush1.msra.mxu0 %v756
    %2918 = vmatprep.subr.mxu0 %v761
    %2919 = vmatpush1.msra.mxu0 %v760
    %2920 = vmatprep.subr.mxu0 %v765
    %2921 = vmatpush1.msra.mxu0 %v764
    %2922 = vmatprep.subr.mxu0 %v769
    %2923 = vmatpush1.msra.mxu0 %v768
    %2924 = vmatprep.subr.mxu0 %v773
    %2925 = vmatpush1.msra.mxu0 %v772
    %2926 = vmatprep.subr.mxu0 %v777
    %2927 = vmatpush1.msra.mxu0 %v776
    %2928 = vmatprep.subr.mxu0 %v781
    %2929 = vmatpush1.msra.mxu0 %v780
    %2930 = vmatprep.subr.mxu0 %v785
    %2931 = vmatpush1.msra.mxu0 %v784
    %2932 = vmatprep.subr.mxu0 %v789
    %2933 = vmatpush1.msra.mxu0 %v788
    %2934 = vmatprep.subr.mxu0 %v793
    %2935 = vmatpush1.msra.mxu0 %v792
    %2936 = vmatprep.subr.mxu0 %v797
    %2937 = vmatpush1.msra.mxu0 %v796
    %2938 = vmatprep.subr.mxu0 %v801
    %2939 = vmatpush1.msra.mxu0 %v800
    %2940 = vmatprep.subr.mxu0 %v805
    %2941 = vmatpush1.msra.mxu0 %v804
    %2942 = vmatprep.subr.mxu0 %v809
    %2943 = vmatpush1.msra.mxu0 %v808
    %2944 = vmatprep.subr.mxu0 %v813
    %2945 = vmatpush1.msra.mxu0 %v812
    %2946 = vmatprep.subr.mxu0 %v817
    %2947 = vmatpush1.msra.mxu0 %v816
    %2948 = vmatprep.subr.mxu0 %v821
    %2949 = vmatpush1.msra.mxu0 %v820
    %2950 = vmatprep.subr.mxu0 %v825
    %2951 = vmatpush1.msra.mxu0 %v824
    %2952 = vmatprep.subr.mxu0 %v829
    %2953 = vmatpush1.msra.mxu0 %v828
    %2954 = vmatprep.subr.mxu0 %v833
    %2955 = vmatpush1.msra.mxu0 %v832
    %2956 = vmatprep.subr.mxu0 %v837
    %2957 = vmatpush1.msra.mxu0 %v836
    %2958 = vmatprep.subr.mxu0 %v841
    %2959 = vmatpush1.msra.mxu0 %v840
    %2960 = vmatprep.subr.mxu0 %v845
    %2961 = vmatpush1.msra.mxu0 %v844
    %2962 = vmatprep.subr.mxu0 %v849
    %2963 = vmatpush1.msra.mxu0 %v848
    %2964 = vmatprep.subr.mxu0 %v853
    %2965 = vmatpush1.msra.mxu0 %v852
    %2966 = vmatprep.subr.mxu0 %v857
    %2967 = vmatpush1.msra.mxu0 %v856
    %2968 = vmatprep.subr.mxu0 %v861
    %2969 = vmatpush1.msra.mxu0 %v860
    %2970 = vmatprep.subr.mxu0 %v865
    %2971 = vmatpush1.msra.mxu0 %v864
    %2972 = vmatprep.mubr.f32.mxu0 %v2733
    %2973 = vmatmul.mubr.f32.gmra.mrb[0].mxu0 %v2907
    %v2974 = vpop.f32.mrb[0].mxu0
    %v2975 = vadd.f32 %v485, %v2974
    %v2976 = vpop.f32.mrb[0].mxu0
    %v2977 = vadd.f32 %v489, %v2976
    %2978 = vdwg.mxu0
    %2979 = vmatprep.subr.mxu0 %v743
    %2980 = vmatpush1.msra.mxu0 %v742
    %2981 = vmatprep.subr.mxu0 %v747
    %2982 = vmatpush1.msra.mxu0 %v746
    %2983 = vmatprep.subr.mxu0 %v751
    %2984 = vmatpush1.msra.mxu0 %v750
    %2985 = vmatprep.subr.mxu0 %v755
    %2986 = vmatpush1.msra.mxu0 %v754
    %2987 = vmatprep.subr.mxu0 %v759
    %2988 = vmatpush1.msra.mxu0 %v758
    %2989 = vmatprep.subr.mxu0 %v763
    %2990 = vmatpush1.msra.mxu0 %v762
    %2991 = vmatprep.subr.mxu0 %v767
    %2992 = vmatpush1.msra.mxu0 %v766
    %2993 = vmatprep.subr.mxu0 %v771
    %2994 = vmatpush1.msra.mxu0 %v770
    %2995 = vmatprep.subr.mxu0 %v775
    %2996 = vmatpush1.msra.mxu0 %v774
    %2997 = vmatprep.subr.mxu0 %v779
    %2998 = vmatpush1.msra.mxu0 %v778
    %2999 = vmatprep.subr.mxu0 %v783
    %3000 = vmatpush1.msra.mxu0 %v782
    %3001 = vmatprep.subr.mxu0 %v787
    %3002 = vmatpush1.msra.mxu0 %v786
    %3003 = vmatprep.subr.mxu0 %v791
    %3004 = vmatpush1.msra.mxu0 %v790
    %3005 = vmatprep.subr.mxu0 %v795
    %3006 = vmatpush1.msra.mxu0 %v794
    %3007 = vmatprep.subr.mxu0 %v799
    %3008 = vmatpush1.msra.mxu0 %v798
    %3009 = vmatprep.subr.mxu0 %v803
    %3010 = vmatpush1.msra.mxu0 %v802
    %3011 = vmatprep.subr.mxu0 %v807
    %3012 = vmatpush1.msra.mxu0 %v806
    %3013 = vmatprep.subr.mxu0 %v811
    %3014 = vmatpush1.msra.mxu0 %v810
    %3015 = vmatprep.subr.mxu0 %v815
    %3016 = vmatpush1.msra.mxu0 %v814
    %3017 = vmatprep.subr.mxu0 %v819
    %3018 = vmatpush1.msra.mxu0 %v818
    %3019 = vmatprep.subr.mxu0 %v823
    %3020 = vmatpush1.msra.mxu0 %v822
    %3021 = vmatprep.subr.mxu0 %v827
    %3022 = vmatpush1.msra.mxu0 %v826
    %3023 = vmatprep.subr.mxu0 %v831
    %3024 = vmatpush1.msra.mxu0 %v830
    %3025 = vmatprep.subr.mxu0 %v835
    %3026 = vmatpush1.msra.mxu0 %v834
    %3027 = vmatprep.subr.mxu0 %v839
    %3028 = vmatpush1.msra.mxu0 %v838
    %3029 = vmatprep.subr.mxu0 %v843
    %3030 = vmatpush1.msra.mxu0 %v842
    %3031 = vmatprep.subr.mxu0 %v847
    %3032 = vmatpush1.msra.mxu0 %v846
    %3033 = vmatprep.subr.mxu0 %v851
    %3034 = vmatpush1.msra.mxu0 %v850
    %3035 = vmatprep.subr.mxu0 %v855
    %3036 = vmatpush1.msra.mxu0 %v854
    %3037 = vmatprep.subr.mxu0 %v859
    %3038 = vmatpush1.msra.mxu0 %v858
    %3039 = vmatprep.subr.mxu0 %v863
    %3040 = vmatpush1.msra.mxu0 %v862
    %3041 = vmatprep.subr.mxu0 %v867
    %3042 = vmatpush1.msra.mxu0 %v866
    %3043 = vmatprep.mubr.f32.mxu0 %v2733
    %3044 = vmatmul.mubr.f32.gmra.mrb[0].mxu0 %v2907
    %v3045 = vpop.f32.mrb[0].mxu0
    %v3046 = vadd.f32 %v493, %v3045
    %v3047 = vpop.f32.mrb[0].mxu0
    %v3048 = vadd.f32 %v497, %v3047
    %3049 = vdwg.mxu0
    %v3050 = vxor.u32 %v2975, 2147483648
    %v3051 = vmul.f32 %v3050, 1.442695
    %v3052 = vpow.pop %v3051
    %v3053 = vadd.f32 %v3052, 1.0
    %v3054 = vrcp.pop %v3053
    %v3055 = vmul.f32 1.0, %v3054
    %v3056 = vxor.u32 %v2977, 2147483648
    %v3057 = vmul.f32 %v3056, 1.442695
    %v3058 = vpow.pop %v3057
    %v3059 = vadd.f32 %v3058, 1.0
    %v3060 = vrcp.pop %v3059
    %v3061 = vmul.f32 1.0, %v3060
    %v3062 = vtanh.pop %v3046
    %v3063 = vxor.u32 %v3048, 2147483648
    %v3064 = vmul.f32 %v3063, 1.442695
    %v3065 = vpow.pop %v3064
    %v3066 = vadd.f32 %v3065, 1.0
    %v3067 = vrcp.pop %v3066
    %v3068 = vmul.f32 1.0, %v3067
    %v3069 = vmul.f32 %v3061, %v2731
    %v3070 = vmul.f32 %v3055, %v3062
    %v3071 = vadd.f32 %v3069, %v3070
    %v3072 = vtanh.pop %v3071
    %v3073 = vmul.f32 %v3068, %v3072
    %v3074 = vld [vmem:[#allocation2 + $0xe0] sm:$0xff]
    %v3075 = vld [vmem:[#allocation2 + $0xe8] sm:$0xff]
    %v3076 = vld [vmem:[#allocation2 + $0xf0] sm:$0xff]
    %v3077 = vld [vmem:[#allocation2 + $0xf8] sm:$0xff]
    %3078 = vmatprep.subr.mxu0 %v507
    %3079 = vmatpush1.msra.mxu0 %v506
    %3080 = vmatprep.subr.mxu0 %v511
    %3081 = vmatpush1.msra.mxu0 %v510
    %3082 = vmatprep.subr.mxu0 %v515
    %3083 = vmatpush1.msra.mxu0 %v514
    %3084 = vmatprep.subr.mxu0 %v519
    %3085 = vmatpush1.msra.mxu0 %v518
    %3086 = vmatprep.subr.mxu0 %v523
    %3087 = vmatpush1.msra.mxu0 %v522
    %3088 = vmatprep.subr.mxu0 %v527
    %3089 = vmatpush1.msra.mxu0 %v526
    %3090 = vmatprep.subr.mxu0 %v531
    %3091 = vmatpush1.msra.mxu0 %v530
    %3092 = vmatprep.subr.mxu0 %v535
    %3093 = vmatpush1.msra.mxu0 %v534
    %3094 = vmatprep.subr.mxu0 %v539
    %3095 = vmatpush1.msra.mxu0 %v538
    %3096 = vmatprep.subr.mxu0 %v543
    %3097 = vmatpush1.msra.mxu0 %v542
    %3098 = vmatprep.subr.mxu0 %v547
    %3099 = vmatpush1.msra.mxu0 %v546
    %3100 = vmatprep.subr.mxu0 %v551
    %3101 = vmatpush1.msra.mxu0 %v550
    %3102 = vmatprep.subr.mxu0 %v555
    %3103 = vmatpush1.msra.mxu0 %v554
    %3104 = vmatprep.subr.mxu0 %v559
    %3105 = vmatpush1.msra.mxu0 %v558
    %3106 = vmatprep.subr.mxu0 %v563
    %3107 = vmatpush1.msra.mxu0 %v562
    %3108 = vmatprep.subr.mxu0 %v567
    %3109 = vmatpush1.msra.mxu0 %v566
    %3110 = vmatprep.subr.mxu0 0.0
    %3111 = vmatpush1.msra.mxu0 0.0
    %3112 = vmatprep.subr.mxu0 0.0
    %3113 = vmatpush1.msra.mxu0 0.0
    %3114 = vmatprep.subr.mxu0 0.0
    %3115 = vmatpush1.msra.mxu0 0.0
    %3116 = vmatprep.subr.mxu0 0.0
    %3117 = vmatpush1.msra.mxu0 0.0
    %3118 = vmatprep.subr.mxu0 0.0
    %3119 = vmatpush1.msra.mxu0 0.0
    %3120 = vmatprep.subr.mxu0 0.0
    %3121 = vmatpush1.msra.mxu0 0.0
    %3122 = vmatprep.subr.mxu0 0.0
    %3123 = vmatpush1.msra.mxu0 0.0
    %3124 = vmatprep.subr.mxu0 0.0
    %3125 = vmatpush1.msra.mxu0 0.0
    %3126 = vmatprep.subr.mxu0 0.0
    %3127 = vmatpush1.msra.mxu0 0.0
    %3128 = vmatprep.subr.mxu0 0.0
    %3129 = vmatpush1.msra.mxu0 0.0
    %3130 = vmatprep.subr.mxu0 0.0
    %3131 = vmatpush1.msra.mxu0 0.0
    %3132 = vmatprep.subr.mxu0 0.0
    %3133 = vmatpush1.msra.mxu0 0.0
    %3134 = vmatprep.subr.mxu0 0.0
    %3135 = vmatpush1.msra.mxu0 0.0
    %3136 = vmatprep.subr.mxu0 0.0
    %3137 = vmatpush1.msra.mxu0 0.0
    %3138 = vmatprep.subr.mxu0 0.0
    %3139 = vmatpush1.msra.mxu0 0.0
    %3140 = vmatprep.subr.mxu0 0.0
    %3141 = vmatpush1.msra.mxu0 0.0
    %3142 = vmatprep.mubr.f32.mxu0 0.0
    %3143 = vmatmul.mubr.f32.gmra.mrb[0].mxu0 %v2907
    %v3144 = vpop.f32.mrb[0].mxu0
    %v3145 = vadd.f32 0.0, %v3144
    %v3146 = vpop.f32.mrb[0].mxu0
    %v3147 = vadd.f32 0.0, %v3146
    %3148 = vdwg.mxu0
    %3149 = vmatprep.subr.mxu0 %v509
    %3150 = vmatpush1.msra.mxu0 %v508
    %3151 = vmatprep.subr.mxu0 %v513
    %3152 = vmatpush1.msra.mxu0 %v512
    %3153 = vmatprep.subr.mxu0 %v517
    %3154 = vmatpush1.msra.mxu0 %v516
    %3155 = vmatprep.subr.mxu0 %v521
    %3156 = vmatpush1.msra.mxu0 %v520
    %3157 = vmatprep.subr.mxu0 %v525
    %3158 = vmatpush1.msra.mxu0 %v524
    %3159 = vmatprep.subr.mxu0 %v529
    %3160 = vmatpush1.msra.mxu0 %v528
    %3161 = vmatprep.subr.mxu0 %v533
    %3162 = vmatpush1.msra.mxu0 %v532
    %3163 = vmatprep.subr.mxu0 %v537
    %3164 = vmatpush1.msra.mxu0 %v536
    %3165 = vmatprep.subr.mxu0 %v541
    %3166 = vmatpush1.msra.mxu0 %v540
    %3167 = vmatprep.subr.mxu0 %v545
    %3168 = vmatpush1.msra.mxu0 %v544
    %3169 = vmatprep.subr.mxu0 %v549
    %3170 = vmatpush1.msra.mxu0 %v548
    %3171 = vmatprep.subr.mxu0 %v553
    %3172 = vmatpush1.msra.mxu0 %v552
    %3173 = vmatprep.subr.mxu0 %v557
    %3174 = vmatpush1.msra.mxu0 %v556
    %3175 = vmatprep.subr.mxu0 %v561
    %3176 = vmatpush1.msra.mxu0 %v560
    %3177 = vmatprep.subr.mxu0 %v565
    %3178 = vmatpush1.msra.mxu0 %v564
    %3179 = vmatprep.subr.mxu0 %v569
    %3180 = vmatpush1.msra.mxu0 %v568
    %3181 = vmatprep.subr.mxu0 0.0
    %3182 = vmatpush1.msra.mxu0 0.0
    %3183 = vmatprep.subr.mxu0 0.0
    %3184 = vmatpush1.msra.mxu0 0.0
    %3185 = vmatprep.subr.mxu0 0.0
    %3186 = vmatpush1.msra.mxu0 0.0
    %3187 = vmatprep.subr.mxu0 0.0
    %3188 = vmatpush1.msra.mxu0 0.0
    %3189 = vmatprep.subr.mxu0 0.0
    %3190 = vmatpush1.msra.mxu0 0.0
    %3191 = vmatprep.subr.mxu0 0.0
    %3192 = vmatpush1.msra.mxu0 0.0
    %3193 = vmatprep.subr.mxu0 0.0
    %3194 = vmatpush1.msra.mxu0 0.0
    %3195 = vmatprep.subr.mxu0 0.0
    %3196 = vmatpush1.msra.mxu0 0.0
    %3197 = vmatprep.subr.mxu0 0.0
    %3198 = vmatpush1.msra.mxu0 0.0
    %3199 = vmatprep.subr.mxu0 0.0
    %3200 = vmatpush1.msra.mxu0 0.0
    %3201 = vmatprep.subr.mxu0 0.0
    %3202 = vmatpush1.msra.mxu0 0.0
    %3203 = vmatprep.subr.mxu0 0.0
    %3204 = vmatpush1.msra.mxu0 0.0
    %3205 = vmatprep.subr.mxu0 0.0
    %3206 = vmatpush1.msra.mxu0 0.0
    %3207 = vmatprep.subr.mxu0 0.0
    %3208 = vmatpush1.msra.mxu0 0.0
    %3209 = vmatprep.subr.mxu0 0.0
    %3210 = vmatpush1.msra.mxu0 0.0
    %3211 = vmatprep.subr.mxu0 0.0
    %3212 = vmatpush1.msra.mxu0 0.0
    %3213 = vmatprep.mubr.f32.mxu0 0.0
    %3214 = vmatmul.mubr.f32.gmra.mrb[0].mxu0 %v2907
    %v3215 = vpop.f32.mrb[0].mxu0
    %v3216 = vadd.f32 0.0, %v3215
    %v3217 = vpop.f32.mrb[0].mxu0
    %v3218 = vadd.f32 0.0, %v3217
    %3219 = vdwg.mxu0
    %v3220 = vadd.f32 %v3074, %v3145
    %v3221 = vadd.f32 %v3075, %v3147
    %v3222 = vadd.f32 %v3076, %v3216
    %v3223 = vadd.f32 %v3077, %v3218
    %v3224 = vxor.u32 %v3220, 2147483648
    %v3225 = vmul.f32 %v3224, 1.442695
    %v3226 = vpow.pop %v3225
    %v3227 = vadd.f32 %v3226, 1.0
    %v3228 = vrcp.pop %v3227
    %v3229 = vmul.f32 1.0, %v3228
    %v3230 = vxor.u32 %v3221, 2147483648
    %v3231 = vmul.f32 %v3230, 1.442695
    %v3232 = vpow.pop %v3231
    %v3233 = vadd.f32 %v3232, 1.0
    %v3234 = vrcp.pop %v3233
    %v3235 = vmul.f32 1.0, %v3234
    %v3236 = vtanh.pop %v3222
    %v3237 = vxor.u32 %v3223, 2147483648
    %v3238 = vmul.f32 %v3237, 1.442695
    %v3239 = vpow.pop %v3238
    %v3240 = vadd.f32 %v3239, 1.0
    %v3241 = vrcp.pop %v3240
    %v3242 = vmul.f32 1.0, %v3241
    %v3243 = vmul.f32 %v3235, %v2905
    %v3244 = vmul.f32 %v3229, %v3236
    %v3245 = vadd.f32 %v3243, %v3244
    %v3246 = vtanh.pop %v3245
    %v3247 = vmul.f32 %v3242, %v3246
    %3248 = vmatprep.subr.mxu0 %v741
    %3249 = vmatpush1.msra.mxu0 %v740
    %3250 = vmatprep.subr.mxu0 %v745
    %3251 = vmatpush1.msra.mxu0 %v744
    %3252 = vmatprep.subr.mxu0 %v749
    %3253 = vmatpush1.msra.mxu0 %v748
    %3254 = vmatprep.subr.mxu0 %v753
    %3255 = vmatpush1.msra.mxu0 %v752
    %3256 = vmatprep.subr.mxu0 %v757
    %3257 = vmatpush1.msra.mxu0 %v756
    %3258 = vmatprep.subr.mxu0 %v761
    %3259 = vmatpush1.msra.mxu0 %v760
    %3260 = vmatprep.subr.mxu0 %v765
    %3261 = vmatpush1.msra.mxu0 %v764
    %3262 = vmatprep.subr.mxu0 %v769
    %3263 = vmatpush1.msra.mxu0 %v768
    %3264 = vmatprep.subr.mxu0 %v773
    %3265 = vmatpush1.msra.mxu0 %v772
    %3266 = vmatprep.subr.mxu0 %v777
    %3267 = vmatpush1.msra.mxu0 %v776
    %3268 = vmatprep.subr.mxu0 %v781
    %3269 = vmatpush1.msra.mxu0 %v780
    %3270 = vmatprep.subr.mxu0 %v785
    %3271 = vmatpush1.msra.mxu0 %v784
    %3272 = vmatprep.subr.mxu0 %v789
    %3273 = vmatpush1.msra.mxu0 %v788
    %3274 = vmatprep.subr.mxu0 %v793
    %3275 = vmatpush1.msra.mxu0 %v792
    %3276 = vmatprep.subr.mxu0 %v797
    %3277 = vmatpush1.msra.mxu0 %v796
    %3278 = vmatprep.subr.mxu0 %v801
    %3279 = vmatpush1.msra.mxu0 %v800
    %3280 = vmatprep.subr.mxu0 %v805
    %3281 = vmatpush1.msra.mxu0 %v804
    %3282 = vmatprep.subr.mxu0 %v809
    %3283 = vmatpush1.msra.mxu0 %v808
    %3284 = vmatprep.subr.mxu0 %v813
    %3285 = vmatpush1.msra.mxu0 %v812
    %3286 = vmatprep.subr.mxu0 %v817
    %3287 = vmatpush1.msra.mxu0 %v816
    %3288 = vmatprep.subr.mxu0 %v821
    %3289 = vmatpush1.msra.mxu0 %v820
    %3290 = vmatprep.subr.mxu0 %v825
    %3291 = vmatpush1.msra.mxu0 %v824
    %3292 = vmatprep.subr.mxu0 %v829
    %3293 = vmatpush1.msra.mxu0 %v828
    %3294 = vmatprep.subr.mxu0 %v833
    %3295 = vmatpush1.msra.mxu0 %v832
    %3296 = vmatprep.subr.mxu0 %v837
    %3297 = vmatpush1.msra.mxu0 %v836
    %3298 = vmatprep.subr.mxu0 %v841
    %3299 = vmatpush1.msra.mxu0 %v840
    %3300 = vmatprep.subr.mxu0 %v845
    %3301 = vmatpush1.msra.mxu0 %v844
    %3302 = vmatprep.subr.mxu0 %v849
    %3303 = vmatpush1.msra.mxu0 %v848
    %3304 = vmatprep.subr.mxu0 %v853
    %3305 = vmatpush1.msra.mxu0 %v852
    %3306 = vmatprep.subr.mxu0 %v857
    %3307 = vmatpush1.msra.mxu0 %v856
    %3308 = vmatprep.subr.mxu0 %v861
    %3309 = vmatpush1.msra.mxu0 %v860
    %3310 = vmatprep.subr.mxu0 %v865
    %3311 = vmatpush1.msra.mxu0 %v864
    %3312 = vmatprep.mubr.f32.mxu0 %v3073
    %3313 = vmatmul.mubr.f32.gmra.mrb[0].mxu0 %v3247
    %v3314 = vpop.f32.mrb[0].mxu0
    %v3315 = vadd.f32 %v485, %v3314
    %v3316 = vpop.f32.mrb[0].mxu0
    %v3317 = vadd.f32 %v489, %v3316
    %3318 = vdwg.mxu0
    %3319 = vmatprep.subr.mxu0 %v743
    %3320 = vmatpush1.msra.mxu0 %v742
    %3321 = vmatprep.subr.mxu0 %v747
    %3322 = vmatpush1.msra.mxu0 %v746
    %3323 = vmatprep.subr.mxu0 %v751
    %3324 = vmatpush1.msra.mxu0 %v750
    %3325 = vmatprep.subr.mxu0 %v755
    %3326 = vmatpush1.msra.mxu0 %v754
    %3327 = vmatprep.subr.mxu0 %v759
    %3328 = vmatpush1.msra.mxu0 %v758
    %3329 = vmatprep.subr.mxu0 %v763
    %3330 = vmatpush1.msra.mxu0 %v762
    %3331 = vmatprep.subr.mxu0 %v767
    %3332 = vmatpush1.msra.mxu0 %v766
    %3333 = vmatprep.subr.mxu0 %v771
    %3334 = vmatpush1.msra.mxu0 %v770
    %3335 = vmatprep.subr.mxu0 %v775
    %3336 = vmatpush1.msra.mxu0 %v774
    %3337 = vmatprep.subr.mxu0 %v779
    %3338 = vmatpush1.msra.mxu0 %v778
    %3339 = vmatprep.subr.mxu0 %v783
    %3340 = vmatpush1.msra.mxu0 %v782
    %3341 = vmatprep.subr.mxu0 %v787
    %3342 = vmatpush1.msra.mxu0 %v786
    %3343 = vmatprep.subr.mxu0 %v791
    %3344 = vmatpush1.msra.mxu0 %v790
    %3345 = vmatprep.subr.mxu0 %v795
    %3346 = vmatpush1.msra.mxu0 %v794
    %3347 = vmatprep.subr.mxu0 %v799
    %3348 = vmatpush1.msra.mxu0 %v798
    %3349 = vmatprep.subr.mxu0 %v803
    %3350 = vmatpush1.msra.mxu0 %v802
    %3351 = vmatprep.subr.mxu0 %v807
    %3352 = vmatpush1.msra.mxu0 %v806
    %3353 = vmatprep.subr.mxu0 %v811
    %3354 = vmatpush1.msra.mxu0 %v810
    %3355 = vmatprep.subr.mxu0 %v815
    %3356 = vmatpush1.msra.mxu0 %v814
    %3357 = vmatprep.subr.mxu0 %v819
    %3358 = vmatpush1.msra.mxu0 %v818
    %3359 = vmatprep.subr.mxu0 %v823
    %3360 = vmatpush1.msra.mxu0 %v822
    %3361 = vmatprep.subr.mxu0 %v827
    %3362 = vmatpush1.msra.mxu0 %v826
    %3363 = vmatprep.subr.mxu0 %v831
    %3364 = vmatpush1.msra.mxu0 %v830
    %3365 = vmatprep.subr.mxu0 %v835
    %3366 = vmatpush1.msra.mxu0 %v834
    %3367 = vmatprep.subr.mxu0 %v839
    %3368 = vmatpush1.msra.mxu0 %v838
    %3369 = vmatprep.subr.mxu0 %v843
    %3370 = vmatpush1.msra.mxu0 %v842
    %3371 = vmatprep.subr.mxu0 %v847
    %3372 = vmatpush1.msra.mxu0 %v846
    %3373 = vmatprep.subr.mxu0 %v851
    %3374 = vmatpush1.msra.mxu0 %v850
    %3375 = vmatprep.subr.mxu0 %v855
    %3376 = vmatpush1.msra.mxu0 %v854
    %3377 = vmatprep.subr.mxu0 %v859
    %3378 = vmatpush1.msra.mxu0 %v858
    %3379 = vmatprep.subr.mxu0 %v863
    %3380 = vmatpush1.msra.mxu0 %v862
    %3381 = vmatprep.subr.mxu0 %v867
    %3382 = vmatpush1.msra.mxu0 %v866
    %3383 = vmatprep.mubr.f32.mxu0 %v3073
    %3384 = vmatmul.mubr.f32.gmra.mrb[0].mxu0 %v3247
    %v3385 = vpop.f32.mrb[0].mxu0
    %v3386 = vadd.f32 %v493, %v3385
    %v3387 = vpop.f32.mrb[0].mxu0
    %v3388 = vadd.f32 %v497, %v3387
    %3389 = vdwg.mxu0
    %v3390 = vxor.u32 %v3315, 2147483648
    %v3391 = vmul.f32 %v3390, 1.442695
    %v3392 = vpow.pop %v3391
    %v3393 = vadd.f32 %v3392, 1.0
    %v3394 = vrcp.pop %v3393
    %v3395 = vmul.f32 1.0, %v3394
    %v3396 = vxor.u32 %v3317, 2147483648
    %v3397 = vmul.f32 %v3396, 1.442695
    %v3398 = vpow.pop %v3397
    %v3399 = vadd.f32 %v3398, 1.0
    %v3400 = vrcp.pop %v3399
    %v3401 = vmul.f32 1.0, %v3400
    %v3402 = vtanh.pop %v3386
    %v3403 = vxor.u32 %v3388, 2147483648
    %v3404 = vmul.f32 %v3403, 1.442695
    %v3405 = vpow.pop %v3404
    %v3406 = vadd.f32 %v3405, 1.0
    %v3407 = vrcp.pop %v3406
    %v3408 = vmul.f32 1.0, %v3407
    %v3409 = vmul.f32 %v3401, %v3071
    %v3410 = vmul.f32 %v3395, %v3402
    %v3411 = vadd.f32 %v3409, %v3410
    %v3412 = vtanh.pop %v3411
    %v3413 = vmul.f32 %v3408, %v3412
    %v3414 = vld [vmem:[#allocation8] sm:$0xff]
    %v3415 = vld [vmem:[#allocation8 + $0x8] sm:$0xff]
    %v3416 = vld [vmem:[#allocation8 + $0x10] sm:$0xff]
    %v3417 = vld [vmem:[#allocation8 + $0x18] sm:$0xff]
    %v3418 = vld [vmem:[#allocation8 + $0x20] sm:$0xff]
    %v3419 = vld [vmem:[#allocation8 + $0x28] sm:$0xff]
    %v3420 = vld [vmem:[#allocation8 + $0x30] sm:$0xff]
    %v3421 = vld [vmem:[#allocation8 + $0x38] sm:$0xff]
    %v3422 = vld [vmem:[#allocation8 + $0x40] sm:$0xff]
    %v3423 = vld [vmem:[#allocation8 + $0x48] sm:$0xff]
    %v3424 = vld [vmem:[#allocation8 + $0x50] sm:$0xff]
    %v3425 = vld [vmem:[#allocation8 + $0x58] sm:$0xff]
    %v3426 = vld [vmem:[#allocation8 + $0x60] sm:$0xff]
    %v3427 = vld [vmem:[#allocation8 + $0x68] sm:$0xff]
    %v3428 = vld [vmem:[#allocation8 + $0x70] sm:$0xff]
    %v3429 = vld [vmem:[#allocation8 + $0x78] sm:$0xff]
    %v3430 = vld [vmem:[%s6] sm:$0x1]
    %v3432 = vlaneseq
    %v3433 = vshrl.u32 %v3432, 7
    %v3434 = vsub.s32 0, %v3433
    %v3435 = vrot.slane %v3430, %v3434
    %3437 = vmatprep.subr.mxu0 0.0
    %3438 = vmatpush1.msra.mxu0 %v3414
    %3439 = vmatprep.subr.mxu0 0.0
    %3440 = vmatpush1.msra.mxu0 %v3415
    %3441 = vmatprep.subr.mxu0 0.0
    %3442 = vmatpush1.msra.mxu0 %v3416
    %3443 = vmatprep.subr.mxu0 0.0
    %3444 = vmatpush1.msra.mxu0 %v3417
    %3445 = vmatprep.subr.mxu0 0.0
    %3446 = vmatpush1.msra.mxu0 %v3418
    %3447 = vmatprep.subr.mxu0 0.0
    %3448 = vmatpush1.msra.mxu0 %v3419
    %3449 = vmatprep.subr.mxu0 0.0
    %3450 = vmatpush1.msra.mxu0 %v3420
    %3451 = vmatprep.subr.mxu0 0.0
    %3452 = vmatpush1.msra.mxu0 %v3421
    %3453 = vmatprep.subr.mxu0 0.0
    %3454 = vmatpush1.msra.mxu0 %v3422
    %3455 = vmatprep.subr.mxu0 0.0
    %3456 = vmatpush1.msra.mxu0 %v3423
    %3457 = vmatprep.subr.mxu0 0.0
    %3458 = vmatpush1.msra.mxu0 %v3424
    %3459 = vmatprep.subr.mxu0 0.0
    %3460 = vmatpush1.msra.mxu0 %v3425
    %3461 = vmatprep.subr.mxu0 0.0
    %3462 = vmatpush1.msra.mxu0 %v3426
    %3463 = vmatprep.subr.mxu0 0.0
    %3464 = vmatpush1.msra.mxu0 %v3427
    %3465 = vmatprep.subr.mxu0 0.0
    %3466 = vmatpush1.msra.mxu0 %v3428
    %3467 = vmatprep.subr.mxu0 0.0
    %3468 = vmatpush1.msra.mxu0 %v3429
    %3469 = vmatprep.subr.mxu0 0.0
    %3470 = vmatpush1.msra.mxu0 0.0
    %3471 = vmatprep.subr.mxu0 0.0
    %3472 = vmatpush1.msra.mxu0 0.0
    %3473 = vmatprep.subr.mxu0 0.0
    %3474 = vmatpush1.msra.mxu0 0.0
    %3475 = vmatprep.subr.mxu0 0.0
    %3476 = vmatpush1.msra.mxu0 0.0
    %3477 = vmatprep.subr.mxu0 0.0
    %3478 = vmatpush1.msra.mxu0 0.0
    %3479 = vmatprep.subr.mxu0 0.0
    %3480 = vmatpush1.msra.mxu0 0.0
    %3481 = vmatprep.subr.mxu0 0.0
    %3482 = vmatpush1.msra.mxu0 0.0
    %3483 = vmatprep.subr.mxu0 0.0
    %3484 = vmatpush1.msra.mxu0 0.0
    %3485 = vmatprep.subr.mxu0 0.0
    %3486 = vmatpush1.msra.mxu0 0.0
    %3487 = vmatprep.subr.mxu0 0.0
    %3488 = vmatpush1.msra.mxu0 0.0
    %3489 = vmatprep.subr.mxu0 0.0
    %3490 = vmatpush1.msra.mxu0 0.0
    %3491 = vmatprep.subr.mxu0 0.0
    %3492 = vmatpush1.msra.mxu0 0.0
    %3493 = vmatprep.subr.mxu0 0.0
    %3494 = vmatpush1.msra.mxu0 0.0
    %3495 = vmatprep.subr.mxu0 0.0
    %3496 = vmatpush1.msra.mxu0 0.0
    %3497 = vmatprep.subr.mxu0 0.0
    %3498 = vmatpush1.msra.mxu0 0.0
    %3499 = vmatprep.subr.mxu0 0.0
    %3500 = vmatpush1.msra.mxu0 0.0
    %3501 = vmatprep.mubr.f32.mxu0 0.0
    %3502 = vmatmul.mubr.f32.gmra.mrb[0].mxu0 %v3413
    %v3503 = vpop.f32.mrb[0].mxu0
    %v3504 = vadd.f32 %v3435, %v3503
    %v3505 = vpop.f32.mrb[0].mxu0
    %3506 = vdwg.mxu0
    %v3507 = vmax.f32 %v3504, 0.0
    %v3508 = vld [vmem:[#allocation10] sm:$0xff]
    %v3509 = vld [vmem:[#allocation10 + $0x8] sm:$0xff]
    %v3510 = vld [vmem:[#allocation10 + $0x10] sm:$0xff]
    %v3511 = vld [vmem:[#allocation10 + $0x18] sm:$0xff]
    %v3512 = vld [vmem:[#allocation10 + $0x20] sm:$0xff]
    %v3513 = vld [vmem:[#allocation10 + $0x28] sm:$0xff]
    %v3514 = vld [vmem:[#allocation10 + $0x30] sm:$0xff]
    %v3515 = vld [vmem:[#allocation10 + $0x38] sm:$0xff]
    %v3516 = vld [vmem:[#allocation10 + $0x40] sm:$0xff]
    %v3517 = vld [vmem:[#allocation10 + $0x48] sm:$0xff]
    %v3518 = vld [vmem:[#allocation10 + $0x50] sm:$0xff]
    %v3519 = vld [vmem:[#allocation10 + $0x58] sm:$0xff]
    %v3520 = vld [vmem:[#allocation10 + $0x60] sm:$0xff]
    %v3521 = vld [vmem:[#allocation10 + $0x68] sm:$0xff]
    %v3522 = vld [vmem:[#allocation10 + $0x70] sm:$0xff]
    %v3523 = vld [vmem:[#allocation10 + $0x78] sm:$0xff]
    %v3524 = vld [vmem:[%s8] sm:$0x1]
    %v3526 = vlaneseq
    %v3527 = vshrl.u32 %v3526, 7
    %v3528 = vsub.s32 0, %v3527
    %v3529 = vrot.slane %v3524, %v3528
    %3531 = vmatprep.subr.mxu0 0.0
    %3532 = vmatpush1.msra.mxu0 %v3508
    %3533 = vmatprep.subr.mxu0 0.0
    %3534 = vmatpush1.msra.mxu0 %v3509
    %3535 = vmatprep.subr.mxu0 0.0
    %3536 = vmatpush1.msra.mxu0 %v3510
    %3537 = vmatprep.subr.mxu0 0.0
    %3538 = vmatpush1.msra.mxu0 %v3511
    %3539 = vmatprep.subr.mxu0 0.0
    %3540 = vmatpush1.msra.mxu0 %v3512
    %3541 = vmatprep.subr.mxu0 0.0
    %3542 = vmatpush1.msra.mxu0 %v3513
    %3543 = vmatprep.subr.mxu0 0.0
    %3544 = vmatpush1.msra.mxu0 %v3514
    %3545 = vmatprep.subr.mxu0 0.0
    %3546 = vmatpush1.msra.mxu0 %v3515
    %3547 = vmatprep.subr.mxu0 0.0
    %3548 = vmatpush1.msra.mxu0 %v3516
    %3549 = vmatprep.subr.mxu0 0.0
    %3550 = vmatpush1.msra.mxu0 %v3517
    %3551 = vmatprep.subr.mxu0 0.0
    %3552 = vmatpush1.msra.mxu0 %v3518
    %3553 = vmatprep.subr.mxu0 0.0
    %3554 = vmatpush1.msra.mxu0 %v3519
    %3555 = vmatprep.subr.mxu0 0.0
    %3556 = vmatpush1.msra.mxu0 %v3520
    %3557 = vmatprep.subr.mxu0 0.0
    %3558 = vmatpush1.msra.mxu0 %v3521
    %3559 = vmatprep.subr.mxu0 0.0
    %3560 = vmatpush1.msra.mxu0 %v3522
    %3561 = vmatprep.subr.mxu0 0.0
    %3562 = vmatpush1.msra.mxu0 %v3523
    %3563 = vmatprep.subr.mxu0 0.0
    %3564 = vmatpush1.msra.mxu0 0.0
    %3565 = vmatprep.subr.mxu0 0.0
    %3566 = vmatpush1.msra.mxu0 0.0
    %3567 = vmatprep.subr.mxu0 0.0
    %3568 = vmatpush1.msra.mxu0 0.0
    %3569 = vmatprep.subr.mxu0 0.0
    %3570 = vmatpush1.msra.mxu0 0.0
    %3571 = vmatprep.subr.mxu0 0.0
    %3572 = vmatpush1.msra.mxu0 0.0
    %3573 = vmatprep.subr.mxu0 0.0
    %3574 = vmatpush1.msra.mxu0 0.0
    %3575 = vmatprep.subr.mxu0 0.0
    %3576 = vmatpush1.msra.mxu0 0.0
    %3577 = vmatprep.subr.mxu0 0.0
    %3578 = vmatpush1.msra.mxu0 0.0
    %3579 = vmatprep.subr.mxu0 0.0
    %3580 = vmatpush1.msra.mxu0 0.0
    %3581 = vmatprep.subr.mxu0 0.0
    %3582 = vmatpush1.msra.mxu0 0.0
    %3583 = vmatprep.subr.mxu0 0.0
    %3584 = vmatpush1.msra.mxu0 0.0
    %3585 = vmatprep.subr.mxu0 0.0
    %3586 = vmatpush1.msra.mxu0 0.0
    %3587 = vmatprep.subr.mxu0 0.0
    %3588 = vmatpush1.msra.mxu0 0.0
    %3589 = vmatprep.subr.mxu0 0.0
    %3590 = vmatpush1.msra.mxu0 0.0
    %3591 = vmatprep.subr.mxu0 0.0
    %3592 = vmatpush1.msra.mxu0 0.0
    %3593 = vmatprep.subr.mxu0 0.0
    %3594 = vmatpush1.msra.mxu0 0.0
    %3595 = vmatprep.mubr.f32.mxu0 0.0
    %3596 = vmatmul.mubr.f32.gmra.mrb[0].mxu0 %v3507
    %v3597 = vpop.f32.mrb[0].mxu0
    %v3598 = vadd.f32 %v3529, %v3597
    %v3599 = vpop.f32.mrb[0].mxu0
    %3600 = vdwg.mxu0
    %3601 = vst [vmem:[%s9] sm:$0xff] %v3598
    // Predicated region
    $region58: #{mnist_lstm_forward.1} parent=1 // pred_check
      _
    $region59: #{mnist_lstm_forward.1} parent=1 // pred_check_branch
      %3603 = sbr.rel (0) target = $region61
    $region60: #{mnist_lstm_forward.1} parent=1 // pred_region
      _
    $region61: #{mnist_lstm_forward.1} parent=1 // pred_fallthru
      _
    // Predicated region
    $region62: #{mnist_lstm_forward.1} parent=1 // pred_check
      _
    $region63: #{mnist_lstm_forward.1} parent=1 // pred_check_branch
      %3605 = sbr.rel (0) target = $region65
    $region64: #{mnist_lstm_forward.1} parent=1 // pred_region
      _
    $region65: #{mnist_lstm_forward.1} parent=1 // pred_fallthru
      _
    %3606 = vsyncpa [#allocation4], 1
    %3607 = vsyncpa [#allocation6], 1
    %3608 = vsyncpa [#allocation9], 1

</llo_original>
